<compile_context>
chip_gen: v7x
topology: tpu7x:2x2x1
jax: 0.10.0
libtpu: 0.0.40
codegen_flags: <defaults>
</compile_context>

<pallas_src>
import numpy as np

import jax
import jax.numpy as jnp
from jax import lax
from jax.experimental import pallas as pl
from jax.experimental.pallas import tpu as pltpu


# ----------------------------------------------------------------------------
# Fused decoder kernel (Bb batch elements per grid step)
# ----------------------------------------------------------------------------
def _decoder_kernel(z_ref, w1_ref, b1_ref, prep_ref, cmask_ref, w2_ref, b2_ref,
                    m1_ref, r1_ref, bp1_ref,
                    m2_ref, bp2_ref,
                    m3_ref, r3_ref, bp3_ref,
                    m4_ref, bp4_ref,
                    m5_ref, r5_ref, bp5_ref,
                    out_ref):
    f32, bf16 = jnp.float32, jnp.bfloat16

    def silu(x):
        return x * jax.nn.sigmoid(x)

    # ------------------------- linear head ---------------------------------
    z = z_ref[...].astype(bf16)                                        # (Bb, L)
    h1 = jnp.dot(z, w1_ref[...], preferred_element_type=f32) + b1_ref[...]
    h1 = silu(h1).astype(bf16)                                         # (Bb, 4c)

    # Place h1[b] onto seed row 4b+h (one-hot bf16 matmul -> exact), select the
    # h-th weight chunk with a 0/1 lane mask, then ONE lin2 dot.
    rep = jnp.dot(prep_ref[...], h1, preferred_element_type=f32).astype(bf16)  # (Bb*4, 4c)
    xcat = jnp.concatenate([rep, rep, rep, rep], axis=-1) * cmask_ref[...]     # (Bb*4, 16c)
    a = silu(b2_ref[...] + jnp.dot(xcat, w2_ref[...],
                                   preferred_element_type=f32))        # (Bb*4, 4W*2c) seed slab

    # ------------------------- conv stack ----------------------------------
    def conv_layer(a, m_ref, bp_ref, hin):
        # stride-1 3x3 conv: vertical taps via shift + 0/1 mask (exact), then a
        # single MXU dot against the vstacked tap matrices.
        rows, wc = a.shape
        zrow = jnp.zeros((1, wc), a.dtype)
        dn = jnp.concatenate([zrow, a[:rows - 1, :]], axis=0)          # x[h-1]
        up = jnp.concatenate([a[1:, :], zrow], axis=0)                 # x[h+1]
        rin = lax.broadcasted_iota(jnp.int32, (rows, 1), 0) % hin      # row within batch block
        dn = jnp.where(rin == 0, 0.0, dn)                              # per-block zero padding
        up = jnp.where(rin == hin - 1, 0.0, up)
        x3 = jnp.concatenate([dn, a, up], axis=-1).astype(bf16)        # (rows, 3*wc)
        return bp_ref[...] + jnp.dot(x3, m_ref[...], preferred_element_type=f32)

    def convt_layer(a, r_ref, m_ref, bp_ref):
        # stride-2 3x3 transposed conv: one-hot bf16 row expand/interleave
        # (exact selection of bf16 rows), then a single MXU dot.
        a16 = a.astype(bf16)
        sh = [jnp.dot(r_ref[k], a16, preferred_element_type=f32).astype(bf16)
              for k in range(3)]                                       # exact 0/1 selections
        x3 = jnp.concatenate(sh, axis=-1)                              # (rows_out, 3*wc_in)
        return bp_ref[...] + jnp.dot(x3, m_ref[...], preferred_element_type=f32)

    a = silu(convt_layer(a, r1_ref, m1_ref, bp1_ref))                  # ConvT 2c->2c : 4x4  -> 8x8
    a = silu(conv_layer(a, m2_ref, bp2_ref, 8))                        # Conv  2c->2c : 8x8
    a = silu(convt_layer(a, r3_ref, m3_ref, bp3_ref))                  # ConvT 2c->c  : 8x8  -> 16x16
    a = silu(conv_layer(a, m4_ref, bp4_ref, 16))                       # Conv  c->c   : 16x16
    a = jnp.tanh(convt_layer(a, r5_ref, m5_ref, bp5_ref))              # ConvT c->ncp : 16x16 -> 32x32

    out_ref[...] = a.astype(out_ref.dtype)                             # (Bb*32, 32*ncp) slab


# ----------------------------------------------------------------------------
# Host-side packing of the PyTorch-layout weights into kernel constants
# ----------------------------------------------------------------------------
def _convT_mats(w, Hin, Win):
    # w: ConvTranspose2d weight (Cin, Cout, 3, 3), stride 2, pad 1, out_pad 1.
    Cin, Cout = w.shape[0], w.shape[1]
    M = np.zeros((3, Win * Cin, 2 * Win * Cout), np.float32)
    kh_for_k = (1, 2, 0)   # k=0: even rows from x[r]; k=1: odd rows from x[r]; k=2: odd rows from x[r+1]
    for k, kh in enumerate(kh_for_k):
        for sp in range(Win):
            rs = slice(sp * Cin, (sp + 1) * Cin)
            M[k, rs, (2 * sp) * Cout:(2 * sp + 1) * Cout] += w[:, :, kh, 1]      # even col, kw=1
            M[k, rs, (2 * sp + 1) * Cout:(2 * sp + 2) * Cout] += w[:, :, kh, 2]  # odd col,  kw=2
            if sp >= 1:
                M[k, rs, (2 * sp - 1) * Cout:(2 * sp) * Cout] += w[:, :, kh, 0]  # odd col,  kw=0
    R = np.zeros((3, 2 * Hin, Hin), np.float32)
    for r in range(Hin):
        R[0, 2 * r, r] = 1.0
        R[1, 2 * r + 1, r] = 1.0
        if r + 1 < Hin:
            R[2, 2 * r + 1, r + 1] = 1.0
    return M, R


def _conv_mats(w, Hin, Win):
    # w: Conv2d weight (Cout, Cin, 3, 3), stride 1, padding 1 ("same").
    Cout, Cin = w.shape[0], w.shape[1]
    M = np.zeros((3, Win * Cin, Win * Cout), np.float32)
    for kh in range(3):
        for sp in range(Win):
            for kw in range(3):
                wo = sp - kw + 1
                if 0 <= wo < Win:
                    M[kh, sp * Cin:(sp + 1) * Cin,
                      wo * Cout:(wo + 1) * Cout] += w[:, :, kh, kw].T
    return M


def prepare_params(params, num_input_channels, c_hid, latent_dim, bb=8):
    """Pack PyTorch-layout params into batch-blocked kernel constants."""
    p = {k: np.asarray(v, dtype=np.float32) for k, v in params.items()}
    C2 = 2 * c_hid
    bf = lambda a: jnp.asarray(a, jnp.bfloat16)
    f32a = lambda a: jnp.asarray(a, jnp.float32)
    out = {}

    # --- linear head ---
    out["w1t"] = bf(p["lin1_w"].T)                                   # (L, 4c)
    out["b1"] = f32a(p["lin1_b"].reshape(1, -1))                     # (1, 4c)

    # permute lin2 outputs from NCHW (cc,h,w) order into NHWC (h,w,cc)
    perm = np.array([cc * 16 + h * 4 + w
                     for h in range(4) for w in range(4) for cc in range(C2)],
                    dtype=np.int64)
    w2p = p["lin2_w"][perm]                                          # (32c, 4c)
    b2p = p["lin2_b"][perm]
    cw = 4 * C2                                                      # lanes per seed row
    w2blk = w2p.T.reshape(4 * c_hid, 4, cw).transpose(1, 0, 2)       # (4, 4c, cw)
    out["w2s"] = bf(np.concatenate([w2blk[h] for h in range(4)], axis=0))  # (16c, cw)
    out["b2s"] = f32a(np.tile(b2p.reshape(4, cw), (bb, 1)))          # (bb*4, cw)

    prep = np.zeros((bb * 4, bb), np.float32)                        # row 4b+h <- h1 row b
    prep[np.arange(bb * 4), np.arange(bb * 4) // 4] = 1.0
    out["prep"] = bf(prep)

    cmask = np.zeros((bb * 4, 4 * 4 * c_hid), np.float32)            # lane-chunk select per row%4
    for h in range(4):
        cmask[h::4, h * 4 * c_hid:(h + 1) * 4 * c_hid] = 1.0
    out["cmask"] = bf(cmask)

    # --- conv stack ---
    def pos_slab(H, W, wp, bpz):
        gx, gy = np.meshgrid(np.linspace(-1.0, 1.0, H), np.linspace(-1.0, 1.0, W),
                             indexing="ij")
        grid = np.stack([gx, gy], axis=-1).astype(np.float32)        # (H, W, 2)
        pos = grid @ wp.T + bpz                                      # (H, W, C)
        return pos.reshape(H, W * wp.shape[0])

    def bias_slab(H, W, b):
        return np.tile(b.astype(np.float32), (H, W))                 # (H, W*C)

    # pad final output channels so the output slab is 32*ncp = multiple of 128 lanes
    ncp = -(-num_input_channels // 4) * 4
    ct3_w = np.zeros((c_hid, ncp, 3, 3), np.float32)
    ct3_w[:, :num_input_channels] = p["ct3_w"]
    ct3_b = np.zeros((ncp,), np.float32)
    ct3_b[:num_input_channels] = p["ct3_b"]

    layers = [
        ("convT", p["ct1_w"], p["ct1_b"], 4,  (p["pos1_w"], p["pos1_b"])),
        ("conv",  p["cv1_w"], p["cv1_b"], 8,  (p["pos2_w"], p["pos2_b"])),
        ("convT", p["ct2_w"], p["ct2_b"], 8,  (p["pos3_w"], p["pos3_b"])),
        ("conv",  p["cv2_w"], p["cv2_b"], 16, (p["pos4_w"], p["pos4_b"])),
        ("convT", ct3_w, ct3_b, 16, None),
    ]
    for i, (kind, w, b, Hin, pos) in enumerate(layers, start=1):
        if kind == "convT":
            M, R = _convT_mats(w, Hin, Hin)
            Ho, Cout = 2 * Hin, w.shape[1]
            rblk = np.stack([np.kron(np.eye(bb, dtype=np.float32), R[k])
                             for k in range(3)])                      # (3, bb*Ho, bb*Hin)
            out[f"r{i}"] = bf(rblk)                                   # 0/1 -> bf16 exact
        else:
            M = _conv_mats(w, Hin, Hin)
            Ho, Cout = Hin, w.shape[0]
        K = M.shape[1]
        out[f"m{i}"] = bf(M.reshape(3 * K, M.shape[2]))               # vstacked taps (3K, N)
        bpimg = bias_slab(Ho, Ho, b)
        if pos is not None:
            bpimg = bpimg + pos_slab(Ho, Ho, pos[0], pos[1])
        out[f"bp{i}"] = f32a(np.tile(bpimg, (bb, 1)))                 # (bb*Ho, Ho*Cout)
    return out


# ----------------------------------------------------------------------------
# Decoder apply (the pallas_call)
# ----------------------------------------------------------------------------
_CONST_ORDER = ("w1t", "b1", "prep", "cmask", "w2s", "b2s",
                "m1", "r1", "bp1",
                "m2", "bp2",
                "m3", "r3", "bp3",
                "m4", "bp4",
                "m5", "r5", "bp5")


def _const_index_map(nd):
    def imap(g):
        return (0,) * nd
    return imap


def decoder_apply(packed, z, num_channels=3):
    B, L = z.shape
    bb = packed["prep"].shape[1]                  # batch elements per grid step
    nsteps = -(-B // bb)
    Bp = nsteps * bb
    if Bp != B:                                   # pad batch to a multiple of bb
        z = jnp.concatenate([z, jnp.zeros((Bp - B, L), z.dtype)], axis=0)

    consts = [packed[k] for k in _CONST_ORDER]
    rows_blk, lanes = packed["bp5"].shape         # (bb*32, 32*ncp)
    himg = rows_blk // bb                         # 32
    ncp = lanes // himg                           # padded output channels

    out2d = pl.pallas_call(
        _decoder_kernel,
        out_shape=jax.ShapeDtypeStruct((Bp * himg, lanes), jnp.float32),
        grid=(nsteps,),
        in_specs=[pl.BlockSpec((bb, L), lambda g: (g, 0))]
                 + [pl.BlockSpec(c.shape, _const_index_map(c.ndim)) for c in consts],
        out_specs=pl.BlockSpec((bb * himg, lanes), lambda g: (g, 0)),
        compiler_params=pltpu.CompilerParams(
            dimension_semantics=("parallel",)),    # megacore: split batch blocks over TCs
    )(z, *consts)

    out = out2d.reshape(Bp, himg, himg, ncp)[:B, :, :, :num_channels]   # NHWC, drop pad
    # TODO(synk): return NHWC / fuse this transpose into the consumer to save one XLA transpose.
    return out.transpose(0, 3, 1, 2)              # NCHW, like the PyTorch module


# ----------------------------------------------------------------------------
# Parameters (deterministic synthetic init, PyTorch layouts)
# ----------------------------------------------------------------------------
def init_params(key, num_input_channels, c_hid, latent_dim):
    c = c_hid
    shapes = {
        "lin1_w": (4 * c, latent_dim), "lin1_b": (4 * c,),
        "lin2_w": (2 * 16 * c, 4 * c), "lin2_b": (2 * 16 * c,),
        "ct1_w": (2 * c, 2 * c, 3, 3), "ct1_b": (2 * c,),
        "pos1_w": (2 * c, 2), "pos1_b": (2 * c,),
        "cv1_w": (2 * c, 2 * c, 3, 3), "cv1_b": (2 * c,),
        "pos2_w": (2 * c, 2), "pos2_b": (2 * c,),
        "ct2_w": (2 * c, c, 3, 3), "ct2_b": (c,),
        "pos3_w": (c, 2), "pos3_b": (c,),
        "cv2_w": (c, c, 3, 3), "cv2_b": (c,),
        "pos4_w": (c, 2), "pos4_b": (c,),
        "ct3_w": (c, num_input_channels, 3, 3), "ct3_b": (num_input_channels,),
    }
    keys = jax.random.split(key, len(shapes))
    return {name: 0.1 * jax.random.normal(k, shp, jnp.float32)
            for (name, shp), k in zip(shapes.items(), keys)}


# ----------------------------------------------------------------------------
# Pure-JAX reference (op-for-op port of the PyTorch module), for validation
# ----------------------------------------------------------------------------
def _reference_forward(params, z, c_hid):
    def silu(x):
        return x * jax.nn.sigmoid(x)

    def pos_add(x, wp, bp):                      # x: NHWC
        H, W = x.shape[1], x.shape[2]
        px, py = jnp.meshgrid(jnp.linspace(-1.0, 1.0, H),
                              jnp.linspace(-1.0, 1.0, W), indexing="ij")
        pos = jnp.stack([px, py], -1) @ wp.T + bp
        return x + pos[None]

    def conv3x3(x, w, b):                        # w: (Cout, Cin, 3, 3)
        B, H, W, C = x.shape
        xp = jnp.pad(x, ((0, 0), (1, 1), (1, 1), (0, 0)))
        out = 0.0
        for kh in range(3):
            for kw in range(3):
                out = out + jnp.einsum("bhwc,oc->bhwo",
                                       xp[:, kh:kh + H, kw:kw + W, :], w[:, :, kh, kw])
        return out + b

    def convT3x3(x, w, b):                       # w: (Cin, Cout, 3, 3)
        B, H, W, C = x.shape
        up = jnp.zeros((B, 2 * H - 1, 2 * W - 1, C), x.dtype).at[:, ::2, ::2, :].set(x)
        xp = jnp.pad(up, ((0, 0), (1, 2), (1, 2), (0, 0)))
        out = 0.0
        for kh in range(3):
            for kw in range(3):
                out = out + jnp.einsum("bhwc,co->bhwo",
                                       xp[:, kh:kh + 2 * H, kw:kw + 2 * W, :],
                                       w[:, :, 2 - kh, 2 - kw])
        return out + b

    c = c_hid
    h = silu(z @ params["lin1_w"].T + params["lin1_b"])
    h = silu(h @ params["lin2_w"].T + params["lin2_b"])
    x = h.reshape(z.shape[0], 2 * c, 4, 4).transpose(0, 2, 3, 1)
    x = silu(pos_add(convT3x3(x, params["ct1_w"], params["ct1_b"]),
                     params["pos1_w"], params["pos1_b"]))
    x = silu(pos_add(conv3x3(x, params["cv1_w"], params["cv1_b"]),
                     params["pos2_w"], params["pos2_b"]))
    x = silu(pos_add(convT3x3(x, params["ct2_w"], params["ct2_b"]),
                     params["pos3_w"], params["pos3_b"]))
    x = silu(pos_add(conv3x3(x, params["cv2_w"], params["cv2_b"]),
                     params["pos4_w"], params["pos4_b"]))
    x = jnp.tanh(convT3x3(x, params["ct3_w"], params["ct3_b"]))
    return x.transpose(0, 3, 1, 2)


if __name__ == "__main__":
    B, num_input_channels, c_hid, latent_dim = 16, 3, 8, 16
    bb = 8                                        # batch elements per grid step -> grid=(2,)
    key = jax.random.PRNGKey(0)
    kp, kz = jax.random.split(key)
    params = init_params(kp, num_input_channels, c_hid, latent_dim)
    z = jax.random.normal(kz, (B, latent_dim), jnp.float32)

    packed = prepare_params(params, num_input_channels, c_hid, latent_dim, bb=bb)
    fwd = jax.jit(lambda pk, zz: decoder_apply(pk, zz, num_input_channels))
    out = jax.block_until_ready(fwd(packed, z))

    assert out.shape == (B, num_input_channels, 32, 32), out.shape
    assert bool(jnp.all(jnp.isfinite(out)))
    assert bool(jnp.all(jnp.abs(out) <= 1.0))     # tanh output range

    ref = _reference_forward(params, z, c_hid)
    err = float(jnp.max(jnp.abs(out - ref)))
    assert err < 2e-2, f"max abs err vs pure-JAX reference = {err}"
    print("KERNEL_OK")
</pallas_src>

<mosaic_0001>
module attributes {stable_mosaic.version = 11 : i64} {
  func.func @_decoder_kernel(%arg0: i32, %arg1: memref<8x16xf32, #tpu.memory_space<vmem>>, %arg2: memref<16x32xbf16, #tpu.memory_space<vmem>>, %arg3: memref<1x32xf32, #tpu.memory_space<vmem>>, %arg4: memref<32x8xbf16, #tpu.memory_space<vmem>>, %arg5: memref<32x128xbf16, #tpu.memory_space<vmem>>, %arg6: memref<128x64xbf16, #tpu.memory_space<vmem>>, %arg7: memref<32x64xf32, #tpu.memory_space<vmem>>, %arg8: memref<192x128xbf16, #tpu.memory_space<vmem>>, %arg9: memref<3x64x32xbf16, #tpu.memory_space<vmem>>, %arg10: memref<64x128xf32, #tpu.memory_space<vmem>>, %arg11: memref<384x128xbf16, #tpu.memory_space<vmem>>, %arg12: memref<64x128xf32, #tpu.memory_space<vmem>>, %arg13: memref<384x128xbf16, #tpu.memory_space<vmem>>, %arg14: memref<3x128x64xbf16, #tpu.memory_space<vmem>>, %arg15: memref<128x128xf32, #tpu.memory_space<vmem>>, %arg16: memref<384x128xbf16, #tpu.memory_space<vmem>>, %arg17: memref<128x128xf32, #tpu.memory_space<vmem>>, %arg18: memref<384x128xbf16, #tpu.memory_space<vmem>>, %arg19: memref<3x256x128xbf16, #tpu.memory_space<vmem>>, %arg20: memref<256x128xf32, #tpu.memory_space<vmem>>, %arg21: memref<256x128xf32, #tpu.memory_space<vmem>>) attributes {dimension_semantics = [#tpu.dimension_semantics<parallel>], iteration_bounds = array<i64: 2>, scalar_prefetch = 0 : i64, scratch_operands = 0 : i64, tpu.core_type = #tpu.core_type<tc>, window_params = [{transform_indices = @transform_0, window_bounds = array<i64: 8, 16>}, {pipeline_mode = #tpu.pipeline_mode<synchronous>, transform_indices = @transform_1, window_bounds = array<i64: 16, 32>}, {pipeline_mode = #tpu.pipeline_mode<synchronous>, transform_indices = @transform_2, window_bounds = array<i64: 1, 32>}, {pipeline_mode = #tpu.pipeline_mode<synchronous>, transform_indices = @transform_3, window_bounds = array<i64: 32, 8>}, {pipeline_mode = #tpu.pipeline_mode<synchronous>, transform_indices = @transform_4, window_bounds = array<i64: 32, 128>}, {pipeline_mode = #tpu.pipeline_mode<synchronous>, transform_indices = @transform_5, window_bounds = array<i64: 128, 64>}, {pipeline_mode = #tpu.pipeline_mode<synchronous>, transform_indices = @transform_6, window_bounds = array<i64: 32, 64>}, {pipeline_mode = #tpu.pipeline_mode<synchronous>, transform_indices = @transform_7, window_bounds = array<i64: 192, 128>}, {pipeline_mode = #tpu.pipeline_mode<synchronous>, transform_indices = @transform_8, window_bounds = array<i64: 3, 64, 32>}, {pipeline_mode = #tpu.pipeline_mode<synchronous>, transform_indices = @transform_9, window_bounds = array<i64: 64, 128>}, {pipeline_mode = #tpu.pipeline_mode<synchronous>, transform_indices = @transform_10, window_bounds = array<i64: 384, 128>}, {pipeline_mode = #tpu.pipeline_mode<synchronous>, transform_indices = @transform_11, window_bounds = array<i64: 64, 128>}, {pipeline_mode = #tpu.pipeline_mode<synchronous>, transform_indices = @transform_12, window_bounds = array<i64: 384, 128>}, {pipeline_mode = #tpu.pipeline_mode<synchronous>, transform_indices = @transform_13, window_bounds = array<i64: 3, 128, 64>}, {pipeline_mode = #tpu.pipeline_mode<synchronous>, transform_indices = @transform_14, window_bounds = array<i64: 128, 128>}, {pipeline_mode = #tpu.pipeline_mode<synchronous>, transform_indices = @transform_15, window_bounds = array<i64: 384, 128>}, {pipeline_mode = #tpu.pipeline_mode<synchronous>, transform_indices = @transform_16, window_bounds = array<i64: 128, 128>}, {pipeline_mode = #tpu.pipeline_mode<synchronous>, transform_indices = @transform_17, window_bounds = array<i64: 384, 128>}, {pipeline_mode = #tpu.pipeline_mode<synchronous>, transform_indices = @transform_18, window_bounds = array<i64: 3, 256, 128>}, {pipeline_mode = #tpu.pipeline_mode<synchronous>, transform_indices = @transform_19, window_bounds = array<i64: 256, 128>}, {transform_indices = @transform_20, window_bounds = array<i64: 256, 128>}]} {
    %c0 = arith.constant 0 : index
    %c0_0 = arith.constant 0 : index
    %0 = vector.load %arg1[%c0, %c0_0] : memref<8x16xf32, #tpu.memory_space<vmem>>, vector<8x16xf32>
    %1 = arith.truncf %0 : vector<8x16xf32> to vector<8x16xbf16>
    %c0_1 = arith.constant 0 : index
    %c0_2 = arith.constant 0 : index
    %2 = vector.load %arg2[%c0_1, %c0_2] : memref<16x32xbf16, #tpu.memory_space<vmem>>, vector<16x32xbf16>
    %cst = arith.constant dense<0.000000e+00> : vector<8x32xf32>
    %3 = tpu.matmul %1, %2, %cst {dimension_numbers = #tpu.dot_dimension_numbers<[1], [0], [0], [1], [0, 0, 1, 1], [], []>} : vector<8x16xbf16>, vector<16x32xbf16>, vector<8x32xf32> -> vector<8x32xf32>
    %c0_3 = arith.constant 0 : index
    %c0_4 = arith.constant 0 : index
    %4 = vector.load %arg3[%c0_3, %c0_4] : memref<1x32xf32, #tpu.memory_space<vmem>>, vector<1x32xf32>
    %5 = vector.broadcast %4 : vector<1x32xf32> to vector<8x32xf32>
    %6 = arith.addf %3, %5 : vector<8x32xf32>
    %7 = arith.negf %6 : vector<8x32xf32>
    %8 = math.exp %7 : vector<8x32xf32>
    %cst_5 = arith.constant 1.000000e+00 : f32
    %9 = vector.broadcast %cst_5 : f32 to vector<8x32xf32>
    %10 = arith.addf %9, %8 : vector<8x32xf32>
    %11 = arith.divf %9, %10 : vector<8x32xf32>
    %12 = arith.mulf %6, %11 : vector<8x32xf32>
    %13 = arith.truncf %12 : vector<8x32xf32> to vector<8x32xbf16>
    %c0_6 = arith.constant 0 : index
    %c0_7 = arith.constant 0 : index
    %14 = vector.load %arg4[%c0_6, %c0_7] : memref<32x8xbf16, #tpu.memory_space<vmem>>, vector<32x8xbf16>
    %cst_8 = arith.constant dense<0.000000e+00> : vector<32x32xf32>
    %15 = tpu.matmul %14, %13, %cst_8 {dimension_numbers = #tpu.dot_dimension_numbers<[1], [0], [0], [1], [0, 0, 1, 1], [], []>} : vector<32x8xbf16>, vector<8x32xbf16>, vector<32x32xf32> -> vector<32x32xf32>
    %16 = arith.truncf %15 : vector<32x32xf32> to vector<32x32xbf16>
    %17 = tpu.concatenate %16, %16, %16, %16 in 1 : vector<32x32xbf16>, vector<32x32xbf16>, vector<32x32xbf16>, vector<32x32xbf16> -> vector<32x128xbf16>
    %c0_9 = arith.constant 0 : index
    %c0_10 = arith.constant 0 : index
    %18 = vector.load %arg5[%c0_9, %c0_10] : memref<32x128xbf16, #tpu.memory_space<vmem>>, vector<32x128xbf16>
    %19 = arith.mulf %17, %18 : vector<32x128xbf16>
    %c0_11 = arith.constant 0 : index
    %c0_12 = arith.constant 0 : index
    %20 = vector.load %arg7[%c0_11, %c0_12] : memref<32x64xf32, #tpu.memory_space<vmem>>, vector<32x64xf32>
    %c0_13 = arith.constant 0 : index
    %c0_14 = arith.constant 0 : index
    %21 = vector.load %arg6[%c0_13, %c0_14] : memref<128x64xbf16, #tpu.memory_space<vmem>>, vector<128x64xbf16>
    %cst_15 = arith.constant dense<0.000000e+00> : vector<32x64xf32>
    %22 = tpu.matmul %19, %21, %cst_15 {dimension_numbers = #tpu.dot_dimension_numbers<[1], [0], [0], [1], [0, 0, 1, 1], [], []>} : vector<32x128xbf16>, vector<128x64xbf16>, vector<32x64xf32> -> vector<32x64xf32>
    %23 = arith.addf %20, %22 : vector<32x64xf32>
    %24 = arith.negf %23 : vector<32x64xf32>
    %25 = math.exp %24 : vector<32x64xf32>
    %cst_16 = arith.constant 1.000000e+00 : f32
    %26 = vector.broadcast %cst_16 : f32 to vector<32x64xf32>
    %27 = arith.addf %26, %25 : vector<32x64xf32>
    %28 = arith.divf %26, %27 : vector<32x64xf32>
    %29 = arith.mulf %23, %28 : vector<32x64xf32>
    %30 = arith.truncf %29 : vector<32x64xf32> to vector<32x64xbf16>
    %c0_17 = arith.constant 0 : index
    %c0_18 = arith.constant 0 : index
    %c0_19 = arith.constant 0 : index
    %31 = vector.load %arg9[%c0_17, %c0_18, %c0_19] : memref<3x64x32xbf16, #tpu.memory_space<vmem>>, vector<1x64x32xbf16>
    %32 = vector.shape_cast %31 : vector<1x64x32xbf16> to vector<64x32xbf16>
    %cst_20 = arith.constant dense<0.000000e+00> : vector<64x64xf32>
    %33 = tpu.matmul %32, %30, %cst_20 {dimension_numbers = #tpu.dot_dimension_numbers<[1], [0], [0], [1], [0, 0, 1, 1], [], []>} : vector<64x32xbf16>, vector<32x64xbf16>, vector<64x64xf32> -> vector<64x64xf32>
    %34 = arith.truncf %33 : vector<64x64xf32> to vector<64x64xbf16>
    %c1 = arith.constant 1 : index
    %c0_21 = arith.constant 0 : index
    %c0_22 = arith.constant 0 : index
    %35 = vector.load %arg9[%c1, %c0_21, %c0_22] : memref<3x64x32xbf16, #tpu.memory_space<vmem>>, vector<1x64x32xbf16>
    %36 = vector.shape_cast %35 : vector<1x64x32xbf16> to vector<64x32xbf16>
    %cst_23 = arith.constant dense<0.000000e+00> : vector<64x64xf32>
    %37 = tpu.matmul %36, %30, %cst_23 {dimension_numbers = #tpu.dot_dimension_numbers<[1], [0], [0], [1], [0, 0, 1, 1], [], []>} : vector<64x32xbf16>, vector<32x64xbf16>, vector<64x64xf32> -> vector<64x64xf32>
    %38 = arith.truncf %37 : vector<64x64xf32> to vector<64x64xbf16>
    %c2 = arith.constant 2 : index
    %c0_24 = arith.constant 0 : index
    %c0_25 = arith.constant 0 : index
    %39 = vector.load %arg9[%c2, %c0_24, %c0_25] : memref<3x64x32xbf16, #tpu.memory_space<vmem>>, vector<1x64x32xbf16>
    %40 = vector.shape_cast %39 : vector<1x64x32xbf16> to vector<64x32xbf16>
    %cst_26 = arith.constant dense<0.000000e+00> : vector<64x64xf32>
    %41 = tpu.matmul %40, %30, %cst_26 {dimension_numbers = #tpu.dot_dimension_numbers<[1], [0], [0], [1], [0, 0, 1, 1], [], []>} : vector<64x32xbf16>, vector<32x64xbf16>, vector<64x64xf32> -> vector<64x64xf32>
    %42 = arith.truncf %41 : vector<64x64xf32> to vector<64x64xbf16>
    %43 = tpu.concatenate %34, %38, %42 in 1 : vector<64x64xbf16>, vector<64x64xbf16>, vector<64x64xbf16> -> vector<64x192xbf16>
    %c0_27 = arith.constant 0 : index
    %c0_28 = arith.constant 0 : index
    %44 = vector.load %arg10[%c0_27, %c0_28] : memref<64x128xf32, #tpu.memory_space<vmem>>, vector<64x128xf32>
    %c0_29 = arith.constant 0 : index
    %c0_30 = arith.constant 0 : index
    %45 = vector.load %arg8[%c0_29, %c0_30] : memref<192x128xbf16, #tpu.memory_space<vmem>>, vector<192x128xbf16>
    %cst_31 = arith.constant dense<0.000000e+00> : vector<64x128xf32>
    %46 = tpu.matmul %43, %45, %cst_31 {dimension_numbers = #tpu.dot_dimension_numbers<[1], [0], [0], [1], [0, 0, 1, 1], [], []>} : vector<64x192xbf16>, vector<192x128xbf16>, vector<64x128xf32> -> vector<64x128xf32>
    %47 = arith.addf %44, %46 : vector<64x128xf32>
    %48 = arith.negf %47 : vector<64x128xf32>
    %49 = math.exp %48 : vector<64x128xf32>
    %cst_32 = arith.constant 1.000000e+00 : f32
    %50 = vector.broadcast %cst_32 : f32 to vector<64x128xf32>
    %51 = arith.addf %50, %49 : vector<64x128xf32>
    %52 = arith.divf %50, %51 : vector<64x128xf32>
    %53 = arith.mulf %47, %52 : vector<64x128xf32>
    %cst_33 = arith.constant 0.000000e+00 : f32
    %54 = vector.broadcast %cst_33 : f32 to vector<1x128xf32>
    %55 = vector.extract_strided_slice %53 {offsets = [0, 0], sizes = [63, 128], strides = [1, 1]} : vector<64x128xf32> to vector<63x128xf32>
    %56 = tpu.concatenate %54, %55 in 0 : vector<1x128xf32>, vector<63x128xf32> -> vector<64x128xf32>
    %57 = vector.extract_strided_slice %53 {offsets = [1, 0], sizes = [63, 128], strides = [1, 1]} : vector<64x128xf32> to vector<63x128xf32>
    %58 = tpu.concatenate %57, %54 in 0 : vector<63x128xf32>, vector<1x128xf32> -> vector<64x128xf32>
    %59 = tpu.iota {dimensions = array<i32: 0>} : vector<64x1xi32>
    %c8_i32 = arith.constant 8 : i32
    %c0_i32 = arith.constant 0 : i32
    %60 = arith.cmpi eq, %c8_i32, %c0_i32 : i32
    %c1_i32 = arith.constant 1 : i32
    %61 = arith.select %60, %c1_i32, %c8_i32 : i32
    %62 = vector.broadcast %61 : i32 to vector<64x1xi32>
    %63 = arith.remsi %59, %62 : vector<64x1xi32>
    %c0_i32_34 = arith.constant 0 : i32
    %64 = vector.broadcast %c0_i32_34 : i32 to vector<64x1xi32>
    %65 = arith.cmpi ne, %63, %64 : vector<64x1xi32>
    %c0_i32_35 = arith.constant 0 : i32
    %66 = vector.broadcast %c0_i32_35 : i32 to vector<64x1xi32>
    %67 = arith.cmpi slt, %63, %66 : vector<64x1xi32>
    %c0_i32_36 = arith.constant 0 : i32
    %68 = arith.cmpi slt, %61, %c0_i32_36 : i32
    %69 = vector.broadcast %68 : i1 to vector<64x1xi1>
    %70 = vector.broadcast %69 : vector<64x1xi1> to vector<64x1xi1>
    %71 = arith.xori %67, %70 : vector<64x1xi1>
    %72 = arith.andi %71, %65 : vector<64x1xi1>
    %73 = vector.broadcast %61 : i32 to vector<64x1xi32>
    %74 = arith.addi %63, %73 : vector<64x1xi32>
    %75 = arith.select %72, %74, %63 : vector<64x1xi1>, vector<64x1xi32>
    %c0_i32_37 = arith.constant 0 : i32
    %76 = vector.broadcast %c0_i32_37 : i32 to vector<64x1xi32>
    %77 = arith.cmpi eq, %75, %76 : vector<64x1xi32>
    %cst_38 = arith.constant 0.000000e+00 : f32
    %78 = vector.shape_cast %77 : vector<64x1xi1> to vector<64x1xi1>
    %79 = vector.broadcast %78 : vector<64x1xi1> to vector<64x128xi1>
    %80 = vector.broadcast %cst_38 : f32 to vector<64x128xf32>
    %81 = arith.select %79, %80, %56 : vector<64x128xi1>, vector<64x128xf32>
    %c7_i32 = arith.constant 7 : i32
    %82 = vector.broadcast %c7_i32 : i32 to vector<64x1xi32>
    %83 = arith.cmpi eq, %75, %82 : vector<64x1xi32>
    %cst_39 = arith.constant 0.000000e+00 : f32
    %84 = vector.shape_cast %83 : vector<64x1xi1> to vector<64x1xi1>
    %85 = vector.broadcast %84 : vector<64x1xi1> to vector<64x128xi1>
    %86 = vector.broadcast %cst_39 : f32 to vector<64x128xf32>
    %87 = arith.select %85, %86, %58 : vector<64x128xi1>, vector<64x128xf32>
    %88 = tpu.concatenate %81, %53, %87 in 1 : vector<64x128xf32>, vector<64x128xf32>, vector<64x128xf32> -> vector<64x384xf32>
    %89 = arith.truncf %88 : vector<64x384xf32> to vector<64x384xbf16>
    %c0_40 = arith.constant 0 : index
    %c0_41 = arith.constant 0 : index
    %90 = vector.load %arg12[%c0_40, %c0_41] : memref<64x128xf32, #tpu.memory_space<vmem>>, vector<64x128xf32>
    %c0_42 = arith.constant 0 : index
    %c0_43 = arith.constant 0 : index
    %91 = vector.load %arg11[%c0_42, %c0_43] : memref<384x128xbf16, #tpu.memory_space<vmem>>, vector<384x128xbf16>
    %cst_44 = arith.constant dense<0.000000e+00> : vector<64x128xf32>
    %92 = tpu.matmul %89, %91, %cst_44 {dimension_numbers = #tpu.dot_dimension_numbers<[1], [0], [0], [1], [0, 0, 1, 1], [], []>} : vector<64x384xbf16>, vector<384x128xbf16>, vector<64x128xf32> -> vector<64x128xf32>
    %93 = arith.addf %90, %92 : vector<64x128xf32>
    %94 = arith.negf %93 : vector<64x128xf32>
    %95 = math.exp %94 : vector<64x128xf32>
    %cst_45 = arith.constant 1.000000e+00 : f32
    %96 = vector.broadcast %cst_45 : f32 to vector<64x128xf32>
    %97 = arith.addf %96, %95 : vector<64x128xf32>
    %98 = arith.divf %96, %97 : vector<64x128xf32>
    %99 = arith.mulf %93, %98 : vector<64x128xf32>
    %100 = arith.truncf %99 : vector<64x128xf32> to vector<64x128xbf16>
    %c0_46 = arith.constant 0 : index
    %c0_47 = arith.constant 0 : index
    %c0_48 = arith.constant 0 : index
    %101 = vector.load %arg14[%c0_46, %c0_47, %c0_48] : memref<3x128x64xbf16, #tpu.memory_space<vmem>>, vector<1x128x64xbf16>
    %102 = vector.shape_cast %101 : vector<1x128x64xbf16> to vector<128x64xbf16>
    %cst_49 = arith.constant dense<0.000000e+00> : vector<128x128xf32>
    %103 = tpu.matmul %102, %100, %cst_49 {dimension_numbers = #tpu.dot_dimension_numbers<[1], [0], [0], [1], [0, 0, 1, 1], [], []>} : vector<128x64xbf16>, vector<64x128xbf16>, vector<128x128xf32> -> vector<128x128xf32>
    %104 = arith.truncf %103 : vector<128x128xf32> to vector<128x128xbf16>
    %c1_50 = arith.constant 1 : index
    %c0_51 = arith.constant 0 : index
    %c0_52 = arith.constant 0 : index
    %105 = vector.load %arg14[%c1_50, %c0_51, %c0_52] : memref<3x128x64xbf16, #tpu.memory_space<vmem>>, vector<1x128x64xbf16>
    %106 = vector.shape_cast %105 : vector<1x128x64xbf16> to vector<128x64xbf16>
    %cst_53 = arith.constant dense<0.000000e+00> : vector<128x128xf32>
    %107 = tpu.matmul %106, %100, %cst_53 {dimension_numbers = #tpu.dot_dimension_numbers<[1], [0], [0], [1], [0, 0, 1, 1], [], []>} : vector<128x64xbf16>, vector<64x128xbf16>, vector<128x128xf32> -> vector<128x128xf32>
    %108 = arith.truncf %107 : vector<128x128xf32> to vector<128x128xbf16>
    %c2_54 = arith.constant 2 : index
    %c0_55 = arith.constant 0 : index
    %c0_56 = arith.constant 0 : index
    %109 = vector.load %arg14[%c2_54, %c0_55, %c0_56] : memref<3x128x64xbf16, #tpu.memory_space<vmem>>, vector<1x128x64xbf16>
    %110 = vector.shape_cast %109 : vector<1x128x64xbf16> to vector<128x64xbf16>
    %cst_57 = arith.constant dense<0.000000e+00> : vector<128x128xf32>
    %111 = tpu.matmul %110, %100, %cst_57 {dimension_numbers = #tpu.dot_dimension_numbers<[1], [0], [0], [1], [0, 0, 1, 1], [], []>} : vector<128x64xbf16>, vector<64x128xbf16>, vector<128x128xf32> -> vector<128x128xf32>
    %112 = arith.truncf %111 : vector<128x128xf32> to vector<128x128xbf16>
    %113 = tpu.concatenate %104, %108, %112 in 1 : vector<128x128xbf16>, vector<128x128xbf16>, vector<128x128xbf16> -> vector<128x384xbf16>
    %c0_58 = arith.constant 0 : index
    %c0_59 = arith.constant 0 : index
    %114 = vector.load %arg15[%c0_58, %c0_59] : memref<128x128xf32, #tpu.memory_space<vmem>>, vector<128x128xf32>
    %c0_60 = arith.constant 0 : index
    %c0_61 = arith.constant 0 : index
    %115 = vector.load %arg13[%c0_60, %c0_61] : memref<384x128xbf16, #tpu.memory_space<vmem>>, vector<384x128xbf16>
    %cst_62 = arith.constant dense<0.000000e+00> : vector<128x128xf32>
    %116 = tpu.matmul %113, %115, %cst_62 {dimension_numbers = #tpu.dot_dimension_numbers<[1], [0], [0], [1], [0, 0, 1, 1], [], []>} : vector<128x384xbf16>, vector<384x128xbf16>, vector<128x128xf32> -> vector<128x128xf32>
    %117 = arith.addf %114, %116 : vector<128x128xf32>
    %118 = arith.negf %117 : vector<128x128xf32>
    %119 = math.exp %118 : vector<128x128xf32>
    %cst_63 = arith.constant 1.000000e+00 : f32
    %120 = vector.broadcast %cst_63 : f32 to vector<128x128xf32>
    %121 = arith.addf %120, %119 : vector<128x128xf32>
    %122 = arith.divf %120, %121 : vector<128x128xf32>
    %123 = arith.mulf %117, %122 : vector<128x128xf32>
    %cst_64 = arith.constant 0.000000e+00 : f32
    %124 = vector.broadcast %cst_64 : f32 to vector<1x128xf32>
    %125 = vector.extract_strided_slice %123 {offsets = [0, 0], sizes = [127, 128], strides = [1, 1]} : vector<128x128xf32> to vector<127x128xf32>
    %126 = tpu.concatenate %124, %125 in 0 : vector<1x128xf32>, vector<127x128xf32> -> vector<128x128xf32>
    %127 = vector.extract_strided_slice %123 {offsets = [1, 0], sizes = [127, 128], strides = [1, 1]} : vector<128x128xf32> to vector<127x128xf32>
    %128 = tpu.concatenate %127, %124 in 0 : vector<127x128xf32>, vector<1x128xf32> -> vector<128x128xf32>
    %129 = tpu.iota {dimensions = array<i32: 0>} : vector<128x1xi32>
    %c16_i32 = arith.constant 16 : i32
    %c0_i32_65 = arith.constant 0 : i32
    %130 = arith.cmpi eq, %c16_i32, %c0_i32_65 : i32
    %c1_i32_66 = arith.constant 1 : i32
    %131 = arith.select %130, %c1_i32_66, %c16_i32 : i32
    %132 = vector.broadcast %131 : i32 to vector<128x1xi32>
    %133 = arith.remsi %129, %132 : vector<128x1xi32>
    %c0_i32_67 = arith.constant 0 : i32
    %134 = vector.broadcast %c0_i32_67 : i32 to vector<128x1xi32>
    %135 = arith.cmpi ne, %133, %134 : vector<128x1xi32>
    %c0_i32_68 = arith.constant 0 : i32
    %136 = vector.broadcast %c0_i32_68 : i32 to vector<128x1xi32>
    %137 = arith.cmpi slt, %133, %136 : vector<128x1xi32>
    %c0_i32_69 = arith.constant 0 : i32
    %138 = arith.cmpi slt, %131, %c0_i32_69 : i32
    %139 = vector.broadcast %138 : i1 to vector<128x1xi1>
    %140 = vector.broadcast %139 : vector<128x1xi1> to vector<128x1xi1>
    %141 = arith.xori %137, %140 : vector<128x1xi1>
    %142 = arith.andi %141, %135 : vector<128x1xi1>
    %143 = vector.broadcast %131 : i32 to vector<128x1xi32>
    %144 = arith.addi %133, %143 : vector<128x1xi32>
    %145 = arith.select %142, %144, %133 : vector<128x1xi1>, vector<128x1xi32>
    %c0_i32_70 = arith.constant 0 : i32
    %146 = vector.broadcast %c0_i32_70 : i32 to vector<128x1xi32>
    %147 = arith.cmpi eq, %145, %146 : vector<128x1xi32>
    %cst_71 = arith.constant 0.000000e+00 : f32
    %148 = vector.shape_cast %147 : vector<128x1xi1> to vector<128x1xi1>
    %149 = vector.broadcast %148 : vector<128x1xi1> to vector<128x128xi1>
    %150 = vector.broadcast %cst_71 : f32 to vector<128x128xf32>
    %151 = arith.select %149, %150, %126 : vector<128x128xi1>, vector<128x128xf32>
    %c15_i32 = arith.constant 15 : i32
    %152 = vector.broadcast %c15_i32 : i32 to vector<128x1xi32>
    %153 = arith.cmpi eq, %145, %152 : vector<128x1xi32>
    %cst_72 = arith.constant 0.000000e+00 : f32
    %154 = vector.shape_cast %153 : vector<128x1xi1> to vector<128x1xi1>
    %155 = vector.broadcast %154 : vector<128x1xi1> to vector<128x128xi1>
    %156 = vector.broadcast %cst_72 : f32 to vector<128x128xf32>
    %157 = arith.select %155, %156, %128 : vector<128x128xi1>, vector<128x128xf32>
    %158 = tpu.concatenate %151, %123, %157 in 1 : vector<128x128xf32>, vector<128x128xf32>, vector<128x128xf32> -> vector<128x384xf32>
    %159 = arith.truncf %158 : vector<128x384xf32> to vector<128x384xbf16>
    %c0_73 = arith.constant 0 : index
    %c0_74 = arith.constant 0 : index
    %160 = vector.load %arg17[%c0_73, %c0_74] : memref<128x128xf32, #tpu.memory_space<vmem>>, vector<128x128xf32>
    %c0_75 = arith.constant 0 : index
    %c0_76 = arith.constant 0 : index
    %161 = vector.load %arg16[%c0_75, %c0_76] : memref<384x128xbf16, #tpu.memory_space<vmem>>, vector<384x128xbf16>
    %cst_77 = arith.constant dense<0.000000e+00> : vector<128x128xf32>
    %162 = tpu.matmul %159, %161, %cst_77 {dimension_numbers = #tpu.dot_dimension_numbers<[1], [0], [0], [1], [0, 0, 1, 1], [], []>} : vector<128x384xbf16>, vector<384x128xbf16>, vector<128x128xf32> -> vector<128x128xf32>
    %163 = arith.addf %160, %162 : vector<128x128xf32>
    %164 = arith.negf %163 : vector<128x128xf32>
    %165 = math.exp %164 : vector<128x128xf32>
    %cst_78 = arith.constant 1.000000e+00 : f32
    %166 = vector.broadcast %cst_78 : f32 to vector<128x128xf32>
    %167 = arith.addf %166, %165 : vector<128x128xf32>
    %168 = arith.divf %166, %167 : vector<128x128xf32>
    %169 = arith.mulf %163, %168 : vector<128x128xf32>
    %170 = arith.truncf %169 : vector<128x128xf32> to vector<128x128xbf16>
    %c0_79 = arith.constant 0 : index
    %c0_80 = arith.constant 0 : index
    %c0_81 = arith.constant 0 : index
    %171 = vector.load %arg19[%c0_79, %c0_80, %c0_81] : memref<3x256x128xbf16, #tpu.memory_space<vmem>>, vector<1x256x128xbf16>
    %172 = vector.shape_cast %171 : vector<1x256x128xbf16> to vector<256x128xbf16>
    %cst_82 = arith.constant dense<0.000000e+00> : vector<256x128xf32>
    %173 = tpu.matmul %172, %170, %cst_82 {dimension_numbers = #tpu.dot_dimension_numbers<[1], [0], [0], [1], [0, 0, 1, 1], [], []>} : vector<256x128xbf16>, vector<128x128xbf16>, vector<256x128xf32> -> vector<256x128xf32>
    %174 = arith.truncf %173 : vector<256x128xf32> to vector<256x128xbf16>
    %c1_83 = arith.constant 1 : index
    %c0_84 = arith.constant 0 : index
    %c0_85 = arith.constant 0 : index
    %175 = vector.load %arg19[%c1_83, %c0_84, %c0_85] : memref<3x256x128xbf16, #tpu.memory_space<vmem>>, vector<1x256x128xbf16>
    %176 = vector.shape_cast %175 : vector<1x256x128xbf16> to vector<256x128xbf16>
    %cst_86 = arith.constant dense<0.000000e+00> : vector<256x128xf32>
    %177 = tpu.matmul %176, %170, %cst_86 {dimension_numbers = #tpu.dot_dimension_numbers<[1], [0], [0], [1], [0, 0, 1, 1], [], []>} : vector<256x128xbf16>, vector<128x128xbf16>, vector<256x128xf32> -> vector<256x128xf32>
    %178 = arith.truncf %177 : vector<256x128xf32> to vector<256x128xbf16>
    %c2_87 = arith.constant 2 : index
    %c0_88 = arith.constant 0 : index
    %c0_89 = arith.constant 0 : index
    %179 = vector.load %arg19[%c2_87, %c0_88, %c0_89] : memref<3x256x128xbf16, #tpu.memory_space<vmem>>, vector<1x256x128xbf16>
    %180 = vector.shape_cast %179 : vector<1x256x128xbf16> to vector<256x128xbf16>
    %cst_90 = arith.constant dense<0.000000e+00> : vector<256x128xf32>
    %181 = tpu.matmul %180, %170, %cst_90 {dimension_numbers = #tpu.dot_dimension_numbers<[1], [0], [0], [1], [0, 0, 1, 1], [], []>} : vector<256x128xbf16>, vector<128x128xbf16>, vector<256x128xf32> -> vector<256x128xf32>
    %182 = arith.truncf %181 : vector<256x128xf32> to vector<256x128xbf16>
    %183 = tpu.concatenate %174, %178, %182 in 1 : vector<256x128xbf16>, vector<256x128xbf16>, vector<256x128xbf16> -> vector<256x384xbf16>
    %c0_91 = arith.constant 0 : index
    %c0_92 = arith.constant 0 : index
    %184 = vector.load %arg20[%c0_91, %c0_92] : memref<256x128xf32, #tpu.memory_space<vmem>>, vector<256x128xf32>
    %c0_93 = arith.constant 0 : index
    %c0_94 = arith.constant 0 : index
    %185 = vector.load %arg18[%c0_93, %c0_94] : memref<384x128xbf16, #tpu.memory_space<vmem>>, vector<384x128xbf16>
    %cst_95 = arith.constant dense<0.000000e+00> : vector<256x128xf32>
    %186 = tpu.matmul %183, %185, %cst_95 {dimension_numbers = #tpu.dot_dimension_numbers<[1], [0], [0], [1], [0, 0, 1, 1], [], []>} : vector<256x384xbf16>, vector<384x128xbf16>, vector<256x128xf32> -> vector<256x128xf32>
    %187 = arith.addf %184, %186 : vector<256x128xf32>
    %188 = math.tanh %187 : vector<256x128xf32>
    %c0_96 = arith.constant 0 : index
    %c0_97 = arith.constant 0 : index
    %189 = vector.load %arg21[%c0_96, %c0_97] : memref<256x128xf32, #tpu.memory_space<vmem>>, vector<256x128xf32>
    tpu.vector_store %arg21[%c0_96, %c0_97], %188 {strides = array<i32>} : memref<256x128xf32, #tpu.memory_space<vmem>>, vector<256x128xf32>,
    return
  }
  func.func @transform_0(%arg0: i32) -> (i32, i32) {
    %c0_i32 = arith.constant 0 : i32
    %c0_i32_0 = arith.constant 0 : i32
    return %arg0, %c0_i32 : i32, i32
  }
  func.func @transform_1(%arg0: i32) -> (i32, i32) {
    %c0_i32 = arith.constant 0 : i32
    %c0_i32_0 = arith.constant 0 : i32
    %c0_i32_1 = arith.constant 0 : i32
    return %c0_i32, %c0_i32_0 : i32, i32
  }
  func.func @transform_2(%arg0: i32) -> (i32, i32) {
    %c0_i32 = arith.constant 0 : i32
    %c0_i32_0 = arith.constant 0 : i32
    %c0_i32_1 = arith.constant 0 : i32
    return %c0_i32, %c0_i32_0 : i32, i32
  }
  func.func @transform_3(%arg0: i32) -> (i32, i32) {
    %c0_i32 = arith.constant 0 : i32
    %c0_i32_0 = arith.constant 0 : i32
    %c0_i32_1 = arith.constant 0 : i32
    return %c0_i32, %c0_i32_0 : i32, i32
  }
  func.func @transform_4(%arg0: i32) -> (i32, i32) {
    %c0_i32 = arith.constant 0 : i32
    %c0_i32_0 = arith.constant 0 : i32
    %c0_i32_1 = arith.constant 0 : i32
    return %c0_i32, %c0_i32_0 : i32, i32
  }
  func.func @transform_5(%arg0: i32) -> (i32, i32) {
    %c0_i32 = arith.constant 0 : i32
    %c0_i32_0 = arith.constant 0 : i32
    %c0_i32_1 = arith.constant 0 : i32
    return %c0_i32, %c0_i32_0 : i32, i32
  }
  func.func @transform_6(%arg0: i32) -> (i32, i32) {
    %c0_i32 = arith.constant 0 : i32
    %c0_i32_0 = arith.constant 0 : i32
    %c0_i32_1 = arith.constant 0 : i32
    return %c0_i32, %c0_i32_0 : i32, i32
  }
  func.func @transform_7(%arg0: i32) -> (i32, i32) {
    %c0_i32 = arith.constant 0 : i32
    %c0_i32_0 = arith.constant 0 : i32
    %c0_i32_1 = arith.constant 0 : i32
    return %c0_i32, %c0_i32_0 : i32, i32
  }
  func.func @transform_8(%arg0: i32) -> (i32, i32, i32) {
    %c0_i32 = arith.constant 0 : i32
    %c0_i32_0 = arith.constant 0 : i32
    %c0_i32_1 = arith.constant 0 : i32
    %c0_i32_2 = arith.constant 0 : i32
    return %c0_i32, %c0_i32_0, %c0_i32_1 : i32, i32, i32
  }
  func.func @transform_9(%arg0: i32) -> (i32, i32) {
    %c0_i32 = arith.constant 0 : i32
    %c0_i32_0 = arith.constant 0 : i32
    %c0_i32_1 = arith.constant 0 : i32
    return %c0_i32, %c0_i32_0 : i32, i32
  }
  func.func @transform_10(%arg0: i32) -> (i32, i32) {
    %c0_i32 = arith.constant 0 : i32
    %c0_i32_0 = arith.constant 0 : i32
    %c0_i32_1 = arith.constant 0 : i32
    return %c0_i32, %c0_i32_0 : i32, i32
  }
  func.func @transform_11(%arg0: i32) -> (i32, i32) {
    %c0_i32 = arith.constant 0 : i32
    %c0_i32_0 = arith.constant 0 : i32
    %c0_i32_1 = arith.constant 0 : i32
    return %c0_i32, %c0_i32_0 : i32, i32
  }
  func.func @transform_12(%arg0: i32) -> (i32, i32) {
    %c0_i32 = arith.constant 0 : i32
    %c0_i32_0 = arith.constant 0 : i32
    %c0_i32_1 = arith.constant 0 : i32
    return %c0_i32, %c0_i32_0 : i32, i32
  }
  func.func @transform_13(%arg0: i32) -> (i32, i32, i32) {
    %c0_i32 = arith.constant 0 : i32
    %c0_i32_0 = arith.constant 0 : i32
    %c0_i32_1 = arith.constant 0 : i32
    %c0_i32_2 = arith.constant 0 : i32
    return %c0_i32, %c0_i32_0, %c0_i32_1 : i32, i32, i32
  }
  func.func @transform_14(%arg0: i32) -> (i32, i32) {
    %c0_i32 = arith.constant 0 : i32
    %c0_i32_0 = arith.constant 0 : i32
    %c0_i32_1 = arith.constant 0 : i32
    return %c0_i32, %c0_i32_0 : i32, i32
  }
  func.func @transform_15(%arg0: i32) -> (i32, i32) {
    %c0_i32 = arith.constant 0 : i32
    %c0_i32_0 = arith.constant 0 : i32
    %c0_i32_1 = arith.constant 0 : i32
    return %c0_i32, %c0_i32_0 : i32, i32
  }
  func.func @transform_16(%arg0: i32) -> (i32, i32) {
    %c0_i32 = arith.constant 0 : i32
    %c0_i32_0 = arith.constant 0 : i32
    %c0_i32_1 = arith.constant 0 : i32
    return %c0_i32, %c0_i32_0 : i32, i32
  }
  func.func @transform_17(%arg0: i32) -> (i32, i32) {
    %c0_i32 = arith.constant 0 : i32
    %c0_i32_0 = arith.constant 0 : i32
    %c0_i32_1 = arith.constant 0 : i32
    return %c0_i32, %c0_i32_0 : i32, i32
  }
  func.func @transform_18(%arg0: i32) -> (i32, i32, i32) {
    %c0_i32 = arith.constant 0 : i32
    %c0_i32_0 = arith.constant 0 : i32
    %c0_i32_1 = arith.constant 0 : i32
    %c0_i32_2 = arith.constant 0 : i32
    return %c0_i32, %c0_i32_0, %c0_i32_1 : i32, i32, i32
  }
  func.func @transform_19(%arg0: i32) -> (i32, i32) {
    %c0_i32 = arith.constant 0 : i32
    %c0_i32_0 = arith.constant 0 : i32
    %c0_i32_1 = arith.constant 0 : i32
    return %c0_i32, %c0_i32_0 : i32, i32
  }
  func.func @transform_20(%arg0: i32) -> (i32, i32) {
    %c0_i32 = arith.constant 0 : i32
    %c0_i32_0 = arith.constant 0 : i32
    return %arg0, %c0_i32 : i32, i32
  }
}

</mosaic_0001>

<llo_original>
// kernel: _lambda_.1
$region0: #{_lambda_.1}
  #allocation0 [shape = 'u32[]', space=smem, size = 0x4, offset = 0x4, fixed_abs, tag = 'smem constant byte address 0x4 - core index']
  #allocation1 [shape = 'u32[144,128]{1,0:T(1,128)}', space=vmem, size = 0x12000, scoped, tag = 'internal scratch']
  %s0 = inlined_call_operand.hbm [shape: f32[16,16], index: 0, kind: input, shape index: {}]
  %s1 = inlined_call_operand.hbm [shape: bf16[16,32], index: 1, kind: input, shape index: {}]
  %s2 = inlined_call_operand.hbm [shape: f32[1,32], index: 2, kind: input, shape index: {}]
  %s3 = inlined_call_operand.vmem [shape: bf16[32,8], index: 3, kind: input, shape index: {}]
  %s4 = inlined_call_operand.hbm [shape: bf16[32,128], index: 4, kind: input, shape index: {}]
  %s5 = inlined_call_operand.vmem [shape: bf16[128,64], index: 5, kind: input, shape index: {}]
  %s6 = inlined_call_operand.vmem [shape: f32[32,64], index: 6, kind: input, shape index: {}]
  %s7 = inlined_call_operand.hbm [shape: bf16[192,128], index: 7, kind: input, shape index: {}]
  %s8 = inlined_call_operand.vmem [shape: bf16[3,64,32], index: 8, kind: input, shape index: {}]
  %s9 = inlined_call_operand.hbm [shape: f32[64,128], index: 9, kind: input, shape index: {}]
  %s10 = inlined_call_operand.vmem [shape: bf16[384,128], index: 10, kind: input, shape index: {}]
  %s11 = inlined_call_operand.hbm [shape: f32[64,128], index: 11, kind: input, shape index: {}]
  %s12 = inlined_call_operand.hbm [shape: bf16[384,128], index: 12, kind: input, shape index: {}]
  %s13 = inlined_call_operand.vmem [shape: bf16[3,128,64], index: 13, kind: input, shape index: {}]
  %s14 = inlined_call_operand.hbm [shape: f32[128,128], index: 14, kind: input, shape index: {}]
  %s15 = inlined_call_operand.hbm [shape: bf16[384,128], index: 15, kind: input, shape index: {}]
  %s16 = inlined_call_operand.hbm [shape: f32[128,128], index: 16, kind: input, shape index: {}]
  %s17 = inlined_call_operand.hbm [shape: bf16[384,128], index: 17, kind: input, shape index: {}]
  %s18 = inlined_call_operand.vmem [shape: bf16[3,256,128], index: 18, kind: input, shape index: {}]
  %s19 = inlined_call_operand.hbm [shape: f32[256,128], index: 19, kind: input, shape index: {}]
  %s20 = inlined_call_operand.vmem [shape: f32[512,128], index: 20, kind: output, shape index: {}]
  %s21 = sld [smem:[#allocation0]]
  $region165: #{_lambda_.1} parent=0
    _
  %s23 = ssub.s32 1, %s21
  %s24 = scalar_select 0, %s23, %s21
  $region1: #{_lambda_.1} parent=0
    #allocation2 [shape = 'u8[8192]{0}', space=vmem, size = 0x2000, scoped, tag = 'input window, operand 0']
    #allocation3 [shape = 's32[2]{0}', space=sflag, size = 0x8, scoped, tag = 'scoped memory for _lambda_.1']
    #allocation4 [shape = 'u8[4096]{0}', space=vmem, size = 0x1000, scoped, tag = 'input window, operand 1, single buffered']
    #allocation5 [shape = 's32[1]{0}', space=sflag, size = 0x4, scoped, tag = 'scoped memory for _lambda_.1']
    #allocation6 [shape = 'u8[512]{0}', space=vmem, size = 0x400, scoped, tag = 'input window, operand 2, single buffered']
    #allocation7 [shape = 'u8[8192]{0}', space=vmem, size = 0x2000, scoped, tag = 'input window, operand 4, single buffered']
    #allocation8 [shape = 's32[1]{0}', space=sflag, size = 0x4, scoped, tag = 'scoped memory for _lambda_.1']
    #allocation9 [shape = 'u8[49152]{0}', space=vmem, size = 0xc000, scoped, tag = 'input window, operand 7, single buffered']
    #allocation10 [shape = 'u8[32768]{0}', space=vmem, size = 0x8000, scoped, tag = 'input window, operand 9, single buffered']
    #allocation11 [shape = 's32[1]{0}', space=sflag, size = 0x4, scoped, tag = 'scoped memory for _lambda_.1']
    #allocation12 [shape = 'u8[32768]{0}', space=vmem, size = 0x8000, scoped, tag = 'input window, operand 11, single buffered']
    #allocation13 [shape = 'u8[98304]{0}', space=vmem, size = 0x18000, scoped, tag = 'input window, operand 12, single buffered']
    #allocation14 [shape = 's32[1]{0}', space=sflag, size = 0x4, scoped, tag = 'scoped memory for _lambda_.1']
    #allocation15 [shape = 'u8[65536]{0}', space=vmem, size = 0x10000, scoped, tag = 'input window, operand 14, single buffered']
    #allocation16 [shape = 'u8[98304]{0}', space=vmem, size = 0x18000, scoped, tag = 'input window, operand 15, single buffered']
    #allocation17 [shape = 's32[1]{0}', space=sflag, size = 0x4, scoped, tag = 'scoped memory for _lambda_.1']
    #allocation18 [shape = 'u8[65536]{0}', space=vmem, size = 0x10000, scoped, tag = 'input window, operand 16, single buffered']
    #allocation19 [shape = 'u8[98304]{0}', space=vmem, size = 0x18000, scoped, tag = 'input window, operand 17, single buffered']
    #allocation20 [shape = 's32[1]{0}', space=sflag, size = 0x4, scoped, tag = 'scoped memory for _lambda_.1']
    #allocation21 [shape = 'u8[131072]{0}', space=vmem, size = 0x20000, scoped, tag = 'input window, operand 19, single buffered']
    %25 = vsyncpa [#allocation3], 0
    %s26 = scalar_lea.sflag [#allocation3], 1
    %27 = vsyncpa %s26, 0
    %28 = vsyncpa [#allocation5], 0
    %29 = vsyncpa [#allocation8], 0
    %30 = vsyncpa [#allocation11], 0
    %31 = vsyncpa [#allocation14], 0
    %32 = vsyncpa [#allocation17], 0
    %33 = vsyncpa [#allocation20], 0
    loop: start=0, step=1, limit=4
    $region2: #{_lambda_.1} parent=1 // loop_pre_header
      _
    $region3: #{_lambda_.1} parent=1 // loop_header
      %s35 = sphi 0, %s39
      %p36 = scmp.ge.s32.totalorder %s35, 4
      %s45 = sphi 0, %s47
      %s48 = sphi 0, %s45
      %s49 = sphi 0, %s48
      %s65 = sphi 0, %s49
      %s69 = sphi 0, %s69
      %s71 = sphi 0, %s69
      %s72 = sphi 0, %s71
      %s86 = sphi 0, %s72
      %s90 = sphi 0, %s90
      %s92 = sphi 0, %s90
      %s93 = sphi 0, %s92
      %s107 = sphi 0, %s93
      %s111 = sphi 0, %s111
      %s113 = sphi 0, %s111
      %s114 = sphi 0, %s113
      %s128 = sphi 0, %s114
      %s132 = sphi 0, %s132
      %s134 = sphi 0, %s132
      %s135 = sphi 0, %s134
      %s149 = sphi 0, %s135
      %s153 = sphi 0, %s153
      %s155 = sphi 0, %s153
      %s156 = sphi 0, %s155
      %s170 = sphi 0, %s156
      %s174 = sphi 0, %s174
      %s176 = sphi 0, %s174
      %s177 = sphi 0, %s176
      %s191 = sphi 0, %s177
      %s195 = sphi 0, %s195
      %s197 = sphi 0, %s195
      %s198 = sphi 0, %s197
      %s212 = sphi 0, %s198
      %s216 = sphi 0, %s216
      %s218 = sphi 0, %s216
      %s219 = sphi 0, %s218
      %s233 = sphi 0, %s219
      %s237 = sphi 0, %s237
      %s239 = sphi 0, %s237
      %s240 = sphi 0, %s239
      %s254 = sphi 0, %s240
      %s258 = sphi 0, %s258
      %s260 = sphi 0, %s258
      %s261 = sphi 0, %s260
      %s275 = sphi 0, %s261
      %s279 = sphi 0, %s279
      %s281 = sphi 0, %s279
      %s282 = sphi 0, %s281
      %s296 = sphi 0, %s282
      %s300 = sphi 0, %s300
      %s302 = sphi 0, %s300
      %s303 = sphi 0, %s302
      %s317 = sphi 0, %s303
      %s321 = sphi 0, %s321
      %s323 = sphi 0, %s321
      %s324 = sphi 0, %s323
      %s338 = sphi 0, %s324
      %s342 = sphi 0, %s342
      %s344 = sphi 0, %s342
      %s345 = sphi 0, %s344
      %s359 = sphi 0, %s345
      %s363 = sphi 0, %s363
      %s365 = sphi 0, %s363
      %s366 = sphi 0, %s365
      %s380 = sphi 0, %s366
      %s384 = sphi 0, %s384
      %s386 = sphi 0, %s384
      %s387 = sphi 0, %s386
      %s401 = sphi 0, %s387
      %s405 = sphi 0, %s405
      %s407 = sphi 0, %s405
      %s408 = sphi 0, %s407
      %s422 = sphi 0, %s408
      %s426 = sphi 0, %s426
      %s428 = sphi 0, %s426
      %s429 = sphi 0, %s428
      %s443 = sphi 0, %s429
      %s447 = sphi 0, %s447
      %s449 = sphi 0, %s447
      %s450 = sphi 0, %s449
      %s464 = sphi 0, %s450
      %s470 = sphi 0, %s472
      %s473 = sphi 0, %s470
      %s474 = sphi 0, %s473
      %s490 = sphi 0, %s474
    $region4: #{_lambda_.1} parent=1 // loop_header_branch
      %38 = sbr.rel (%p36) target = $region8
    $region5: #{_lambda_.1} parent=1 // loop_body
      %s40 = ssub.s32 %s35, 1
      %s41 = ssub.s32 %s35, 2
      %s42 = sadd.s32 %s35, 1
      %s43 = ssub.s32 %s35, %s42
      %p44 = scmp.eq.s32.totalorder %s43, 0
      %s46 = sadd.s32 %s45, 1
      %s47 = scalar_select %p44, %s45, %s46
      %p50 = pneg %p44
      %p51 = scmp.eq.s32.totalorder %s35, 1
      %p52 = por %p50, %p51
      %p53 = scmp.ne.s32.totalorder %s45, %s48
      %p54 = scmp.eq.s32.totalorder %s35, 0
      %p55 = por %p53, %p54
      %p56 = scmp.ne.s32.totalorder %s45, %s48
      %p57 = scmp.eq.s32.totalorder %s40, 1
      %p58 = por %p56, %p57
      %p59 = scmp.ne.s32.totalorder %s48, %s49
      %p60 = scmp.eq.s32.totalorder %s40, 0
      %p61 = por %p59, %p60
      %p62 = scmp.ne.s32.totalorder %s48, %s49
      %p63 = scmp.eq.s32.totalorder %s41, 1
      %p64 = por %p62, %p63
      %p66 = scmp.ne.s32.totalorder %s49, %s65
      %p67 = scmp.eq.s32.totalorder %s41, 0
      %p68 = por %p66, %p67
      %s70 = sadd.s32 %s69, 1
      %p73 = scmp.eq.s32.totalorder %s35, 1
      %p74 = scmp.ne.s32.totalorder %s69, %s71
      %p75 = scmp.eq.s32.totalorder %s35, 0
      %p76 = por %p74, %p75
      %p77 = scmp.ne.s32.totalorder %s69, %s71
      %p78 = scmp.eq.s32.totalorder %s40, 1
      %p79 = por %p77, %p78
      %p80 = scmp.ne.s32.totalorder %s71, %s72
      %p81 = scmp.eq.s32.totalorder %s40, 0
      %p82 = por %p80, %p81
      %p83 = scmp.ne.s32.totalorder %s71, %s72
      %p84 = scmp.eq.s32.totalorder %s41, 1
      %p85 = por %p83, %p84
      %p87 = scmp.ne.s32.totalorder %s72, %s86
      %p88 = scmp.eq.s32.totalorder %s41, 0
      %p89 = por %p87, %p88
      %s91 = sadd.s32 %s90, 1
      %p94 = scmp.eq.s32.totalorder %s35, 1
      %p95 = scmp.ne.s32.totalorder %s90, %s92
      %p96 = scmp.eq.s32.totalorder %s35, 0
      %p97 = por %p95, %p96
      %p98 = scmp.ne.s32.totalorder %s90, %s92
      %p99 = scmp.eq.s32.totalorder %s40, 1
      %p100 = por %p98, %p99
      %p101 = scmp.ne.s32.totalorder %s92, %s93
      %p102 = scmp.eq.s32.totalorder %s40, 0
      %p103 = por %p101, %p102
      %p104 = scmp.ne.s32.totalorder %s92, %s93
      %p105 = scmp.eq.s32.totalorder %s41, 1
      %p106 = por %p104, %p105
      %p108 = scmp.ne.s32.totalorder %s93, %s107
      %p109 = scmp.eq.s32.totalorder %s41, 0
      %p110 = por %p108, %p109
      %s112 = sadd.s32 %s111, 1
      %p115 = scmp.eq.s32.totalorder %s35, 1
      %p116 = scmp.ne.s32.totalorder %s111, %s113
      %p117 = scmp.eq.s32.totalorder %s35, 0
      %p118 = por %p116, %p117
      %p119 = scmp.ne.s32.totalorder %s111, %s113
      %p120 = scmp.eq.s32.totalorder %s40, 1
      %p121 = por %p119, %p120
      %p122 = scmp.ne.s32.totalorder %s113, %s114
      %p123 = scmp.eq.s32.totalorder %s40, 0
      %p124 = por %p122, %p123
      %p125 = scmp.ne.s32.totalorder %s113, %s114
      %p126 = scmp.eq.s32.totalorder %s41, 1
      %p127 = por %p125, %p126
      %p129 = scmp.ne.s32.totalorder %s114, %s128
      %p130 = scmp.eq.s32.totalorder %s41, 0
      %p131 = por %p129, %p130
      %s133 = sadd.s32 %s132, 1
      %p136 = scmp.eq.s32.totalorder %s35, 1
      %p137 = scmp.ne.s32.totalorder %s132, %s134
      %p138 = scmp.eq.s32.totalorder %s35, 0
      %p139 = por %p137, %p138
      %p140 = scmp.ne.s32.totalorder %s132, %s134
      %p141 = scmp.eq.s32.totalorder %s40, 1
      %p142 = por %p140, %p141
      %p143 = scmp.ne.s32.totalorder %s134, %s135
      %p144 = scmp.eq.s32.totalorder %s40, 0
      %p145 = por %p143, %p144
      %p146 = scmp.ne.s32.totalorder %s134, %s135
      %p147 = scmp.eq.s32.totalorder %s41, 1
      %p148 = por %p146, %p147
      %p150 = scmp.ne.s32.totalorder %s135, %s149
      %p151 = scmp.eq.s32.totalorder %s41, 0
      %p152 = por %p150, %p151
      %s154 = sadd.s32 %s153, 1
      %p157 = scmp.eq.s32.totalorder %s35, 1
      %p158 = scmp.ne.s32.totalorder %s153, %s155
      %p159 = scmp.eq.s32.totalorder %s35, 0
      %p160 = por %p158, %p159
      %p161 = scmp.ne.s32.totalorder %s153, %s155
      %p162 = scmp.eq.s32.totalorder %s40, 1
      %p163 = por %p161, %p162
      %p164 = scmp.ne.s32.totalorder %s155, %s156
      %p165 = scmp.eq.s32.totalorder %s40, 0
      %p166 = por %p164, %p165
      %p167 = scmp.ne.s32.totalorder %s155, %s156
      %p168 = scmp.eq.s32.totalorder %s41, 1
      %p169 = por %p167, %p168
      %p171 = scmp.ne.s32.totalorder %s156, %s170
      %p172 = scmp.eq.s32.totalorder %s41, 0
      %p173 = por %p171, %p172
      %s175 = sadd.s32 %s174, 1
      %p178 = scmp.eq.s32.totalorder %s35, 1
      %p179 = scmp.ne.s32.totalorder %s174, %s176
      %p180 = scmp.eq.s32.totalorder %s35, 0
      %p181 = por %p179, %p180
      %p182 = scmp.ne.s32.totalorder %s174, %s176
      %p183 = scmp.eq.s32.totalorder %s40, 1
      %p184 = por %p182, %p183
      %p185 = scmp.ne.s32.totalorder %s176, %s177
      %p186 = scmp.eq.s32.totalorder %s40, 0
      %p187 = por %p185, %p186
      %p188 = scmp.ne.s32.totalorder %s176, %s177
      %p189 = scmp.eq.s32.totalorder %s41, 1
      %p190 = por %p188, %p189
      %p192 = scmp.ne.s32.totalorder %s177, %s191
      %p193 = scmp.eq.s32.totalorder %s41, 0
      %p194 = por %p192, %p193
      %s196 = sadd.s32 %s195, 1
      %p199 = scmp.eq.s32.totalorder %s35, 1
      %p200 = scmp.ne.s32.totalorder %s195, %s197
      %p201 = scmp.eq.s32.totalorder %s35, 0
      %p202 = por %p200, %p201
      %p203 = scmp.ne.s32.totalorder %s195, %s197
      %p204 = scmp.eq.s32.totalorder %s40, 1
      %p205 = por %p203, %p204
      %p206 = scmp.ne.s32.totalorder %s197, %s198
      %p207 = scmp.eq.s32.totalorder %s40, 0
      %p208 = por %p206, %p207
      %p209 = scmp.ne.s32.totalorder %s197, %s198
      %p210 = scmp.eq.s32.totalorder %s41, 1
      %p211 = por %p209, %p210
      %p213 = scmp.ne.s32.totalorder %s198, %s212
      %p214 = scmp.eq.s32.totalorder %s41, 0
      %p215 = por %p213, %p214
      %s217 = sadd.s32 %s216, 1
      %p220 = scmp.eq.s32.totalorder %s35, 1
      %p221 = scmp.ne.s32.totalorder %s216, %s218
      %p222 = scmp.eq.s32.totalorder %s35, 0
      %p223 = por %p221, %p222
      %p224 = scmp.ne.s32.totalorder %s216, %s218
      %p225 = scmp.eq.s32.totalorder %s40, 1
      %p226 = por %p224, %p225
      %p227 = scmp.ne.s32.totalorder %s218, %s219
      %p228 = scmp.eq.s32.totalorder %s40, 0
      %p229 = por %p227, %p228
      %p230 = scmp.ne.s32.totalorder %s218, %s219
      %p231 = scmp.eq.s32.totalorder %s41, 1
      %p232 = por %p230, %p231
      %p234 = scmp.ne.s32.totalorder %s219, %s233
      %p235 = scmp.eq.s32.totalorder %s41, 0
      %p236 = por %p234, %p235
      %s238 = sadd.s32 %s237, 1
      %p241 = scmp.eq.s32.totalorder %s35, 1
      %p242 = scmp.ne.s32.totalorder %s237, %s239
      %p243 = scmp.eq.s32.totalorder %s35, 0
      %p244 = por %p242, %p243
      %p245 = scmp.ne.s32.totalorder %s237, %s239
      %p246 = scmp.eq.s32.totalorder %s40, 1
      %p247 = por %p245, %p246
      %p248 = scmp.ne.s32.totalorder %s239, %s240
      %p249 = scmp.eq.s32.totalorder %s40, 0
      %p250 = por %p248, %p249
      %p251 = scmp.ne.s32.totalorder %s239, %s240
      %p252 = scmp.eq.s32.totalorder %s41, 1
      %p253 = por %p251, %p252
      %p255 = scmp.ne.s32.totalorder %s240, %s254
      %p256 = scmp.eq.s32.totalorder %s41, 0
      %p257 = por %p255, %p256
      %s259 = sadd.s32 %s258, 1
      %p262 = scmp.eq.s32.totalorder %s35, 1
      %p263 = scmp.ne.s32.totalorder %s258, %s260
      %p264 = scmp.eq.s32.totalorder %s35, 0
      %p265 = por %p263, %p264
      %p266 = scmp.ne.s32.totalorder %s258, %s260
      %p267 = scmp.eq.s32.totalorder %s40, 1
      %p268 = por %p266, %p267
      %p269 = scmp.ne.s32.totalorder %s260, %s261
      %p270 = scmp.eq.s32.totalorder %s40, 0
      %p271 = por %p269, %p270
      %p272 = scmp.ne.s32.totalorder %s260, %s261
      %p273 = scmp.eq.s32.totalorder %s41, 1
      %p274 = por %p272, %p273
      %p276 = scmp.ne.s32.totalorder %s261, %s275
      %p277 = scmp.eq.s32.totalorder %s41, 0
      %p278 = por %p276, %p277
      %s280 = sadd.s32 %s279, 1
      %p283 = scmp.eq.s32.totalorder %s35, 1
      %p284 = scmp.ne.s32.totalorder %s279, %s281
      %p285 = scmp.eq.s32.totalorder %s35, 0
      %p286 = por %p284, %p285
      %p287 = scmp.ne.s32.totalorder %s279, %s281
      %p288 = scmp.eq.s32.totalorder %s40, 1
      %p289 = por %p287, %p288
      %p290 = scmp.ne.s32.totalorder %s281, %s282
      %p291 = scmp.eq.s32.totalorder %s40, 0
      %p292 = por %p290, %p291
      %p293 = scmp.ne.s32.totalorder %s281, %s282
      %p294 = scmp.eq.s32.totalorder %s41, 1
      %p295 = por %p293, %p294
      %p297 = scmp.ne.s32.totalorder %s282, %s296
      %p298 = scmp.eq.s32.totalorder %s41, 0
      %p299 = por %p297, %p298
      %s301 = sadd.s32 %s300, 1
      %p304 = scmp.eq.s32.totalorder %s35, 1
      %p305 = scmp.ne.s32.totalorder %s300, %s302
      %p306 = scmp.eq.s32.totalorder %s35, 0
      %p307 = por %p305, %p306
      %p308 = scmp.ne.s32.totalorder %s300, %s302
      %p309 = scmp.eq.s32.totalorder %s40, 1
      %p310 = por %p308, %p309
      %p311 = scmp.ne.s32.totalorder %s302, %s303
      %p312 = scmp.eq.s32.totalorder %s40, 0
      %p313 = por %p311, %p312
      %p314 = scmp.ne.s32.totalorder %s302, %s303
      %p315 = scmp.eq.s32.totalorder %s41, 1
      %p316 = por %p314, %p315
      %p318 = scmp.ne.s32.totalorder %s303, %s317
      %p319 = scmp.eq.s32.totalorder %s41, 0
      %p320 = por %p318, %p319
      %s322 = sadd.s32 %s321, 1
      %p325 = scmp.eq.s32.totalorder %s35, 1
      %p326 = scmp.ne.s32.totalorder %s321, %s323
      %p327 = scmp.eq.s32.totalorder %s35, 0
      %p328 = por %p326, %p327
      %p329 = scmp.ne.s32.totalorder %s321, %s323
      %p330 = scmp.eq.s32.totalorder %s40, 1
      %p331 = por %p329, %p330
      %p332 = scmp.ne.s32.totalorder %s323, %s324
      %p333 = scmp.eq.s32.totalorder %s40, 0
      %p334 = por %p332, %p333
      %p335 = scmp.ne.s32.totalorder %s323, %s324
      %p336 = scmp.eq.s32.totalorder %s41, 1
      %p337 = por %p335, %p336
      %p339 = scmp.ne.s32.totalorder %s324, %s338
      %p340 = scmp.eq.s32.totalorder %s41, 0
      %p341 = por %p339, %p340
      %s343 = sadd.s32 %s342, 1
      %p346 = scmp.eq.s32.totalorder %s35, 1
      %p347 = scmp.ne.s32.totalorder %s342, %s344
      %p348 = scmp.eq.s32.totalorder %s35, 0
      %p349 = por %p347, %p348
      %p350 = scmp.ne.s32.totalorder %s342, %s344
      %p351 = scmp.eq.s32.totalorder %s40, 1
      %p352 = por %p350, %p351
      %p353 = scmp.ne.s32.totalorder %s344, %s345
      %p354 = scmp.eq.s32.totalorder %s40, 0
      %p355 = por %p353, %p354
      %p356 = scmp.ne.s32.totalorder %s344, %s345
      %p357 = scmp.eq.s32.totalorder %s41, 1
      %p358 = por %p356, %p357
      %p360 = scmp.ne.s32.totalorder %s345, %s359
      %p361 = scmp.eq.s32.totalorder %s41, 0
      %p362 = por %p360, %p361
      %s364 = sadd.s32 %s363, 1
      %p367 = scmp.eq.s32.totalorder %s35, 1
      %p368 = scmp.ne.s32.totalorder %s363, %s365
      %p369 = scmp.eq.s32.totalorder %s35, 0
      %p370 = por %p368, %p369
      %p371 = scmp.ne.s32.totalorder %s363, %s365
      %p372 = scmp.eq.s32.totalorder %s40, 1
      %p373 = por %p371, %p372
      %p374 = scmp.ne.s32.totalorder %s365, %s366
      %p375 = scmp.eq.s32.totalorder %s40, 0
      %p376 = por %p374, %p375
      %p377 = scmp.ne.s32.totalorder %s365, %s366
      %p378 = scmp.eq.s32.totalorder %s41, 1
      %p379 = por %p377, %p378
      %p381 = scmp.ne.s32.totalorder %s366, %s380
      %p382 = scmp.eq.s32.totalorder %s41, 0
      %p383 = por %p381, %p382
      %s385 = sadd.s32 %s384, 1
      %p388 = scmp.eq.s32.totalorder %s35, 1
      %p389 = scmp.ne.s32.totalorder %s384, %s386
      %p390 = scmp.eq.s32.totalorder %s35, 0
      %p391 = por %p389, %p390
      %p392 = scmp.ne.s32.totalorder %s384, %s386
      %p393 = scmp.eq.s32.totalorder %s40, 1
      %p394 = por %p392, %p393
      %p395 = scmp.ne.s32.totalorder %s386, %s387
      %p396 = scmp.eq.s32.totalorder %s40, 0
      %p397 = por %p395, %p396
      %p398 = scmp.ne.s32.totalorder %s386, %s387
      %p399 = scmp.eq.s32.totalorder %s41, 1
      %p400 = por %p398, %p399
      %p402 = scmp.ne.s32.totalorder %s387, %s401
      %p403 = scmp.eq.s32.totalorder %s41, 0
      %p404 = por %p402, %p403
      %s406 = sadd.s32 %s405, 1
      %p409 = scmp.eq.s32.totalorder %s35, 1
      %p410 = scmp.ne.s32.totalorder %s405, %s407
      %p411 = scmp.eq.s32.totalorder %s35, 0
      %p412 = por %p410, %p411
      %p413 = scmp.ne.s32.totalorder %s405, %s407
      %p414 = scmp.eq.s32.totalorder %s40, 1
      %p415 = por %p413, %p414
      %p416 = scmp.ne.s32.totalorder %s407, %s408
      %p417 = scmp.eq.s32.totalorder %s40, 0
      %p418 = por %p416, %p417
      %p419 = scmp.ne.s32.totalorder %s407, %s408
      %p420 = scmp.eq.s32.totalorder %s41, 1
      %p421 = por %p419, %p420
      %p423 = scmp.ne.s32.totalorder %s408, %s422
      %p424 = scmp.eq.s32.totalorder %s41, 0
      %p425 = por %p423, %p424
      %s427 = sadd.s32 %s426, 1
      %p430 = scmp.eq.s32.totalorder %s35, 1
      %p431 = scmp.ne.s32.totalorder %s426, %s428
      %p432 = scmp.eq.s32.totalorder %s35, 0
      %p433 = por %p431, %p432
      %p434 = scmp.ne.s32.totalorder %s426, %s428
      %p435 = scmp.eq.s32.totalorder %s40, 1
      %p436 = por %p434, %p435
      %p437 = scmp.ne.s32.totalorder %s428, %s429
      %p438 = scmp.eq.s32.totalorder %s40, 0
      %p439 = por %p437, %p438
      %p440 = scmp.ne.s32.totalorder %s428, %s429
      %p441 = scmp.eq.s32.totalorder %s41, 1
      %p442 = por %p440, %p441
      %p444 = scmp.ne.s32.totalorder %s429, %s443
      %p445 = scmp.eq.s32.totalorder %s41, 0
      %p446 = por %p444, %p445
      %s448 = sadd.s32 %s447, 1
      %p451 = scmp.eq.s32.totalorder %s35, 1
      %p452 = scmp.ne.s32.totalorder %s447, %s449
      %p453 = scmp.eq.s32.totalorder %s35, 0
      %p454 = por %p452, %p453
      %p455 = scmp.ne.s32.totalorder %s447, %s449
      %p456 = scmp.eq.s32.totalorder %s40, 1
      %p457 = por %p455, %p456
      %p458 = scmp.ne.s32.totalorder %s449, %s450
      %p459 = scmp.eq.s32.totalorder %s40, 0
      %p460 = por %p458, %p459
      %p461 = scmp.ne.s32.totalorder %s449, %s450
      %p462 = scmp.eq.s32.totalorder %s41, 1
      %p463 = por %p461, %p462
      %p465 = scmp.ne.s32.totalorder %s450, %s464
      %p466 = scmp.eq.s32.totalorder %s41, 0
      %p467 = por %p465, %p466
      %s468 = ssub.s32 %s35, %s42
      %p469 = scmp.eq.s32.totalorder %s468, 0
      %s471 = sadd.s32 %s470, 1
      %s472 = scalar_select %p469, %s470, %s471
      %p475 = pneg %p469
      %p476 = scmp.eq.s32.totalorder %s35, 1
      %p477 = por %p475, %p476
      %p478 = scmp.ne.s32.totalorder %s470, %s473
      %p479 = scmp.eq.s32.totalorder %s35, 0
      %p480 = por %p478, %p479
      %p481 = scmp.ne.s32.totalorder %s470, %s473
      %p482 = scmp.eq.s32.totalorder %s40, 1
      %p483 = por %p481, %p482
      %p484 = scmp.ne.s32.totalorder %s473, %s474
      %p485 = scmp.eq.s32.totalorder %s40, 0
      %p486 = por %p484, %p485
      %p487 = scmp.ne.s32.totalorder %s473, %s474
      %p488 = scmp.eq.s32.totalorder %s41, 1
      %p489 = por %p487, %p488
      %p491 = scmp.ne.s32.totalorder %s474, %s490
      %p492 = scmp.eq.s32.totalorder %s41, 0
      %p493 = por %p491, %p492
      %p494 = scmp.le.s32.totalorder 1, %s35
      %p495 = scmp.lt.s32.totalorder %s35, 3
      %p496 = pnand %p494, %p495
      %p497 = pneg %p496
      // Predicated region
      $region9: #{_lambda_.1} parent=5 // pred_check
        _
      $region10: #{_lambda_.1} parent=5 // pred_check_branch
        %499 = sbr.rel (%p496) target = $region12
      $region11: #{_lambda_.1} parent=5 // pred_region
        %s500 = ssub.s32 %s35, 1
        // Predicated region
        $region13: #{_lambda_.1} parent=11 // pred_check
          %p501 = pneg %p82
        $region14: #{_lambda_.1} parent=11 // pred_check_branch
          %503 = sbr.rel (%p501) target = $region16
        $region15: #{_lambda_.1} parent=11 // pred_region
          %s505 = ssub.s32 128, 128
          %506 = vsyncadd [#allocation5], %s505
          %s507 = sshll.u32 [#allocation4], 4
          %s508 = int_to_ptr.vmem [resolvable:$true] %s507
          %513 = dma.hbm_to_vmem [thread:$0]  %s1, 128, %s508, [#allocation5], 64, 64, 4
        $region16: #{_lambda_.1} parent=11 // pred_fallthru
          _
        // Predicated region
        $region17: #{_lambda_.1} parent=11 // pred_check
          %p514 = pneg %p103
        $region18: #{_lambda_.1} parent=11 // pred_check_branch
          %516 = sbr.rel (%p514) target = $region20
        $region19: #{_lambda_.1} parent=11 // pred_region
          %s518 = ssub.s32 16, 16
          %519 = vsyncadd [#allocation5], %s518
          %s521 = sshll.u32 [#allocation6], 4
          %s522 = int_to_ptr.vmem [resolvable:$true] %s521
          %524 = dma.hbm_to_vmem [thread:$0]  %s2, 16, %s522, [#allocation5]
        $region20: #{_lambda_.1} parent=11 // pred_fallthru
          _
        // Predicated region
        $region21: #{_lambda_.1} parent=11 // pred_check
          %p525 = pneg %p124
        $region22: #{_lambda_.1} parent=11 // pred_check_branch
          %527 = sbr.rel (%p525) target = $region24
        $region23: #{_lambda_.1} parent=11 // pred_region
          _
        $region24: #{_lambda_.1} parent=11 // pred_fallthru
          _
        // Predicated region
        $region25: #{_lambda_.1} parent=11 // pred_check
          %p528 = pneg %p145
        $region26: #{_lambda_.1} parent=11 // pred_check_branch
          %530 = sbr.rel (%p528) target = $region28
        $region27: #{_lambda_.1} parent=11 // pred_region
          %s532 = ssub.s32 256, 256
          %533 = vsyncadd [#allocation8], %s532
          %s534 = sshll.u32 [#allocation7], 4
          %s535 = int_to_ptr.vmem [resolvable:$true] %s534
          %540 = dma.hbm_to_vmem [thread:$0]  %s4, 256, %s535, [#allocation8], 64, 64, 4
        $region28: #{_lambda_.1} parent=11 // pred_fallthru
          _
        // Predicated region
        $region29: #{_lambda_.1} parent=11 // pred_check
          %p541 = pneg %p166
        $region30: #{_lambda_.1} parent=11 // pred_check_branch
          %543 = sbr.rel (%p541) target = $region32
        $region31: #{_lambda_.1} parent=11 // pred_region
          _
        $region32: #{_lambda_.1} parent=11 // pred_fallthru
          _
        // Predicated region
        $region33: #{_lambda_.1} parent=11 // pred_check
          %p544 = pneg %p187
        $region34: #{_lambda_.1} parent=11 // pred_check_branch
          %546 = sbr.rel (%p544) target = $region36
        $region35: #{_lambda_.1} parent=11 // pred_region
          _
        $region36: #{_lambda_.1} parent=11 // pred_fallthru
          _
        // Predicated region
        $region37: #{_lambda_.1} parent=11 // pred_check
          %p547 = pneg %p208
        $region38: #{_lambda_.1} parent=11 // pred_check_branch
          %549 = sbr.rel (%p547) target = $region40
        $region39: #{_lambda_.1} parent=11 // pred_region
          %s551 = ssub.s32 1536, 1536
          %552 = vsyncadd [#allocation8], %s551
          %s553 = sshll.u32 [#allocation9], 4
          %s554 = int_to_ptr.vmem [resolvable:$true] %s553
          %559 = dma.hbm_to_vmem [thread:$0]  %s7, 1536, %s554, [#allocation8], 64, 64, 4
        $region40: #{_lambda_.1} parent=11 // pred_fallthru
          _
        // Predicated region
        $region41: #{_lambda_.1} parent=11 // pred_check
          %p560 = pneg %p229
        $region42: #{_lambda_.1} parent=11 // pred_check_branch
          %562 = sbr.rel (%p560) target = $region44
        $region43: #{_lambda_.1} parent=11 // pred_region
          _
        $region44: #{_lambda_.1} parent=11 // pred_fallthru
          _
        // Predicated region
        $region45: #{_lambda_.1} parent=11 // pred_check
          %p563 = pneg %p250
        $region46: #{_lambda_.1} parent=11 // pred_check_branch
          %565 = sbr.rel (%p563) target = $region48
        $region47: #{_lambda_.1} parent=11 // pred_region
          %s567 = ssub.s32 1024, 1024
          %568 = vsyncadd [#allocation11], %s567
          %s569 = sshll.u32 [#allocation10], 4
          %s570 = int_to_ptr.vmem [resolvable:$true] %s569
          %575 = dma.hbm_to_vmem [thread:$0]  %s9, 1024, %s570, [#allocation11], 128, 128, 8
        $region48: #{_lambda_.1} parent=11 // pred_fallthru
          _
        // Predicated region
        $region49: #{_lambda_.1} parent=11 // pred_check
          %p576 = pneg %p271
        $region50: #{_lambda_.1} parent=11 // pred_check_branch
          %578 = sbr.rel (%p576) target = $region52
        $region51: #{_lambda_.1} parent=11 // pred_region
          _
        $region52: #{_lambda_.1} parent=11 // pred_fallthru
          _
        // Predicated region
        $region53: #{_lambda_.1} parent=11 // pred_check
          %p579 = pneg %p292
        $region54: #{_lambda_.1} parent=11 // pred_check_branch
          %581 = sbr.rel (%p579) target = $region56
        $region55: #{_lambda_.1} parent=11 // pred_region
          %s583 = ssub.s32 1024, 1024
          %584 = vsyncadd [#allocation11], %s583
          %s585 = sshll.u32 [#allocation12], 4
          %s586 = int_to_ptr.vmem [resolvable:$true] %s585
          %591 = dma.hbm_to_vmem [thread:$0]  %s11, 1024, %s586, [#allocation11], 128, 128, 8
        $region56: #{_lambda_.1} parent=11 // pred_fallthru
          _
        // Predicated region
        $region57: #{_lambda_.1} parent=11 // pred_check
          %p592 = pneg %p313
        $region58: #{_lambda_.1} parent=11 // pred_check_branch
          %594 = sbr.rel (%p592) target = $region60
        $region59: #{_lambda_.1} parent=11 // pred_region
          %s596 = ssub.s32 3072, 3072
          %597 = vsyncadd [#allocation14], %s596
          %s598 = sshll.u32 [#allocation13], 4
          %s599 = int_to_ptr.vmem [resolvable:$true] %s598
          %604 = dma.hbm_to_vmem [thread:$0]  %s12, 3072, %s599, [#allocation14], 64, 64, 4
        $region60: #{_lambda_.1} parent=11 // pred_fallthru
          _
        // Predicated region
        $region61: #{_lambda_.1} parent=11 // pred_check
          %p605 = pneg %p334
        $region62: #{_lambda_.1} parent=11 // pred_check_branch
          %607 = sbr.rel (%p605) target = $region64
        $region63: #{_lambda_.1} parent=11 // pred_region
          _
        $region64: #{_lambda_.1} parent=11 // pred_fallthru
          _
        // Predicated region
        $region65: #{_lambda_.1} parent=11 // pred_check
          %p608 = pneg %p355
        $region66: #{_lambda_.1} parent=11 // pred_check_branch
          %610 = sbr.rel (%p608) target = $region68
        $region67: #{_lambda_.1} parent=11 // pred_region
          %s612 = ssub.s32 2048, 2048
          %613 = vsyncadd [#allocation14], %s612
          %s614 = sshll.u32 [#allocation15], 4
          %s615 = int_to_ptr.vmem [resolvable:$true] %s614
          %620 = dma.hbm_to_vmem [thread:$0]  %s14, 2048, %s615, [#allocation14], 128, 128, 8
        $region68: #{_lambda_.1} parent=11 // pred_fallthru
          _
        // Predicated region
        $region69: #{_lambda_.1} parent=11 // pred_check
          %p621 = pneg %p376
        $region70: #{_lambda_.1} parent=11 // pred_check_branch
          %623 = sbr.rel (%p621) target = $region72
        $region71: #{_lambda_.1} parent=11 // pred_region
          %s625 = ssub.s32 3072, 3072
          %626 = vsyncadd [#allocation17], %s625
          %s627 = sshll.u32 [#allocation16], 4
          %s628 = int_to_ptr.vmem [resolvable:$true] %s627
          %633 = dma.hbm_to_vmem [thread:$0]  %s15, 3072, %s628, [#allocation17], 64, 64, 4
        $region72: #{_lambda_.1} parent=11 // pred_fallthru
          _
        // Predicated region
        $region73: #{_lambda_.1} parent=11 // pred_check
          %p634 = pneg %p397
        $region74: #{_lambda_.1} parent=11 // pred_check_branch
          %636 = sbr.rel (%p634) target = $region76
        $region75: #{_lambda_.1} parent=11 // pred_region
          %s638 = ssub.s32 2048, 2048
          %639 = vsyncadd [#allocation17], %s638
          %s640 = sshll.u32 [#allocation18], 4
          %s641 = int_to_ptr.vmem [resolvable:$true] %s640
          %646 = dma.hbm_to_vmem [thread:$0]  %s16, 2048, %s641, [#allocation17], 128, 128, 8
        $region76: #{_lambda_.1} parent=11 // pred_fallthru
          _
        // Predicated region
        $region77: #{_lambda_.1} parent=11 // pred_check
          %p647 = pneg %p418
        $region78: #{_lambda_.1} parent=11 // pred_check_branch
          %649 = sbr.rel (%p647) target = $region80
        $region79: #{_lambda_.1} parent=11 // pred_region
          %s651 = ssub.s32 3072, 3072
          %652 = vsyncadd [#allocation20], %s651
          %s653 = sshll.u32 [#allocation19], 4
          %s654 = int_to_ptr.vmem [resolvable:$true] %s653
          %659 = dma.hbm_to_vmem [thread:$0]  %s17, 3072, %s654, [#allocation20], 64, 64, 4
        $region80: #{_lambda_.1} parent=11 // pred_fallthru
          _
        // Predicated region
        $region81: #{_lambda_.1} parent=11 // pred_check
          %p660 = pneg %p439
        $region82: #{_lambda_.1} parent=11 // pred_check_branch
          %662 = sbr.rel (%p660) target = $region84
        $region83: #{_lambda_.1} parent=11 // pred_region
          _
        $region84: #{_lambda_.1} parent=11 // pred_fallthru
          _
        // Predicated region
        $region85: #{_lambda_.1} parent=11 // pred_check
          %p663 = pneg %p460
        $region86: #{_lambda_.1} parent=11 // pred_check_branch
          %665 = sbr.rel (%p663) target = $region88
        $region87: #{_lambda_.1} parent=11 // pred_region
          %s667 = ssub.s32 4096, 4096
          %668 = vsyncadd [#allocation20], %s667
          %s669 = sshll.u32 [#allocation21], 4
          %s670 = int_to_ptr.vmem [resolvable:$true] %s669
          %675 = dma.hbm_to_vmem [thread:$0]  %s19, 4096, %s670, [#allocation20], 128, 128, 8
        $region88: #{_lambda_.1} parent=11 // pred_fallthru
          _
      $region12: #{_lambda_.1} parent=5 // pred_fallthru
        _
      %p676 = scmp.lt.s32.totalorder %s35, 2
      // Predicated region
      $region89: #{_lambda_.1} parent=5 // pred_check
        %p677 = pneg %p676
      $region90: #{_lambda_.1} parent=5 // pred_check_branch
        %679 = sbr.rel (%p677) target = $region92
      $region91: #{_lambda_.1} parent=5 // pred_region
        // Predicated region
        $region93: #{_lambda_.1} parent=91 // pred_check
          %p680 = pneg %p55
        $region94: #{_lambda_.1} parent=91 // pred_check_branch
          %682 = sbr.rel (%p680) target = $region96
        $region95: #{_lambda_.1} parent=91 // pred_region
          %s683 = sand.u32 %s45, 1
          %s684 = scalar_lea.sflag [#allocation3], %s683
          %s685 = sand.u32 %s45, 1
          %s686 = smul.addr %s685, 8
          %s687 = scalar_lea.vmem [#allocation2], %s686
          %s689 = ssub.s32 128, 128
          %690 = vsyncadd %s684, %s689
          %s691 = smul.addr %s35, 128
          %s692 = scalar_lea.hbm %s0, %s691
          %s694 = sshll.u32 %s687, 4
          %s695 = int_to_ptr.vmem [resolvable:$true] %s694
          %697 = dma.hbm_to_vmem [thread:$0]  %s692, 128, %s695, %s684
        $region96: #{_lambda_.1} parent=91 // pred_fallthru
          _
      $region92: #{_lambda_.1} parent=5 // pred_fallthru
        _
      %p698 = scmp.le.s32.totalorder 1, %s35
      %p699 = scmp.lt.s32.totalorder %s35, 3
      %p700 = pnand %p698, %p699
      %p701 = pneg %p700
      // Predicated region
      $region97: #{_lambda_.1} parent=5 // pred_check
        _
      $region98: #{_lambda_.1} parent=5 // pred_check_branch
        %703 = sbr.rel (%p700) target = $region100
      $region99: #{_lambda_.1} parent=5 // pred_region
        %s704 = ssub.s32 %s35, 1
        %s705 = sand.u32 %s48, 1
        %s706 = scalar_lea.sflag [#allocation3], %s705
        %s707 = sand.u32 %s48, 1
        %s708 = smul.addr %s707, 8
        %s709 = scalar_lea.vmem [#allocation2], %s708
        // Predicated region
        $region101: #{_lambda_.1} parent=99 // pred_check
          %p710 = pneg %p61
        $region102: #{_lambda_.1} parent=99 // pred_check_branch
          %712 = sbr.rel (%p710) target = $region104
        $region103: #{_lambda_.1} parent=99 // pred_region
          %713 = dma.done %s706, 128
        $region104: #{_lambda_.1} parent=99 // pred_fallthru
          _
        // Predicated region
        $region105: #{_lambda_.1} parent=99 // pred_check
          %p714 = pneg %p82
        $region106: #{_lambda_.1} parent=99 // pred_check_branch
          %716 = sbr.rel (%p714) target = $region108
        $region107: #{_lambda_.1} parent=99 // pred_region
          %717 = dma.done [#allocation5], 128
        $region108: #{_lambda_.1} parent=99 // pred_fallthru
          _
        // Predicated region
        $region109: #{_lambda_.1} parent=99 // pred_check
          %p718 = pneg %p103
        $region110: #{_lambda_.1} parent=99 // pred_check_branch
          %720 = sbr.rel (%p718) target = $region112
        $region111: #{_lambda_.1} parent=99 // pred_region
          %721 = dma.done [#allocation5], 16
        $region112: #{_lambda_.1} parent=99 // pred_fallthru
          _
        // Predicated region
        $region113: #{_lambda_.1} parent=99 // pred_check
          %p722 = pneg %p145
        $region114: #{_lambda_.1} parent=99 // pred_check_branch
          %724 = sbr.rel (%p722) target = $region116
        $region115: #{_lambda_.1} parent=99 // pred_region
          %725 = dma.done [#allocation8], 256
        $region116: #{_lambda_.1} parent=99 // pred_fallthru
          _
        // Predicated region
        $region117: #{_lambda_.1} parent=99 // pred_check
          %p726 = pneg %p208
        $region118: #{_lambda_.1} parent=99 // pred_check_branch
          %728 = sbr.rel (%p726) target = $region120
        $region119: #{_lambda_.1} parent=99 // pred_region
          %729 = dma.done [#allocation8], 1536
        $region120: #{_lambda_.1} parent=99 // pred_fallthru
          _
        // Predicated region
        $region121: #{_lambda_.1} parent=99 // pred_check
          %p730 = pneg %p250
        $region122: #{_lambda_.1} parent=99 // pred_check_branch
          %732 = sbr.rel (%p730) target = $region124
        $region123: #{_lambda_.1} parent=99 // pred_region
          %733 = dma.done [#allocation11], 1024
        $region124: #{_lambda_.1} parent=99 // pred_fallthru
          _
        // Predicated region
        $region125: #{_lambda_.1} parent=99 // pred_check
          %p734 = pneg %p292
        $region126: #{_lambda_.1} parent=99 // pred_check_branch
          %736 = sbr.rel (%p734) target = $region128
        $region127: #{_lambda_.1} parent=99 // pred_region
          %737 = dma.done [#allocation11], 1024
        $region128: #{_lambda_.1} parent=99 // pred_fallthru
          _
        // Predicated region
        $region129: #{_lambda_.1} parent=99 // pred_check
          %p738 = pneg %p313
        $region130: #{_lambda_.1} parent=99 // pred_check_branch
          %740 = sbr.rel (%p738) target = $region132
        $region131: #{_lambda_.1} parent=99 // pred_region
          %741 = dma.done [#allocation14], 3072
        $region132: #{_lambda_.1} parent=99 // pred_fallthru
          _
        // Predicated region
        $region133: #{_lambda_.1} parent=99 // pred_check
          %p742 = pneg %p355
        $region134: #{_lambda_.1} parent=99 // pred_check_branch
          %744 = sbr.rel (%p742) target = $region136
        $region135: #{_lambda_.1} parent=99 // pred_region
          %745 = dma.done [#allocation14], 2048
        $region136: #{_lambda_.1} parent=99 // pred_fallthru
          _
        // Predicated region
        $region137: #{_lambda_.1} parent=99 // pred_check
          %p746 = pneg %p376
        $region138: #{_lambda_.1} parent=99 // pred_check_branch
          %748 = sbr.rel (%p746) target = $region140
        $region139: #{_lambda_.1} parent=99 // pred_region
          %749 = dma.done [#allocation17], 3072
        $region140: #{_lambda_.1} parent=99 // pred_fallthru
          _
        // Predicated region
        $region141: #{_lambda_.1} parent=99 // pred_check
          %p750 = pneg %p397
        $region142: #{_lambda_.1} parent=99 // pred_check_branch
          %752 = sbr.rel (%p750) target = $region144
        $region143: #{_lambda_.1} parent=99 // pred_region
          %753 = dma.done [#allocation17], 2048
        $region144: #{_lambda_.1} parent=99 // pred_fallthru
          _
        // Predicated region
        $region145: #{_lambda_.1} parent=99 // pred_check
          %p754 = pneg %p418
        $region146: #{_lambda_.1} parent=99 // pred_check_branch
          %756 = sbr.rel (%p754) target = $region148
        $region147: #{_lambda_.1} parent=99 // pred_region
          %757 = dma.done [#allocation20], 3072
        $region148: #{_lambda_.1} parent=99 // pred_fallthru
          _
        // Predicated region
        $region149: #{_lambda_.1} parent=99 // pred_check
          %p758 = pneg %p460
        $region150: #{_lambda_.1} parent=99 // pred_check_branch
          %760 = sbr.rel (%p758) target = $region152
        $region151: #{_lambda_.1} parent=99 // pred_region
          %761 = dma.done [#allocation20], 4096
        $region152: #{_lambda_.1} parent=99 // pred_fallthru
          _
        %s762 = sand.u32 %s48, 1
        %s763 = scalar_lea.sflag [#allocation3], %s762
        %s764 = sand.u32 %s48, 1
        %s765 = smul.addr %s764, 8
        %s766 = scalar_lea.vmem [#allocation2], %s765
        %p767 = pneg %p61
        %p768 = pneg %p58
        %p769 = pneg %p82
        %p770 = pneg %p79
        %p771 = pneg %p103
        %p772 = pneg %p100
        %p773 = pneg %p124
        %p774 = pneg %p121
        %p775 = pneg %p145
        %p776 = pneg %p142
        %p777 = pneg %p166
        %p778 = pneg %p163
        %p779 = pneg %p187
        %p780 = pneg %p184
        %p781 = pneg %p208
        %p782 = pneg %p205
        %p783 = pneg %p229
        %p784 = pneg %p226
        %p785 = pneg %p250
        %p786 = pneg %p247
        %p787 = pneg %p271
        %p788 = pneg %p268
        %p789 = pneg %p292
        %p790 = pneg %p289
        %p791 = pneg %p313
        %p792 = pneg %p310
        %p793 = pneg %p334
        %p794 = pneg %p331
        %p795 = pneg %p355
        %p796 = pneg %p352
        %p797 = pneg %p376
        %p798 = pneg %p373
        %p799 = pneg %p397
        %p800 = pneg %p394
        %p801 = pneg %p418
        %p802 = pneg %p415
        %p803 = pneg %p439
        %p804 = pneg %p436
        %p805 = pneg %p460
        %p806 = pneg %p457
        %p807 = pneg %p486
        %p808 = pneg %p483
        %s809 = smul.u32 32, %s40
        %p810 = scmp.lt.s32.totalorder %s809, 63
        %s811 = scalar_select %p810, %s809, 63
        %s812 = smul.addr %s811, 8
        %s813 = scalar_lea.vmem %s20, %s812
        %s814 = smul.u32 32, %s40
        %p815 = scmp.lt.s32.totalorder %s814, 63
        %s816 = scalar_select %p815, %s814, 63
        %s817 = smul.addr %s816, 8
        %s818 = scalar_lea.vmem %s20, %s817
        %s819 = smul.u32 32, %s40
        %v821 = vld [vmem:[%s709] sm:$0xff]
        %v822 = vpack.c.bf16 %v821, %v821
        %v823 = vld [vmem:[#allocation4] sm:$0xf]
        %v824 = vld [vmem:[#allocation4 + $0x4] sm:$0xf]
        %v825 = vld [vmem:[#allocation6] sm:$0x1]
        %v827 = vlaneseq
        %v828 = vshrl.u32 %v827, 7
        %v829 = vsub.s32 0, %v828
        %v830 = vrot.slane %v825, %v829
        %v834 = vunpack.c.l.b16 %v823
        %v835 = vunpack.c.l.b16 %v824
        %v836 = vpack.c.b16 %v835, %v834
        %vm838 = vcmask 130048
        %v840 = vsel %vm838, %v822, 0
        %842 = vmatprep.subr.bf16.mxu0 0
        %843 = vmatpush1.bf16.msra.mxu0 %v836
        %844 = vmatprep.subr.bf16.mxu0 0
        %845 = vmatpush1.bf16.msra.mxu0 0
        %846 = vmatprep.subr.bf16.mxu0 0
        %847 = vmatpush1.bf16.msra.mxu0 0
        %848 = vmatprep.subr.bf16.mxu0 0
        %849 = vmatpush1.bf16.msra.mxu0 0
        %850 = vmatprep.subr.bf16.mxu0 0
        %851 = vmatpush1.bf16.msra.mxu0 0
        %852 = vmatprep.subr.bf16.mxu0 0
        %853 = vmatpush1.bf16.msra.mxu0 0
        %854 = vmatprep.subr.bf16.mxu0 0
        %855 = vmatpush1.bf16.msra.mxu0 0
        %856 = vmatprep.subr.bf16.mxu0 0
        %857 = vmatpush1.bf16.msra.mxu0 0
        %858 = vmatprep.subr.bf16.mxu0 0
        %859 = vmatpush1.bf16.msra.mxu0 0
        %860 = vmatprep.subr.bf16.mxu0 0
        %861 = vmatpush1.bf16.msra.mxu0 0
        %862 = vmatprep.subr.bf16.mxu0 0
        %863 = vmatpush1.bf16.msra.mxu0 0
        %864 = vmatprep.subr.bf16.mxu0 0
        %865 = vmatpush1.bf16.msra.mxu0 0
        %866 = vmatprep.subr.bf16.mxu0 0
        %867 = vmatpush1.bf16.msra.mxu0 0
        %868 = vmatprep.subr.bf16.mxu0 0
        %869 = vmatpush1.bf16.msra.mxu0 0
        %870 = vmatprep.subr.bf16.mxu0 0
        %871 = vmatpush1.bf16.msra.mxu0 0
        %872 = vmatprep.subr.bf16.mxu0 0
        %873 = vmatpush1.bf16.msra.mxu0 0
        %874 = vmatprep.mubr.bf16.mxu0 0
        %875 = vmatmul.mubr.bf16.gmra.mrb[0].mxu0 %v840
        %v876 = vpop.f32.mrb[0].mxu0
        %v877 = vadd.f32 %v830, %v876
        %v878 = vpop.f32.mrb[0].mxu0
        %v879 = vpop.f32.mrb[0].mxu0
        %v880 = vpop.f32.mrb[0].mxu0
        %881 = vdwg.mxu0
        %v882 = vxor.u32 %v877, 2147483648
        %v883 = vmul.f32 %v882, 1.442695
        %v884 = vpow.pop %v883
        %v885 = vadd.f32 %v884, 1.0
        %v886 = vrcp.pop %v885
        %v887 = vmul.f32 1.0, %v886
        %v888 = vmul.f32 %v877, %v887
        %v889 = vpack.c.bf16 %v888, %v888
        %v890 = vld [vmem:[%s3] sm:$0xf]
        %v891 = vld [vmem:[%s3 + $0x4] sm:$0xf]
        %v892 = vld [vmem:[%s3 + $0x8] sm:$0xf]
        %v893 = vld [vmem:[%s3 + $0xc] sm:$0xf]
        %v898 = vunpack.c.l.b16 %v890
        %v899 = vunpack.c.l.b16 %v891
        %v900 = vunpack.c.l.b16 %v892
        %v901 = vunpack.c.l.b16 %v893
        %v902 = vpack.c.b16 %v899, %v898
        %v903 = vpack.c.b16 %v901, %v900
        %vm904 = vcmask 64512
        %v906 = vsel %vm904, %v902, 0
        %v909 = vsel %vm904, %v903, 0
        %vm911 = vcmask 1043456
        %v913 = vsel %vm911, %v889, 0
        %915 = vmatprep.subr.bf16.mxu0 0
        %916 = vmatpush1.bf16.msra.mxu0 %v913
        %917 = vmatprep.subr.bf16.mxu0 0
        %918 = vmatpush1.bf16.msra.mxu0 0
        %919 = vmatprep.subr.bf16.mxu0 0
        %920 = vmatpush1.bf16.msra.mxu0 0
        %921 = vmatprep.subr.bf16.mxu0 0
        %922 = vmatpush1.bf16.msra.mxu0 0
        %923 = vmatprep.subr.bf16.mxu0 0
        %924 = vmatpush1.bf16.msra.mxu0 0
        %925 = vmatprep.subr.bf16.mxu0 0
        %926 = vmatpush1.bf16.msra.mxu0 0
        %927 = vmatprep.subr.bf16.mxu0 0
        %928 = vmatpush1.bf16.msra.mxu0 0
        %929 = vmatprep.subr.bf16.mxu0 0
        %930 = vmatpush1.bf16.msra.mxu0 0
        %931 = vmatprep.subr.bf16.mxu0 0
        %932 = vmatpush1.bf16.msra.mxu0 0
        %933 = vmatprep.subr.bf16.mxu0 0
        %934 = vmatpush1.bf16.msra.mxu0 0
        %935 = vmatprep.subr.bf16.mxu0 0
        %936 = vmatpush1.bf16.msra.mxu0 0
        %937 = vmatprep.subr.bf16.mxu0 0
        %938 = vmatpush1.bf16.msra.mxu0 0
        %939 = vmatprep.subr.bf16.mxu0 0
        %940 = vmatpush1.bf16.msra.mxu0 0
        %941 = vmatprep.subr.bf16.mxu0 0
        %942 = vmatpush1.bf16.msra.mxu0 0
        %943 = vmatprep.subr.bf16.mxu0 0
        %944 = vmatpush1.bf16.msra.mxu0 0
        %945 = vmatprep.subr.bf16.mxu0 0
        %946 = vmatpush1.bf16.msra.mxu0 0
        %947 = vmatprep.mubr.bf16.mxu0 0
        %948 = vmatmul.mubr.bf16.gmra.mrb[0].mxu0 %v906
        %v949 = vpop.f32.mrb[0].mxu0
        %v950 = vadd.f32 0.0, %v949
        %v951 = vpop.f32.mrb[0].mxu0
        %v952 = vpop.f32.mrb[0].mxu0
        %v953 = vadd.f32 0.0, %v952
        %v954 = vpop.f32.mrb[0].mxu0
        %955 = vmatprep.mubr.bf16.mxu0 0
        %956 = vmatmul.mubr.bf16.gmra.mrb[0].mxu0 %v909
        %v957 = vpop.f32.mrb[0].mxu0
        %v958 = vadd.f32 0.0, %v957
        %v959 = vpop.f32.mrb[0].mxu0
        %v960 = vpop.f32.mrb[0].mxu0
        %v961 = vadd.f32 0.0, %v960
        %v962 = vpop.f32.mrb[0].mxu0
        %963 = vdwg.mxu0
        %v964 = vpack.c.bf16 %v953, %v950
        %v965 = vpack.c.bf16 %v961, %v958
        %968 = vrot.lane.b32.xlu0 %v964, 32
        %v969 = vpop.permute.xlu0 %968
        %970 = vrot.lane.b32.xlu0 %v965, 32
        %v971 = vpop.permute.xlu0 %970
        %972 = vrot.lane.b32.xlu0 %v964, 64
        %v973 = vpop.permute.xlu0 %972
        %974 = vrot.lane.b32.xlu0 %v965, 64
        %v975 = vpop.permute.xlu0 %974
        %976 = vrot.lane.b32.xlu0 %v964, 96
        %v977 = vpop.permute.xlu0 %976
        %978 = vrot.lane.b32.xlu0 %v965, 96
        %v979 = vpop.permute.xlu0 %978
        %vm980 = vcmask 261120
        %v983 = vsel %vm980, %v964, %v969
        %v986 = vsel %vm980, %v965, %v971
        %vm987 = vcmask 523264
        %v989 = vsel %vm987, %v983, %v973
        %v991 = vsel %vm987, %v986, %v975
        %vm992 = vcmask 785408
        %v994 = vsel %vm992, %v989, %v977
        %v997 = vsel %vm992, %v991, %v979
        %v999 = vld [vmem:[#allocation7] sm:$0xf]
        %v1000 = vld [vmem:[#allocation7 + $0x4] sm:$0xf]
        %v1001 = vld [vmem:[#allocation7 + $0x8] sm:$0xf]
        %v1002 = vld [vmem:[#allocation7 + $0xc] sm:$0xf]
        %v1007 = vunpack.c.l.b16 %v999
        %v1008 = vunpack.c.l.b16 %v1000
        %v1009 = vunpack.c.l.b16 %v1001
        %v1010 = vunpack.c.l.b16 %v1002
        %v1011 = vpack.c.b16 %v1008, %v1007
        %v1012 = vpack.c.b16 %v1010, %v1009
        %v1015 = vmul.bf16 %v994, %v1011
        %v1016 = vmul.bf16 %v997, %v1012
        %v1017 = vld [vmem:[%s6] sm:$0xff]
        %v1018 = vld [vmem:[%s6 + $0x8] sm:$0xff]
        %v1019 = vld [vmem:[%s6 + $0x10] sm:$0xff]
        %v1020 = vld [vmem:[%s6 + $0x18] sm:$0xff]
        %v1021 = vld [vmem:[%s5] sm:$0xf]
        %v1022 = vld [vmem:[%s5 + $0x4] sm:$0xf]
        %v1023 = vld [vmem:[%s5 + $0x8] sm:$0xf]
        %v1024 = vld [vmem:[%s5 + $0xc] sm:$0xf]
        %v1025 = vld [vmem:[%s5 + $0x10] sm:$0xf]
        %v1026 = vld [vmem:[%s5 + $0x14] sm:$0xf]
        %v1027 = vld [vmem:[%s5 + $0x18] sm:$0xf]
        %v1028 = vld [vmem:[%s5 + $0x1c] sm:$0xf]
        %v1029 = vld [vmem:[%s5 + $0x20] sm:$0xf]
        %v1030 = vld [vmem:[%s5 + $0x24] sm:$0xf]
        %v1031 = vld [vmem:[%s5 + $0x28] sm:$0xf]
        %v1032 = vld [vmem:[%s5 + $0x2c] sm:$0xf]
        %v1033 = vld [vmem:[%s5 + $0x30] sm:$0xf]
        %v1034 = vld [vmem:[%s5 + $0x34] sm:$0xf]
        %v1035 = vld [vmem:[%s5 + $0x38] sm:$0xf]
        %v1036 = vld [vmem:[%s5 + $0x3c] sm:$0xf]
        %v1053 = vunpack.c.l.b16 %v1021
        %v1054 = vunpack.c.l.b16 %v1022
        %v1055 = vunpack.c.l.b16 %v1023
        %v1056 = vunpack.c.l.b16 %v1024
        %v1057 = vunpack.c.l.b16 %v1025
        %v1058 = vunpack.c.l.b16 %v1026
        %v1059 = vunpack.c.l.b16 %v1027
        %v1060 = vunpack.c.l.b16 %v1028
        %v1061 = vunpack.c.l.b16 %v1029
        %v1062 = vunpack.c.l.b16 %v1030
        %v1063 = vunpack.c.l.b16 %v1031
        %v1064 = vunpack.c.l.b16 %v1032
        %v1065 = vunpack.c.l.b16 %v1033
        %v1066 = vunpack.c.l.b16 %v1034
        %v1067 = vunpack.c.l.b16 %v1035
        %v1068 = vunpack.c.l.b16 %v1036
        %v1069 = vpack.c.b16 %v1054, %v1053
        %v1070 = vpack.c.b16 %v1056, %v1055
        %v1071 = vpack.c.b16 %v1058, %v1057
        %v1072 = vpack.c.b16 %v1060, %v1059
        %v1073 = vpack.c.b16 %v1062, %v1061
        %v1074 = vpack.c.b16 %v1064, %v1063
        %v1075 = vpack.c.b16 %v1066, %v1065
        %v1076 = vpack.c.b16 %v1068, %v1067
        %1085 = vmatprep.subr.bf16.mxu0 0
        %1086 = vmatpush1.bf16.msra.mxu0 %v1069
        %1087 = vmatprep.subr.bf16.mxu0 0
        %1088 = vmatpush1.bf16.msra.mxu0 %v1070
        %1089 = vmatprep.subr.bf16.mxu0 0
        %1090 = vmatpush1.bf16.msra.mxu0 %v1071
        %1091 = vmatprep.subr.bf16.mxu0 0
        %1092 = vmatpush1.bf16.msra.mxu0 %v1072
        %1093 = vmatprep.subr.bf16.mxu0 0
        %1094 = vmatpush1.bf16.msra.mxu0 %v1073
        %1095 = vmatprep.subr.bf16.mxu0 0
        %1096 = vmatpush1.bf16.msra.mxu0 %v1074
        %1097 = vmatprep.subr.bf16.mxu0 0
        %1098 = vmatpush1.bf16.msra.mxu0 %v1075
        %1099 = vmatprep.subr.bf16.mxu0 0
        %1100 = vmatpush1.bf16.msra.mxu0 %v1076
        %1101 = vmatprep.subr.bf16.mxu0 0
        %1102 = vmatpush1.bf16.msra.mxu0 0
        %1103 = vmatprep.subr.bf16.mxu0 0
        %1104 = vmatpush1.bf16.msra.mxu0 0
        %1105 = vmatprep.subr.bf16.mxu0 0
        %1106 = vmatpush1.bf16.msra.mxu0 0
        %1107 = vmatprep.subr.bf16.mxu0 0
        %1108 = vmatpush1.bf16.msra.mxu0 0
        %1109 = vmatprep.subr.bf16.mxu0 0
        %1110 = vmatpush1.bf16.msra.mxu0 0
        %1111 = vmatprep.subr.bf16.mxu0 0
        %1112 = vmatpush1.bf16.msra.mxu0 0
        %1113 = vmatprep.subr.bf16.mxu0 0
        %1114 = vmatpush1.bf16.msra.mxu0 0
        %1115 = vmatprep.subr.bf16.mxu0 0
        %1116 = vmatpush1.bf16.msra.mxu0 0
        %1117 = vmatprep.mubr.bf16.mxu0 0
        %1118 = vmatmul.mubr.bf16.gmra.mrb[0].mxu0 %v1015
        %v1119 = vpop.f32.mrb[0].mxu0
        %v1120 = vadd.f32 0.0, %v1119
        %v1121 = vpop.f32.mrb[0].mxu0
        %v1122 = vpop.f32.mrb[0].mxu0
        %v1123 = vadd.f32 0.0, %v1122
        %v1124 = vpop.f32.mrb[0].mxu0
        %1125 = vmatprep.mubr.bf16.mxu0 0
        %1126 = vmatmul.mubr.bf16.gmra.mrb[0].mxu0 %v1016
        %v1127 = vpop.f32.mrb[0].mxu0
        %v1128 = vadd.f32 0.0, %v1127
        %v1129 = vpop.f32.mrb[0].mxu0
        %v1130 = vpop.f32.mrb[0].mxu0
        %v1131 = vadd.f32 0.0, %v1130
        %v1132 = vpop.f32.mrb[0].mxu0
        %1133 = vdwg.mxu0
        %v1134 = vadd.f32 %v1017, %v1120
        %v1135 = vadd.f32 %v1018, %v1123
        %v1136 = vadd.f32 %v1019, %v1128
        %v1137 = vadd.f32 %v1020, %v1131
        %v1138 = vxor.u32 %v1134, 2147483648
        %v1139 = vxor.u32 %v1135, 2147483648
        %v1140 = vxor.u32 %v1136, 2147483648
        %v1141 = vxor.u32 %v1137, 2147483648
        %v1142 = vmul.f32 %v1138, 1.442695
        %v1143 = vpow.pop %v1142
        %v1144 = vmul.f32 %v1139, 1.442695
        %v1145 = vpow.pop %v1144
        %v1146 = vmul.f32 %v1140, 1.442695
        %v1147 = vpow.pop %v1146
        %v1148 = vmul.f32 %v1141, 1.442695
        %v1149 = vpow.pop %v1148
        %v1150 = vadd.f32 %v1143, 1.0
        %v1151 = vadd.f32 %v1145, 1.0
        %v1152 = vadd.f32 %v1147, 1.0
        %v1153 = vadd.f32 %v1149, 1.0
        %v1154 = vrcp.pop %v1150
        %v1155 = vmul.f32 1.0, %v1154
        %v1156 = vrcp.pop %v1151
        %v1157 = vmul.f32 1.0, %v1156
        %v1158 = vrcp.pop %v1152
        %v1159 = vmul.f32 1.0, %v1158
        %v1160 = vrcp.pop %v1153
        %v1161 = vmul.f32 1.0, %v1160
        %v1162 = vmul.f32 %v1134, %v1155
        %v1163 = vmul.f32 %v1135, %v1157
        %v1164 = vmul.f32 %v1136, %v1159
        %v1165 = vmul.f32 %v1137, %v1161
        %v1166 = vpack.c.bf16 %v1163, %v1162
        %v1167 = vpack.c.bf16 %v1165, %v1164
        %v1168 = vld [vmem:[%s8] sm:$0xf]
        %v1169 = vld [vmem:[%s8 + $0x4] sm:$0xf]
        %v1170 = vld [vmem:[%s8 + $0x8] sm:$0xf]
        %v1171 = vld [vmem:[%s8 + $0xc] sm:$0xf]
        %v1172 = vld [vmem:[%s8 + $0x10] sm:$0xf]
        %v1173 = vld [vmem:[%s8 + $0x14] sm:$0xf]
        %v1174 = vld [vmem:[%s8 + $0x18] sm:$0xf]
        %v1175 = vld [vmem:[%s8 + $0x1c] sm:$0xf]
        %v1184 = vunpack.c.l.b16 %v1168
        %v1185 = vunpack.c.l.b16 %v1169
        %v1186 = vunpack.c.l.b16 %v1170
        %v1187 = vunpack.c.l.b16 %v1171
        %v1188 = vunpack.c.l.b16 %v1172
        %v1189 = vunpack.c.l.b16 %v1173
        %v1190 = vunpack.c.l.b16 %v1174
        %v1191 = vunpack.c.l.b16 %v1175
        %v1192 = vpack.c.b16 %v1185, %v1184
        %v1193 = vpack.c.b16 %v1187, %v1186
        %v1194 = vpack.c.b16 %v1189, %v1188
        %v1195 = vpack.c.b16 %v1191, %v1190
        %v1197 = vsel %vm980, %v1192, 0
        %v1200 = vsel %vm980, %v1193, 0
        %v1203 = vsel %vm980, %v1194, 0
        %v1206 = vsel %vm980, %v1195, 0
        %1208 = vmatprep.subr.bf16.mxu0 0
        %1209 = vmatpush1.bf16.msra.mxu0 %v1166
        %1210 = vmatprep.subr.bf16.mxu0 0
        %1211 = vmatpush1.bf16.msra.mxu0 %v1167
        %1212 = vmatprep.subr.bf16.mxu0 0
        %1213 = vmatpush1.bf16.msra.mxu0 0
        %1214 = vmatprep.subr.bf16.mxu0 0
        %1215 = vmatpush1.bf16.msra.mxu0 0
        %1216 = vmatprep.subr.bf16.mxu0 0
        %1217 = vmatpush1.bf16.msra.mxu0 0
        %1218 = vmatprep.subr.bf16.mxu0 0
        %1219 = vmatpush1.bf16.msra.mxu0 0
        %1220 = vmatprep.subr.bf16.mxu0 0
        %1221 = vmatpush1.bf16.msra.mxu0 0
        %1222 = vmatprep.subr.bf16.mxu0 0
        %1223 = vmatpush1.bf16.msra.mxu0 0
        %1224 = vmatprep.subr.bf16.mxu0 0
        %1225 = vmatpush1.bf16.msra.mxu0 0
        %1226 = vmatprep.subr.bf16.mxu0 0
        %1227 = vmatpush1.bf16.msra.mxu0 0
        %1228 = vmatprep.subr.bf16.mxu0 0
        %1229 = vmatpush1.bf16.msra.mxu0 0
        %1230 = vmatprep.subr.bf16.mxu0 0
        %1231 = vmatpush1.bf16.msra.mxu0 0
        %1232 = vmatprep.subr.bf16.mxu0 0
        %1233 = vmatpush1.bf16.msra.mxu0 0
        %1234 = vmatprep.subr.bf16.mxu0 0
        %1235 = vmatpush1.bf16.msra.mxu0 0
        %1236 = vmatprep.subr.bf16.mxu0 0
        %1237 = vmatpush1.bf16.msra.mxu0 0
        %1238 = vmatprep.subr.bf16.mxu0 0
        %1239 = vmatpush1.bf16.msra.mxu0 0
        %1240 = vmatprep.mubr.bf16.mxu0 0
        %1241 = vmatmul.mubr.bf16.gmra.mrb[0].mxu0 %v1197
        %v1242 = vpop.f32.mrb[0].mxu0
        %v1243 = vadd.f32 0.0, %v1242
        %v1244 = vpop.f32.mrb[0].mxu0
        %v1245 = vpop.f32.mrb[0].mxu0
        %v1246 = vadd.f32 0.0, %v1245
        %v1247 = vpop.f32.mrb[0].mxu0
        %1248 = vmatprep.mubr.bf16.mxu0 0
        %1249 = vmatmul.mubr.bf16.gmra.mrb[0].mxu0 %v1200
        %v1250 = vpop.f32.mrb[0].mxu0
        %v1251 = vadd.f32 0.0, %v1250
        %v1252 = vpop.f32.mrb[0].mxu0
        %v1253 = vpop.f32.mrb[0].mxu0
        %v1254 = vadd.f32 0.0, %v1253
        %v1255 = vpop.f32.mrb[0].mxu0
        %1256 = vmatprep.mubr.bf16.mxu0 0
        %1257 = vmatmul.mubr.bf16.gmra.mrb[0].mxu0 %v1203
        %v1258 = vpop.f32.mrb[0].mxu0
        %v1259 = vadd.f32 0.0, %v1258
        %v1260 = vpop.f32.mrb[0].mxu0
        %v1261 = vpop.f32.mrb[0].mxu0
        %v1262 = vadd.f32 0.0, %v1261
        %v1263 = vpop.f32.mrb[0].mxu0
        %1264 = vmatprep.mubr.bf16.mxu0 0
        %1265 = vmatmul.mubr.bf16.gmra.mrb[0].mxu0 %v1206
        %v1266 = vpop.f32.mrb[0].mxu0
        %v1267 = vadd.f32 0.0, %v1266
        %v1268 = vpop.f32.mrb[0].mxu0
        %v1269 = vpop.f32.mrb[0].mxu0
        %v1270 = vadd.f32 0.0, %v1269
        %v1271 = vpop.f32.mrb[0].mxu0
        %1272 = vdwg.mxu0
        %v1273 = vpack.c.bf16 %v1246, %v1243
        %v1274 = vpack.c.bf16 %v1254, %v1251
        %v1275 = vpack.c.bf16 %v1262, %v1259
        %v1276 = vpack.c.bf16 %v1270, %v1267
        %s1277 = scalar_lea.vmem %s8, 32
        %v1278 = vld [vmem:[%s1277] sm:$0xf]
        %v1279 = vld [vmem:[%s1277 + $0x4] sm:$0xf]
        %v1280 = vld [vmem:[%s1277 + $0x8] sm:$0xf]
        %v1281 = vld [vmem:[%s1277 + $0xc] sm:$0xf]
        %v1282 = vld [vmem:[%s1277 + $0x10] sm:$0xf]
        %v1283 = vld [vmem:[%s1277 + $0x14] sm:$0xf]
        %v1284 = vld [vmem:[%s1277 + $0x18] sm:$0xf]
        %v1285 = vld [vmem:[%s1277 + $0x1c] sm:$0xf]
        %v1294 = vunpack.c.l.b16 %v1278
        %v1295 = vunpack.c.l.b16 %v1279
        %v1296 = vunpack.c.l.b16 %v1280
        %v1297 = vunpack.c.l.b16 %v1281
        %v1298 = vunpack.c.l.b16 %v1282
        %v1299 = vunpack.c.l.b16 %v1283
        %v1300 = vunpack.c.l.b16 %v1284
        %v1301 = vunpack.c.l.b16 %v1285
        %v1302 = vpack.c.b16 %v1295, %v1294
        %v1303 = vpack.c.b16 %v1297, %v1296
        %v1304 = vpack.c.b16 %v1299, %v1298
        %v1305 = vpack.c.b16 %v1301, %v1300
        %v1307 = vsel %vm980, %v1302, 0
        %v1310 = vsel %vm980, %v1303, 0
        %v1313 = vsel %vm980, %v1304, 0
        %v1316 = vsel %vm980, %v1305, 0
        %1318 = vmatprep.subr.bf16.mxu0 0
        %1319 = vmatpush1.bf16.msra.mxu0 %v1166
        %1320 = vmatprep.subr.bf16.mxu0 0
        %1321 = vmatpush1.bf16.msra.mxu0 %v1167
        %1322 = vmatprep.subr.bf16.mxu0 0
        %1323 = vmatpush1.bf16.msra.mxu0 0
        %1324 = vmatprep.subr.bf16.mxu0 0
        %1325 = vmatpush1.bf16.msra.mxu0 0
        %1326 = vmatprep.subr.bf16.mxu0 0
        %1327 = vmatpush1.bf16.msra.mxu0 0
        %1328 = vmatprep.subr.bf16.mxu0 0
        %1329 = vmatpush1.bf16.msra.mxu0 0
        %1330 = vmatprep.subr.bf16.mxu0 0
        %1331 = vmatpush1.bf16.msra.mxu0 0
        %1332 = vmatprep.subr.bf16.mxu0 0
        %1333 = vmatpush1.bf16.msra.mxu0 0
        %1334 = vmatprep.subr.bf16.mxu0 0
        %1335 = vmatpush1.bf16.msra.mxu0 0
        %1336 = vmatprep.subr.bf16.mxu0 0
        %1337 = vmatpush1.bf16.msra.mxu0 0
        %1338 = vmatprep.subr.bf16.mxu0 0
        %1339 = vmatpush1.bf16.msra.mxu0 0
        %1340 = vmatprep.subr.bf16.mxu0 0
        %1341 = vmatpush1.bf16.msra.mxu0 0
        %1342 = vmatprep.subr.bf16.mxu0 0
        %1343 = vmatpush1.bf16.msra.mxu0 0
        %1344 = vmatprep.subr.bf16.mxu0 0
        %1345 = vmatpush1.bf16.msra.mxu0 0
        %1346 = vmatprep.subr.bf16.mxu0 0
        %1347 = vmatpush1.bf16.msra.mxu0 0
        %1348 = vmatprep.subr.bf16.mxu0 0
        %1349 = vmatpush1.bf16.msra.mxu0 0
        %1350 = vmatprep.mubr.bf16.mxu0 0
        %1351 = vmatmul.mubr.bf16.gmra.mrb[0].mxu0 %v1307
        %v1352 = vpop.f32.mrb[0].mxu0
        %v1353 = vadd.f32 0.0, %v1352
        %v1354 = vpop.f32.mrb[0].mxu0
        %v1355 = vpop.f32.mrb[0].mxu0
        %v1356 = vadd.f32 0.0, %v1355
        %v1357 = vpop.f32.mrb[0].mxu0
        %1358 = vmatprep.mubr.bf16.mxu0 0
        %1359 = vmatmul.mubr.bf16.gmra.mrb[0].mxu0 %v1310
        %v1360 = vpop.f32.mrb[0].mxu0
        %v1361 = vadd.f32 0.0, %v1360
        %v1362 = vpop.f32.mrb[0].mxu0
        %v1363 = vpop.f32.mrb[0].mxu0
        %v1364 = vadd.f32 0.0, %v1363
        %v1365 = vpop.f32.mrb[0].mxu0
        %1366 = vmatprep.mubr.bf16.mxu0 0
        %1367 = vmatmul.mubr.bf16.gmra.mrb[0].mxu0 %v1313
        %v1368 = vpop.f32.mrb[0].mxu0
        %v1369 = vadd.f32 0.0, %v1368
        %v1370 = vpop.f32.mrb[0].mxu0
        %v1371 = vpop.f32.mrb[0].mxu0
        %v1372 = vadd.f32 0.0, %v1371
        %v1373 = vpop.f32.mrb[0].mxu0
        %1374 = vmatprep.mubr.bf16.mxu0 0
        %1375 = vmatmul.mubr.bf16.gmra.mrb[0].mxu0 %v1316
        %v1376 = vpop.f32.mrb[0].mxu0
        %v1377 = vadd.f32 0.0, %v1376
        %v1378 = vpop.f32.mrb[0].mxu0
        %v1379 = vpop.f32.mrb[0].mxu0
        %v1380 = vadd.f32 0.0, %v1379
        %v1381 = vpop.f32.mrb[0].mxu0
        %1382 = vdwg.mxu0
        %v1383 = vpack.c.bf16 %v1356, %v1353
        %v1384 = vpack.c.bf16 %v1364, %v1361
        %v1385 = vpack.c.bf16 %v1372, %v1369
        %v1386 = vpack.c.bf16 %v1380, %v1377
        %s1387 = scalar_lea.vmem %s8, 64
        %v1388 = vld [vmem:[%s1387] sm:$0xf]
        %v1389 = vld [vmem:[%s1387 + $0x4] sm:$0xf]
        %v1390 = vld [vmem:[%s1387 + $0x8] sm:$0xf]
        %v1391 = vld [vmem:[%s1387 + $0xc] sm:$0xf]
        %v1392 = vld [vmem:[%s1387 + $0x10] sm:$0xf]
        %v1393 = vld [vmem:[%s1387 + $0x14] sm:$0xf]
        %v1394 = vld [vmem:[%s1387 + $0x18] sm:$0xf]
        %v1395 = vld [vmem:[%s1387 + $0x1c] sm:$0xf]
        %v1404 = vunpack.c.l.b16 %v1388
        %v1405 = vunpack.c.l.b16 %v1389
        %v1406 = vunpack.c.l.b16 %v1390
        %v1407 = vunpack.c.l.b16 %v1391
        %v1408 = vunpack.c.l.b16 %v1392
        %v1409 = vunpack.c.l.b16 %v1393
        %v1410 = vunpack.c.l.b16 %v1394
        %v1411 = vunpack.c.l.b16 %v1395
        %v1412 = vpack.c.b16 %v1405, %v1404
        %v1413 = vpack.c.b16 %v1407, %v1406
        %v1414 = vpack.c.b16 %v1409, %v1408
        %v1415 = vpack.c.b16 %v1411, %v1410
        %v1417 = vsel %vm980, %v1412, 0
        %v1420 = vsel %vm980, %v1413, 0
        %v1423 = vsel %vm980, %v1414, 0
        %v1426 = vsel %vm980, %v1415, 0
        %1428 = vmatprep.subr.bf16.mxu0 0
        %1429 = vmatpush1.bf16.msra.mxu0 %v1166
        %1430 = vmatprep.subr.bf16.mxu0 0
        %1431 = vmatpush1.bf16.msra.mxu0 %v1167
        %1432 = vmatprep.subr.bf16.mxu0 0
        %1433 = vmatpush1.bf16.msra.mxu0 0
        %1434 = vmatprep.subr.bf16.mxu0 0
        %1435 = vmatpush1.bf16.msra.mxu0 0
        %1436 = vmatprep.subr.bf16.mxu0 0
        %1437 = vmatpush1.bf16.msra.mxu0 0
        %1438 = vmatprep.subr.bf16.mxu0 0
        %1439 = vmatpush1.bf16.msra.mxu0 0
        %1440 = vmatprep.subr.bf16.mxu0 0
        %1441 = vmatpush1.bf16.msra.mxu0 0
        %1442 = vmatprep.subr.bf16.mxu0 0
        %1443 = vmatpush1.bf16.msra.mxu0 0
        %1444 = vmatprep.subr.bf16.mxu0 0
        %1445 = vmatpush1.bf16.msra.mxu0 0
        %1446 = vmatprep.subr.bf16.mxu0 0
        %1447 = vmatpush1.bf16.msra.mxu0 0
        %1448 = vmatprep.subr.bf16.mxu0 0
        %1449 = vmatpush1.bf16.msra.mxu0 0
        %1450 = vmatprep.subr.bf16.mxu0 0
        %1451 = vmatpush1.bf16.msra.mxu0 0
        %1452 = vmatprep.subr.bf16.mxu0 0
        %1453 = vmatpush1.bf16.msra.mxu0 0
        %1454 = vmatprep.subr.bf16.mxu0 0
        %1455 = vmatpush1.bf16.msra.mxu0 0
        %1456 = vmatprep.subr.bf16.mxu0 0
        %1457 = vmatpush1.bf16.msra.mxu0 0
        %1458 = vmatprep.subr.bf16.mxu0 0
        %1459 = vmatpush1.bf16.msra.mxu0 0
        %1460 = vmatprep.mubr.bf16.mxu0 0
        %1461 = vmatmul.mubr.bf16.gmra.mrb[0].mxu0 %v1417
        %v1462 = vpop.f32.mrb[0].mxu0
        %v1463 = vadd.f32 0.0, %v1462
        %v1464 = vpop.f32.mrb[0].mxu0
        %v1465 = vpop.f32.mrb[0].mxu0
        %v1466 = vadd.f32 0.0, %v1465
        %v1467 = vpop.f32.mrb[0].mxu0
        %1468 = vmatprep.mubr.bf16.mxu0 0
        %1469 = vmatmul.mubr.bf16.gmra.mrb[0].mxu0 %v1420
        %v1470 = vpop.f32.mrb[0].mxu0
        %v1471 = vadd.f32 0.0, %v1470
        %v1472 = vpop.f32.mrb[0].mxu0
        %v1473 = vpop.f32.mrb[0].mxu0
        %v1474 = vadd.f32 0.0, %v1473
        %v1475 = vpop.f32.mrb[0].mxu0
        %1476 = vmatprep.mubr.bf16.mxu0 0
        %1477 = vmatmul.mubr.bf16.gmra.mrb[0].mxu0 %v1423
        %v1478 = vpop.f32.mrb[0].mxu0
        %v1479 = vadd.f32 0.0, %v1478
        %v1480 = vpop.f32.mrb[0].mxu0
        %v1481 = vpop.f32.mrb[0].mxu0
        %v1482 = vadd.f32 0.0, %v1481
        %v1483 = vpop.f32.mrb[0].mxu0
        %1484 = vmatprep.mubr.bf16.mxu0 0
        %1485 = vmatmul.mubr.bf16.gmra.mrb[0].mxu0 %v1426
        %v1486 = vpop.f32.mrb[0].mxu0
        %v1487 = vadd.f32 0.0, %v1486
        %v1488 = vpop.f32.mrb[0].mxu0
        %v1489 = vpop.f32.mrb[0].mxu0
        %v1490 = vadd.f32 0.0, %v1489
        %v1491 = vpop.f32.mrb[0].mxu0
        %1492 = vdwg.mxu0
        %v1493 = vpack.c.bf16 %v1466, %v1463
        %v1494 = vpack.c.bf16 %v1474, %v1471
        %v1495 = vpack.c.bf16 %v1482, %v1479
        %v1496 = vpack.c.bf16 %v1490, %v1487
        %1501 = vrot.lane.b32.xlu0 %v1383, 64
        %v1502 = vpop.permute.xlu0 %1501
        %1503 = vrot.lane.b32.xlu0 %v1384, 64
        %v1504 = vpop.permute.xlu0 %1503
        %1505 = vrot.lane.b32.xlu0 %v1385, 64
        %v1506 = vpop.permute.xlu0 %1505
        %1507 = vrot.lane.b32.xlu0 %v1386, 64
        %v1508 = vpop.permute.xlu0 %1507
        %v1511 = vsel %vm987, %v1273, %v1502
        %v1515 = vsel %vm987, %v1274, %v1504
        %v1519 = vsel %vm987, %v1275, %v1506
        %v1523 = vsel %vm987, %v1276, %v1508
        %v1525 = vld [vmem:[#allocation10] sm:$0xff]
        %v1526 = vld [vmem:[#allocation10 + $0x8] sm:$0xff]
        %v1527 = vld [vmem:[#allocation10 + $0x10] sm:$0xff]
        %v1528 = vld [vmem:[#allocation10 + $0x18] sm:$0xff]
        %v1529 = vld [vmem:[#allocation10 + $0x20] sm:$0xff]
        %v1530 = vld [vmem:[#allocation10 + $0x28] sm:$0xff]
        %v1531 = vld [vmem:[#allocation10 + $0x30] sm:$0xff]
        %v1532 = vld [vmem:[#allocation10 + $0x38] sm:$0xff]
        %v1533 = vld [vmem:[#allocation9] sm:$0xf]
        %v1534 = vld [vmem:[#allocation9 + $0x4] sm:$0xf]
        %v1535 = vld [vmem:[#allocation9 + $0x8] sm:$0xf]
        %v1536 = vld [vmem:[#allocation9 + $0xc] sm:$0xf]
        %v1537 = vld [vmem:[#allocation9 + $0x10] sm:$0xf]
        %v1538 = vld [vmem:[#allocation9 + $0x14] sm:$0xf]
        %v1539 = vld [vmem:[#allocation9 + $0x18] sm:$0xf]
        %v1540 = vld [vmem:[#allocation9 + $0x1c] sm:$0xf]
        %v1541 = vld [vmem:[#allocation9 + $0x20] sm:$0xf]
        %v1542 = vld [vmem:[#allocation9 + $0x24] sm:$0xf]
        %v1543 = vld [vmem:[#allocation9 + $0x28] sm:$0xf]
        %v1544 = vld [vmem:[#allocation9 + $0x2c] sm:$0xf]
        %v1545 = vld [vmem:[#allocation9 + $0x30] sm:$0xf]
        %v1546 = vld [vmem:[#allocation9 + $0x34] sm:$0xf]
        %v1547 = vld [vmem:[#allocation9 + $0x38] sm:$0xf]
        %v1548 = vld [vmem:[#allocation9 + $0x3c] sm:$0xf]
        %v1549 = vld [vmem:[#allocation9 + $0x40] sm:$0xf]
        %v1550 = vld [vmem:[#allocation9 + $0x44] sm:$0xf]
        %v1551 = vld [vmem:[#allocation9 + $0x48] sm:$0xf]
        %v1552 = vld [vmem:[#allocation9 + $0x4c] sm:$0xf]
        %v1553 = vld [vmem:[#allocation9 + $0x50] sm:$0xf]
        %v1554 = vld [vmem:[#allocation9 + $0x54] sm:$0xf]
        %v1555 = vld [vmem:[#allocation9 + $0x58] sm:$0xf]
        %v1556 = vld [vmem:[#allocation9 + $0x5c] sm:$0xf]
        %v1581 = vunpack.c.l.b16 %v1533
        %v1582 = vunpack.c.l.b16 %v1534
        %v1583 = vunpack.c.l.b16 %v1535
        %v1584 = vunpack.c.l.b16 %v1536
        %v1585 = vunpack.c.l.b16 %v1537
        %v1586 = vunpack.c.l.b16 %v1538
        %v1587 = vunpack.c.l.b16 %v1539
        %v1588 = vunpack.c.l.b16 %v1540
        %v1589 = vunpack.c.l.b16 %v1541
        %v1590 = vunpack.c.l.b16 %v1542
        %v1591 = vunpack.c.l.b16 %v1543
        %v1592 = vunpack.c.l.b16 %v1544
        %v1593 = vunpack.c.l.b16 %v1545
        %v1594 = vunpack.c.l.b16 %v1546
        %v1595 = vunpack.c.l.b16 %v1547
        %v1596 = vunpack.c.l.b16 %v1548
        %v1597 = vunpack.c.l.b16 %v1549
        %v1598 = vunpack.c.l.b16 %v1550
        %v1599 = vunpack.c.l.b16 %v1551
        %v1600 = vunpack.c.l.b16 %v1552
        %v1601 = vunpack.c.l.b16 %v1553
        %v1602 = vunpack.c.l.b16 %v1554
        %v1603 = vunpack.c.l.b16 %v1555
        %v1604 = vunpack.c.l.b16 %v1556
        %v1605 = vpack.c.b16 %v1582, %v1581
        %v1606 = vpack.c.b16 %v1584, %v1583
        %v1607 = vpack.c.b16 %v1586, %v1585
        %v1608 = vpack.c.b16 %v1588, %v1587
        %v1609 = vpack.c.b16 %v1590, %v1589
        %v1610 = vpack.c.b16 %v1592, %v1591
        %v1611 = vpack.c.b16 %v1594, %v1593
        %v1612 = vpack.c.b16 %v1596, %v1595
        %v1613 = vpack.c.b16 %v1598, %v1597
        %v1614 = vpack.c.b16 %v1600, %v1599
        %v1615 = vpack.c.b16 %v1602, %v1601
        %v1616 = vpack.c.b16 %v1604, %v1603
        %v1630 = vsel %vm987, %v1493, 0
        %v1633 = vsel %vm987, %v1494, 0
        %v1636 = vsel %vm987, %v1495, 0
        %v1639 = vsel %vm987, %v1496, 0
        %1641 = vmatprep.subr.bf16.mxu0 0
        %1642 = vmatpush1.bf16.msra.mxu0 %v1605
        %1643 = vmatprep.subr.bf16.mxu0 0
        %1644 = vmatpush1.bf16.msra.mxu0 %v1606
        %1645 = vmatprep.subr.bf16.mxu0 0
        %1646 = vmatpush1.bf16.msra.mxu0 %v1607
        %1647 = vmatprep.subr.bf16.mxu0 0
        %1648 = vmatpush1.bf16.msra.mxu0 %v1608
        %1649 = vmatprep.subr.bf16.mxu0 0
        %1650 = vmatpush1.bf16.msra.mxu0 %v1609
        %1651 = vmatprep.subr.bf16.mxu0 0
        %1652 = vmatpush1.bf16.msra.mxu0 %v1610
        %1653 = vmatprep.subr.bf16.mxu0 0
        %1654 = vmatpush1.bf16.msra.mxu0 %v1611
        %1655 = vmatprep.subr.bf16.mxu0 0
        %1656 = vmatpush1.bf16.msra.mxu0 %v1612
        %1657 = vmatprep.subr.bf16.mxu0 0
        %1658 = vmatpush1.bf16.msra.mxu0 %v1613
        %1659 = vmatprep.subr.bf16.mxu0 0
        %1660 = vmatpush1.bf16.msra.mxu0 %v1614
        %1661 = vmatprep.subr.bf16.mxu0 0
        %1662 = vmatpush1.bf16.msra.mxu0 %v1615
        %1663 = vmatprep.subr.bf16.mxu0 0
        %1664 = vmatpush1.bf16.msra.mxu0 %v1616
        %1665 = vmatprep.subr.bf16.mxu0 0
        %1666 = vmatpush1.bf16.msra.mxu0 0
        %1667 = vmatprep.subr.bf16.mxu0 0
        %1668 = vmatpush1.bf16.msra.mxu0 0
        %1669 = vmatprep.subr.bf16.mxu0 0
        %1670 = vmatpush1.bf16.msra.mxu0 0
        %1671 = vmatprep.subr.bf16.mxu0 0
        %1672 = vmatpush1.bf16.msra.mxu0 0
        %1673 = vmatprep.mubr.bf16.mxu0 %v1630
        %1674 = vmatmul.mubr.bf16.gmra.mrb[0].mxu0 %v1511
        %v1675 = vpop.f32.mrb[0].mxu0
        %v1676 = vadd.f32 0.0, %v1675
        %v1677 = vpop.f32.mrb[0].mxu0
        %v1678 = vpop.f32.mrb[0].mxu0
        %v1679 = vadd.f32 0.0, %v1678
        %v1680 = vpop.f32.mrb[0].mxu0
        %1681 = vmatprep.mubr.bf16.mxu0 %v1633
        %1682 = vmatmul.mubr.bf16.gmra.mrb[0].mxu0 %v1515
        %v1683 = vpop.f32.mrb[0].mxu0
        %v1684 = vadd.f32 0.0, %v1683
        %v1685 = vpop.f32.mrb[0].mxu0
        %v1686 = vpop.f32.mrb[0].mxu0
        %v1687 = vadd.f32 0.0, %v1686
        %v1688 = vpop.f32.mrb[0].mxu0
        %1689 = vmatprep.mubr.bf16.mxu0 %v1636
        %1690 = vmatmul.mubr.bf16.gmra.mrb[0].mxu0 %v1519
        %v1691 = vpop.f32.mrb[0].mxu0
        %v1692 = vadd.f32 0.0, %v1691
        %v1693 = vpop.f32.mrb[0].mxu0
        %v1694 = vpop.f32.mrb[0].mxu0
        %v1695 = vadd.f32 0.0, %v1694
        %v1696 = vpop.f32.mrb[0].mxu0
        %1697 = vmatprep.mubr.bf16.mxu0 %v1639
        %1698 = vmatmul.mubr.bf16.gmra.mrb[0].mxu0 %v1523
        %v1699 = vpop.f32.mrb[0].mxu0
        %v1700 = vadd.f32 0.0, %v1699
        %v1701 = vpop.f32.mrb[0].mxu0
        %v1702 = vpop.f32.mrb[0].mxu0
        %v1703 = vadd.f32 0.0, %v1702
        %v1704 = vpop.f32.mrb[0].mxu0
        %1705 = vdwg.mxu0
        %v1706 = vadd.f32 %v1525, %v1676
        %v1707 = vadd.f32 %v1526, %v1679
        %v1708 = vadd.f32 %v1527, %v1684
        %v1709 = vadd.f32 %v1528, %v1687
        %v1710 = vadd.f32 %v1529, %v1692
        %v1711 = vadd.f32 %v1530, %v1695
        %v1712 = vadd.f32 %v1531, %v1700
        %v1713 = vadd.f32 %v1532, %v1703
        %v1714 = vxor.u32 %v1706, 2147483648
        %v1715 = vxor.u32 %v1707, 2147483648
        %v1716 = vxor.u32 %v1708, 2147483648
        %v1717 = vxor.u32 %v1709, 2147483648
        %v1718 = vxor.u32 %v1710, 2147483648
        %v1719 = vxor.u32 %v1711, 2147483648
        %v1720 = vxor.u32 %v1712, 2147483648
        %v1721 = vxor.u32 %v1713, 2147483648
        %v1722 = vmul.f32 %v1714, 1.442695
        %v1723 = vpow.pop %v1722
        %v1724 = vmul.f32 %v1715, 1.442695
        %v1725 = vpow.pop %v1724
        %v1726 = vmul.f32 %v1716, 1.442695
        %v1727 = vpow.pop %v1726
        %v1728 = vmul.f32 %v1717, 1.442695
        %v1729 = vpow.pop %v1728
        %v1730 = vmul.f32 %v1718, 1.442695
        %v1731 = vpow.pop %v1730
        %v1732 = vmul.f32 %v1719, 1.442695
        %v1733 = vpow.pop %v1732
        %v1734 = vmul.f32 %v1720, 1.442695
        %v1735 = vpow.pop %v1734
        %v1736 = vmul.f32 %v1721, 1.442695
        %v1737 = vpow.pop %v1736
        %v1738 = vadd.f32 %v1723, 1.0
        %v1739 = vadd.f32 %v1725, 1.0
        %v1740 = vadd.f32 %v1727, 1.0
        %v1741 = vadd.f32 %v1729, 1.0
        %v1742 = vadd.f32 %v1731, 1.0
        %v1743 = vadd.f32 %v1733, 1.0
        %v1744 = vadd.f32 %v1735, 1.0
        %v1745 = vadd.f32 %v1737, 1.0
        %v1746 = vrcp.pop %v1738
        %v1747 = vmul.f32 1.0, %v1746
        %v1748 = vrcp.pop %v1739
        %v1749 = vmul.f32 1.0, %v1748
        %v1750 = vrcp.pop %v1740
        %v1751 = vmul.f32 1.0, %v1750
        %v1752 = vrcp.pop %v1741
        %v1753 = vmul.f32 1.0, %v1752
        %v1754 = vrcp.pop %v1742
        %v1755 = vmul.f32 1.0, %v1754
        %v1756 = vrcp.pop %v1743
        %v1757 = vmul.f32 1.0, %v1756
        %v1758 = vrcp.pop %v1744
        %v1759 = vmul.f32 1.0, %v1758
        %v1760 = vrcp.pop %v1745
        %v1761 = vmul.f32 1.0, %v1760
        %v1762 = vmul.f32 %v1706, %v1747
        %v1763 = vmul.f32 %v1707, %v1749
        %v1764 = vmul.f32 %v1708, %v1751
        %v1765 = vmul.f32 %v1709, %v1753
        %v1766 = vmul.f32 %v1710, %v1755
        %v1767 = vmul.f32 %v1711, %v1757
        %v1768 = vmul.f32 %v1712, %v1759
        %v1769 = vmul.f32 %v1713, %v1761
        %vm1778 = vcmask 1040384
        %v1779 = vrot.slane %v1762, 7
        %v1780 = vrot.slane %v1763, 7
        %v1781 = vsel %vm1778, %v1779, %v1780
        %v1782 = vrot.slane %v1764, 7
        %v1783 = vsel %vm1778, %v1780, %v1782
        %v1784 = vrot.slane %v1765, 7
        %v1785 = vsel %vm1778, %v1782, %v1784
        %v1786 = vrot.slane %v1766, 7
        %v1787 = vsel %vm1778, %v1784, %v1786
        %v1788 = vrot.slane %v1767, 7
        %v1789 = vsel %vm1778, %v1786, %v1788
        %v1790 = vrot.slane %v1768, 7
        %v1791 = vsel %vm1778, %v1788, %v1790
        %v1792 = vrot.slane %v1769, 7
        %v1793 = vsel %vm1778, %v1790, %v1792
        %v1802 = vsel %vm1778, 0.0, %v1779
        %vm1803 = vcmask 1046528
        %v1804 = vrot.slane %v1762, 1
        %v1805 = vrot.slane %v1763, 1
        %v1806 = vsel %vm1803, %v1804, %v1805
        %v1807 = vrot.slane %v1764, 1
        %v1808 = vsel %vm1803, %v1805, %v1807
        %v1809 = vrot.slane %v1765, 1
        %v1810 = vsel %vm1803, %v1807, %v1809
        %v1811 = vrot.slane %v1766, 1
        %v1812 = vsel %vm1803, %v1809, %v1811
        %v1813 = vrot.slane %v1767, 1
        %v1814 = vsel %vm1803, %v1811, %v1813
        %v1815 = vrot.slane %v1768, 1
        %v1816 = vsel %vm1803, %v1813, %v1815
        %v1817 = vrot.slane %v1769, 1
        %v1818 = vsel %vm1803, %v1815, %v1817
        %v1827 = vsel %vm1803, %v1817, 0.0
        %v1828 = vlaneseq
        %v1829 = vshrl.u32 %v1828, 7
        %v1830 = vadd.s32 %v1829, 8
        %v1831 = vadd.s32 %v1829, 16
        %v1832 = vadd.s32 %v1829, 24
        %v1833 = vadd.s32 %v1829, 32
        %v1834 = vadd.s32 %v1829, 40
        %v1835 = vadd.s32 %v1829, 48
        %v1836 = vadd.s32 %v1829, 56
        %vm1837 = vcmp.lt.s32.totalorder %v1829, 0
        %v1838 = vsub.s32 0, %v1829
        %v1839 = vsel %vm1837, %v1838, %v1829
        %v1840 = vshrl.u32 %v1839, 3
        %v1841 = vand.u32 %v1839, 7
        %v1842 = vsub.s32 0, %v1841
        %v1843 = vsel %vm1837, %v1842, %v1841
        %vm1844 = vcmp.lt.s32.totalorder %v1830, 0
        %v1845 = vsub.s32 0, %v1830
        %v1846 = vsel %vm1844, %v1845, %v1830
        %v1847 = vshrl.u32 %v1846, 3
        %v1848 = vand.u32 %v1846, 7
        %v1849 = vsub.s32 0, %v1848
        %v1850 = vsel %vm1844, %v1849, %v1848
        %vm1851 = vcmp.lt.s32.totalorder %v1831, 0
        %v1852 = vsub.s32 0, %v1831
        %v1853 = vsel %vm1851, %v1852, %v1831
        %v1854 = vshrl.u32 %v1853, 3
        %v1855 = vand.u32 %v1853, 7
        %v1856 = vsub.s32 0, %v1855
        %v1857 = vsel %vm1851, %v1856, %v1855
        %vm1858 = vcmp.lt.s32.totalorder %v1832, 0
        %v1859 = vsub.s32 0, %v1832
        %v1860 = vsel %vm1858, %v1859, %v1832
        %v1861 = vshrl.u32 %v1860, 3
        %v1862 = vand.u32 %v1860, 7
        %v1863 = vsub.s32 0, %v1862
        %v1864 = vsel %vm1858, %v1863, %v1862
        %vm1865 = vcmp.lt.s32.totalorder %v1833, 0
        %v1866 = vsub.s32 0, %v1833
        %v1867 = vsel %vm1865, %v1866, %v1833
        %v1868 = vshrl.u32 %v1867, 3
        %v1869 = vand.u32 %v1867, 7
        %v1870 = vsub.s32 0, %v1869
        %v1871 = vsel %vm1865, %v1870, %v1869
        %vm1872 = vcmp.lt.s32.totalorder %v1834, 0
        %v1873 = vsub.s32 0, %v1834
        %v1874 = vsel %vm1872, %v1873, %v1834
        %v1875 = vshrl.u32 %v1874, 3
        %v1876 = vand.u32 %v1874, 7
        %v1877 = vsub.s32 0, %v1876
        %v1878 = vsel %vm1872, %v1877, %v1876
        %vm1879 = vcmp.lt.s32.totalorder %v1835, 0
        %v1880 = vsub.s32 0, %v1835
        %v1881 = vsel %vm1879, %v1880, %v1835
        %v1882 = vshrl.u32 %v1881, 3
        %v1883 = vand.u32 %v1881, 7
        %v1884 = vsub.s32 0, %v1883
        %v1885 = vsel %vm1879, %v1884, %v1883
        %vm1886 = vcmp.lt.s32.totalorder %v1836, 0
        %v1887 = vsub.s32 0, %v1836
        %v1888 = vsel %vm1886, %v1887, %v1836
        %v1889 = vshrl.u32 %v1888, 3
        %v1890 = vand.u32 %v1888, 7
        %v1891 = vsub.s32 0, %v1890
        %v1892 = vsel %vm1886, %v1891, %v1890
        %vm1893 = vcmp.ne.s32.totalorder %v1843, 0
        %vm1894 = vcmp.ne.s32.totalorder %v1850, 0
        %vm1895 = vcmp.ne.s32.totalorder %v1857, 0
        %vm1896 = vcmp.ne.s32.totalorder %v1864, 0
        %vm1897 = vcmp.ne.s32.totalorder %v1871, 0
        %vm1898 = vcmp.ne.s32.totalorder %v1878, 0
        %vm1899 = vcmp.ne.s32.totalorder %v1885, 0
        %vm1900 = vcmp.ne.s32.totalorder %v1892, 0
        %vm1901 = vcmp.lt.s32.totalorder %v1843, 0
        %vm1902 = vcmp.lt.s32.totalorder %v1850, 0
        %vm1903 = vcmp.lt.s32.totalorder %v1857, 0
        %vm1904 = vcmp.lt.s32.totalorder %v1864, 0
        %vm1905 = vcmp.lt.s32.totalorder %v1871, 0
        %vm1906 = vcmp.lt.s32.totalorder %v1878, 0
        %vm1907 = vcmp.lt.s32.totalorder %v1885, 0
        %vm1908 = vcmp.lt.s32.totalorder %v1892, 0
        %vm1909 = vmand %vm1901, %vm1893
        %vm1910 = vmand %vm1902, %vm1894
        %vm1911 = vmand %vm1903, %vm1895
        %vm1912 = vmand %vm1904, %vm1896
        %vm1913 = vmand %vm1905, %vm1897
        %vm1914 = vmand %vm1906, %vm1898
        %vm1915 = vmand %vm1907, %vm1899
        %vm1916 = vmand %vm1908, %vm1900
        %v1917 = vadd.s32 %v1843, 8
        %v1918 = vadd.s32 %v1850, 8
        %v1919 = vadd.s32 %v1857, 8
        %v1920 = vadd.s32 %v1864, 8
        %v1921 = vadd.s32 %v1871, 8
        %v1922 = vadd.s32 %v1878, 8
        %v1923 = vadd.s32 %v1885, 8
        %v1924 = vadd.s32 %v1892, 8
        %v1925 = vsel %vm1909, %v1917, %v1843
        %v1926 = vsel %vm1910, %v1918, %v1850
        %v1927 = vsel %vm1911, %v1919, %v1857
        %v1928 = vsel %vm1912, %v1920, %v1864
        %v1929 = vsel %vm1913, %v1921, %v1871
        %v1930 = vsel %vm1914, %v1922, %v1878
        %v1931 = vsel %vm1915, %v1923, %v1885
        %v1932 = vsel %vm1916, %v1924, %v1892
        %vm1933 = vcmp.eq.s32.totalorder %v1925, 0
        %vm1934 = vcmp.eq.s32.totalorder %v1926, 0
        %vm1935 = vcmp.eq.s32.totalorder %v1927, 0
        %vm1936 = vcmp.eq.s32.totalorder %v1928, 0
        %vm1937 = vcmp.eq.s32.totalorder %v1929, 0
        %vm1938 = vcmp.eq.s32.totalorder %v1930, 0
        %vm1939 = vcmp.eq.s32.totalorder %v1931, 0
        %vm1940 = vcmp.eq.s32.totalorder %v1932, 0
        %v1941 = vsel %vm1933, 1, 0
        %v1942 = vsel %vm1934, 1, 0
        %v1943 = vsel %vm1935, 1, 0
        %v1944 = vsel %vm1936, 1, 0
        %v1945 = vsel %vm1937, 1, 0
        %v1946 = vsel %vm1938, 1, 0
        %v1947 = vsel %vm1939, 1, 0
        %v1948 = vsel %vm1940, 1, 0
        %vm1949 = vcmp.eq.s32.totalorder %v1941, 1
        %vm1950 = vcmp.eq.s32.totalorder %v1942, 1
        %vm1951 = vcmp.eq.s32.totalorder %v1943, 1
        %vm1952 = vcmp.eq.s32.totalorder %v1944, 1
        %vm1953 = vcmp.eq.s32.totalorder %v1945, 1
        %vm1954 = vcmp.eq.s32.totalorder %v1946, 1
        %vm1955 = vcmp.eq.s32.totalorder %v1947, 1
        %vm1956 = vcmp.eq.s32.totalorder %v1948, 1
        %v1957 = vsel %vm1949, 0.0, %v1802
        %v1958 = vsel %vm1950, 0.0, %v1781
        %v1959 = vsel %vm1951, 0.0, %v1783
        %v1960 = vsel %vm1952, 0.0, %v1785
        %v1961 = vsel %vm1953, 0.0, %v1787
        %v1962 = vsel %vm1954, 0.0, %v1789
        %v1963 = vsel %vm1955, 0.0, %v1791
        %v1964 = vsel %vm1956, 0.0, %v1793
        %vm1965 = vcmp.eq.s32.totalorder %v1925, 7
        %vm1966 = vcmp.eq.s32.totalorder %v1926, 7
        %vm1967 = vcmp.eq.s32.totalorder %v1927, 7
        %vm1968 = vcmp.eq.s32.totalorder %v1928, 7
        %vm1969 = vcmp.eq.s32.totalorder %v1929, 7
        %vm1970 = vcmp.eq.s32.totalorder %v1930, 7
        %vm1971 = vcmp.eq.s32.totalorder %v1931, 7
        %vm1972 = vcmp.eq.s32.totalorder %v1932, 7
        %v1973 = vsel %vm1965, 1, 0
        %v1974 = vsel %vm1966, 1, 0
        %v1975 = vsel %vm1967, 1, 0
        %v1976 = vsel %vm1968, 1, 0
        %v1977 = vsel %vm1969, 1, 0
        %v1978 = vsel %vm1970, 1, 0
        %v1979 = vsel %vm1971, 1, 0
        %v1980 = vsel %vm1972, 1, 0
        %vm1981 = vcmp.eq.s32.totalorder %v1973, 1
        %vm1982 = vcmp.eq.s32.totalorder %v1974, 1
        %vm1983 = vcmp.eq.s32.totalorder %v1975, 1
        %vm1984 = vcmp.eq.s32.totalorder %v1976, 1
        %vm1985 = vcmp.eq.s32.totalorder %v1977, 1
        %vm1986 = vcmp.eq.s32.totalorder %v1978, 1
        %vm1987 = vcmp.eq.s32.totalorder %v1979, 1
        %vm1988 = vcmp.eq.s32.totalorder %v1980, 1
        %v1989 = vsel %vm1981, 0.0, %v1806
        %v1990 = vsel %vm1982, 0.0, %v1808
        %v1991 = vsel %vm1983, 0.0, %v1810
        %v1992 = vsel %vm1984, 0.0, %v1812
        %v1993 = vsel %vm1985, 0.0, %v1814
        %v1994 = vsel %vm1986, 0.0, %v1816
        %v1995 = vsel %vm1987, 0.0, %v1818
        %v1996 = vsel %vm1988, 0.0, %v1827
        %v1997 = vpack.c.bf16 %v1958, %v1957
        %v1998 = vpack.c.bf16 %v1763, %v1762
        %v1999 = vpack.c.bf16 %v1990, %v1989
        %v2000 = vpack.c.bf16 %v1960, %v1959
        %v2001 = vpack.c.bf16 %v1765, %v1764
        %v2002 = vpack.c.bf16 %v1992, %v1991
        %v2003 = vpack.c.bf16 %v1962, %v1961
        %v2004 = vpack.c.bf16 %v1767, %v1766
        %v2005 = vpack.c.bf16 %v1994, %v1993
        %v2006 = vpack.c.bf16 %v1964, %v1963
        %v2007 = vpack.c.bf16 %v1769, %v1768
        %v2008 = vpack.c.bf16 %v1996, %v1995
        %v2009 = vld [vmem:[#allocation12] sm:$0xff]
        %v2010 = vld [vmem:[#allocation12 + $0x8] sm:$0xff]
        %v2011 = vld [vmem:[#allocation12 + $0x10] sm:$0xff]
        %v2012 = vld [vmem:[#allocation12 + $0x18] sm:$0xff]
        %v2013 = vld [vmem:[#allocation12 + $0x20] sm:$0xff]
        %v2014 = vld [vmem:[#allocation12 + $0x28] sm:$0xff]
        %v2015 = vld [vmem:[#allocation12 + $0x30] sm:$0xff]
        %v2016 = vld [vmem:[#allocation12 + $0x38] sm:$0xff]
        %v2017 = vld [vmem:[%s10] sm:$0xf]
        %v2018 = vld [vmem:[%s10 + $0x4] sm:$0xf]
        %v2019 = vld [vmem:[%s10 + $0x8] sm:$0xf]
        %v2020 = vld [vmem:[%s10 + $0xc] sm:$0xf]
        %v2021 = vld [vmem:[%s10 + $0x10] sm:$0xf]
        %v2022 = vld [vmem:[%s10 + $0x14] sm:$0xf]
        %v2023 = vld [vmem:[%s10 + $0x18] sm:$0xf]
        %v2024 = vld [vmem:[%s10 + $0x1c] sm:$0xf]
        %v2025 = vld [vmem:[%s10 + $0x20] sm:$0xf]
        %v2026 = vld [vmem:[%s10 + $0x24] sm:$0xf]
        %v2027 = vld [vmem:[%s10 + $0x28] sm:$0xf]
        %v2028 = vld [vmem:[%s10 + $0x2c] sm:$0xf]
        %v2029 = vld [vmem:[%s10 + $0x30] sm:$0xf]
        %v2030 = vld [vmem:[%s10 + $0x34] sm:$0xf]
        %v2031 = vld [vmem:[%s10 + $0x38] sm:$0xf]
        %v2032 = vld [vmem:[%s10 + $0x3c] sm:$0xf]
        %v2033 = vld [vmem:[%s10 + $0x40] sm:$0xf]
        %v2034 = vld [vmem:[%s10 + $0x44] sm:$0xf]
        %v2035 = vld [vmem:[%s10 + $0x48] sm:$0xf]
        %v2036 = vld [vmem:[%s10 + $0x4c] sm:$0xf]
        %v2037 = vld [vmem:[%s10 + $0x50] sm:$0xf]
        %v2038 = vld [vmem:[%s10 + $0x54] sm:$0xf]
        %v2039 = vld [vmem:[%s10 + $0x58] sm:$0xf]
        %v2040 = vld [vmem:[%s10 + $0x5c] sm:$0xf]
        %v2041 = vld [vmem:[%s10 + $0x60] sm:$0xf]
        %v2042 = vld [vmem:[%s10 + $0x64] sm:$0xf]
        %v2043 = vld [vmem:[%s10 + $0x68] sm:$0xf]
        %v2044 = vld [vmem:[%s10 + $0x6c] sm:$0xf]
        %v2045 = vld [vmem:[%s10 + $0x70] sm:$0xf]
        %v2046 = vld [vmem:[%s10 + $0x74] sm:$0xf]
        %v2047 = vld [vmem:[%s10 + $0x78] sm:$0xf]
        %v2048 = vld [vmem:[%s10 + $0x7c] sm:$0xf]
        %v2049 = vld [vmem:[%s10 + $0x80] sm:$0xf]
        %v2050 = vld [vmem:[%s10 + $0x84] sm:$0xf]
        %v2051 = vld [vmem:[%s10 + $0x88] sm:$0xf]
        %v2052 = vld [vmem:[%s10 + $0x8c] sm:$0xf]
        %v2053 = vld [vmem:[%s10 + $0x90] sm:$0xf]
        %v2054 = vld [vmem:[%s10 + $0x94] sm:$0xf]
        %v2055 = vld [vmem:[%s10 + $0x98] sm:$0xf]
        %v2056 = vld [vmem:[%s10 + $0x9c] sm:$0xf]
        %v2057 = vld [vmem:[%s10 + $0xa0] sm:$0xf]
        %v2058 = vld [vmem:[%s10 + $0xa4] sm:$0xf]
        %v2059 = vld [vmem:[%s10 + $0xa8] sm:$0xf]
        %v2060 = vld [vmem:[%s10 + $0xac] sm:$0xf]
        %v2061 = vld [vmem:[%s10 + $0xb0] sm:$0xf]
        %v2062 = vld [vmem:[%s10 + $0xb4] sm:$0xf]
        %v2063 = vld [vmem:[%s10 + $0xb8] sm:$0xf]
        %v2064 = vld [vmem:[%s10 + $0xbc] sm:$0xf]
        %v2113 = vunpack.c.l.b16 %v2017
        %v2114 = vunpack.c.l.b16 %v2018
        %v2115 = vunpack.c.l.b16 %v2019
        %v2116 = vunpack.c.l.b16 %v2020
        %v2117 = vunpack.c.l.b16 %v2021
        %v2118 = vunpack.c.l.b16 %v2022
        %v2119 = vunpack.c.l.b16 %v2023
        %v2120 = vunpack.c.l.b16 %v2024
        %v2121 = vunpack.c.l.b16 %v2025
        %v2122 = vunpack.c.l.b16 %v2026
        %v2123 = vunpack.c.l.b16 %v2027
        %v2124 = vunpack.c.l.b16 %v2028
        %v2125 = vunpack.c.l.b16 %v2029
        %v2126 = vunpack.c.l.b16 %v2030
        %v2127 = vunpack.c.l.b16 %v2031
        %v2128 = vunpack.c.l.b16 %v2032
        %v2129 = vunpack.c.l.b16 %v2033
        %v2130 = vunpack.c.l.b16 %v2034
        %v2131 = vunpack.c.l.b16 %v2035
        %v2132 = vunpack.c.l.b16 %v2036
        %v2133 = vunpack.c.l.b16 %v2037
        %v2134 = vunpack.c.l.b16 %v2038
        %v2135 = vunpack.c.l.b16 %v2039
        %v2136 = vunpack.c.l.b16 %v2040
        %v2137 = vunpack.c.l.b16 %v2041
        %v2138 = vunpack.c.l.b16 %v2042
        %v2139 = vunpack.c.l.b16 %v2043
        %v2140 = vunpack.c.l.b16 %v2044
        %v2141 = vunpack.c.l.b16 %v2045
        %v2142 = vunpack.c.l.b16 %v2046
        %v2143 = vunpack.c.l.b16 %v2047
        %v2144 = vunpack.c.l.b16 %v2048
        %v2145 = vunpack.c.l.b16 %v2049
        %v2146 = vunpack.c.l.b16 %v2050
        %v2147 = vunpack.c.l.b16 %v2051
        %v2148 = vunpack.c.l.b16 %v2052
        %v2149 = vunpack.c.l.b16 %v2053
        %v2150 = vunpack.c.l.b16 %v2054
        %v2151 = vunpack.c.l.b16 %v2055
        %v2152 = vunpack.c.l.b16 %v2056
        %v2153 = vunpack.c.l.b16 %v2057
        %v2154 = vunpack.c.l.b16 %v2058
        %v2155 = vunpack.c.l.b16 %v2059
        %v2156 = vunpack.c.l.b16 %v2060
        %v2157 = vunpack.c.l.b16 %v2061
        %v2158 = vunpack.c.l.b16 %v2062
        %v2159 = vunpack.c.l.b16 %v2063
        %v2160 = vunpack.c.l.b16 %v2064
        %v2161 = vpack.c.b16 %v2114, %v2113
        %v2162 = vpack.c.b16 %v2116, %v2115
        %v2163 = vpack.c.b16 %v2118, %v2117
        %v2164 = vpack.c.b16 %v2120, %v2119
        %v2165 = vpack.c.b16 %v2122, %v2121
        %v2166 = vpack.c.b16 %v2124, %v2123
        %v2167 = vpack.c.b16 %v2126, %v2125
        %v2168 = vpack.c.b16 %v2128, %v2127
        %v2169 = vpack.c.b16 %v2130, %v2129
        %v2170 = vpack.c.b16 %v2132, %v2131
        %v2171 = vpack.c.b16 %v2134, %v2133
        %v2172 = vpack.c.b16 %v2136, %v2135
        %v2173 = vpack.c.b16 %v2138, %v2137
        %v2174 = vpack.c.b16 %v2140, %v2139
        %v2175 = vpack.c.b16 %v2142, %v2141
        %v2176 = vpack.c.b16 %v2144, %v2143
        %v2177 = vpack.c.b16 %v2146, %v2145
        %v2178 = vpack.c.b16 %v2148, %v2147
        %v2179 = vpack.c.b16 %v2150, %v2149
        %v2180 = vpack.c.b16 %v2152, %v2151
        %v2181 = vpack.c.b16 %v2154, %v2153
        %v2182 = vpack.c.b16 %v2156, %v2155
        %v2183 = vpack.c.b16 %v2158, %v2157
        %v2184 = vpack.c.b16 %v2160, %v2159
        %2209 = vmatprep.subr.bf16.mxu0 0
        %2210 = vmatpush1.bf16.msra.mxu0 %v2161
        %2211 = vmatprep.subr.bf16.mxu0 0
        %2212 = vmatpush1.bf16.msra.mxu0 %v2162
        %2213 = vmatprep.subr.bf16.mxu0 0
        %2214 = vmatpush1.bf16.msra.mxu0 %v2163
        %2215 = vmatprep.subr.bf16.mxu0 0
        %2216 = vmatpush1.bf16.msra.mxu0 %v2164
        %2217 = vmatprep.subr.bf16.mxu0 0
        %2218 = vmatpush1.bf16.msra.mxu0 %v2165
        %2219 = vmatprep.subr.bf16.mxu0 0
        %2220 = vmatpush1.bf16.msra.mxu0 %v2166
        %2221 = vmatprep.subr.bf16.mxu0 0
        %2222 = vmatpush1.bf16.msra.mxu0 %v2167
        %2223 = vmatprep.subr.bf16.mxu0 0
        %2224 = vmatpush1.bf16.msra.mxu0 %v2168
        %2225 = vmatprep.subr.bf16.mxu0 0
        %2226 = vmatpush1.bf16.msra.mxu0 %v2169
        %2227 = vmatprep.subr.bf16.mxu0 0
        %2228 = vmatpush1.bf16.msra.mxu0 %v2170
        %2229 = vmatprep.subr.bf16.mxu0 0
        %2230 = vmatpush1.bf16.msra.mxu0 %v2171
        %2231 = vmatprep.subr.bf16.mxu0 0
        %2232 = vmatpush1.bf16.msra.mxu0 %v2172
        %2233 = vmatprep.subr.bf16.mxu0 0
        %2234 = vmatpush1.bf16.msra.mxu0 %v2173
        %2235 = vmatprep.subr.bf16.mxu0 0
        %2236 = vmatpush1.bf16.msra.mxu0 %v2174
        %2237 = vmatprep.subr.bf16.mxu0 0
        %2238 = vmatpush1.bf16.msra.mxu0 %v2175
        %2239 = vmatprep.subr.bf16.mxu0 0
        %2240 = vmatpush1.bf16.msra.mxu0 %v2176
        %2241 = vmatprep.mubr.bf16.mxu0 %v1998
        %2242 = vmatmul.mubr.bf16.gmra.mrb[0].mxu0 %v1997
        %v2243 = vpop.f32.mrb[0].mxu0
        %v2244 = vadd.f32 0.0, %v2243
        %v2245 = vpop.f32.mrb[0].mxu0
        %v2246 = vpop.f32.mrb[0].mxu0
        %v2247 = vadd.f32 0.0, %v2246
        %v2248 = vpop.f32.mrb[0].mxu0
        %2249 = vmatprep.mubr.bf16.mxu0 %v2001
        %2250 = vmatmul.mubr.bf16.gmra.mrb[0].mxu0 %v2000
        %v2251 = vpop.f32.mrb[0].mxu0
        %v2252 = vadd.f32 0.0, %v2251
        %v2253 = vpop.f32.mrb[0].mxu0
        %v2254 = vpop.f32.mrb[0].mxu0
        %v2255 = vadd.f32 0.0, %v2254
        %v2256 = vpop.f32.mrb[0].mxu0
        %2257 = vmatprep.mubr.bf16.mxu0 %v2004
        %2258 = vmatmul.mubr.bf16.gmra.mrb[0].mxu0 %v2003
        %v2259 = vpop.f32.mrb[0].mxu0
        %v2260 = vadd.f32 0.0, %v2259
        %v2261 = vpop.f32.mrb[0].mxu0
        %v2262 = vpop.f32.mrb[0].mxu0
        %v2263 = vadd.f32 0.0, %v2262
        %v2264 = vpop.f32.mrb[0].mxu0
        %2265 = vmatprep.mubr.bf16.mxu0 %v2007
        %2266 = vmatmul.mubr.bf16.gmra.mrb[0].mxu0 %v2006
        %v2267 = vpop.f32.mrb[0].mxu0
        %v2268 = vadd.f32 0.0, %v2267
        %v2269 = vpop.f32.mrb[0].mxu0
        %v2270 = vpop.f32.mrb[0].mxu0
        %v2271 = vadd.f32 0.0, %v2270
        %v2272 = vpop.f32.mrb[0].mxu0
        %2273 = vdwg.mxu0
        %2274 = vmatprep.subr.bf16.mxu0 0
        %2275 = vmatpush1.bf16.msra.mxu0 %v2177
        %2276 = vmatprep.subr.bf16.mxu0 0
        %2277 = vmatpush1.bf16.msra.mxu0 %v2178
        %2278 = vmatprep.subr.bf16.mxu0 0
        %2279 = vmatpush1.bf16.msra.mxu0 %v2179
        %2280 = vmatprep.subr.bf16.mxu0 0
        %2281 = vmatpush1.bf16.msra.mxu0 %v2180
        %2282 = vmatprep.subr.bf16.mxu0 0
        %2283 = vmatpush1.bf16.msra.mxu0 %v2181
        %2284 = vmatprep.subr.bf16.mxu0 0
        %2285 = vmatpush1.bf16.msra.mxu0 %v2182
        %2286 = vmatprep.subr.bf16.mxu0 0
        %2287 = vmatpush1.bf16.msra.mxu0 %v2183
        %2288 = vmatprep.subr.bf16.mxu0 0
        %2289 = vmatpush1.bf16.msra.mxu0 %v2184
        %2290 = vmatprep.subr.bf16.mxu0 0
        %2291 = vmatpush1.bf16.msra.mxu0 0
        %2292 = vmatprep.subr.bf16.mxu0 0
        %2293 = vmatpush1.bf16.msra.mxu0 0
        %2294 = vmatprep.subr.bf16.mxu0 0
        %2295 = vmatpush1.bf16.msra.mxu0 0
        %2296 = vmatprep.subr.bf16.mxu0 0
        %2297 = vmatpush1.bf16.msra.mxu0 0
        %2298 = vmatprep.subr.bf16.mxu0 0
        %2299 = vmatpush1.bf16.msra.mxu0 0
        %2300 = vmatprep.subr.bf16.mxu0 0
        %2301 = vmatpush1.bf16.msra.mxu0 0
        %2302 = vmatprep.subr.bf16.mxu0 0
        %2303 = vmatpush1.bf16.msra.mxu0 0
        %2304 = vmatprep.subr.bf16.mxu0 0
        %2305 = vmatpush1.bf16.msra.mxu0 0
        %2306 = vmatprep.mubr.bf16.mxu0 0
        %2307 = vmatmul.mubr.bf16.gmra.mrb[0].mxu0 %v1999
        %v2308 = vpop.f32.mrb[0].mxu0
        %v2309 = vadd.f32 %v2244, %v2308
        %v2310 = vpop.f32.mrb[0].mxu0
        %v2311 = vpop.f32.mrb[0].mxu0
        %v2312 = vadd.f32 %v2247, %v2311
        %v2313 = vpop.f32.mrb[0].mxu0
        %2314 = vmatprep.mubr.bf16.mxu0 0
        %2315 = vmatmul.mubr.bf16.gmra.mrb[0].mxu0 %v2002
        %v2316 = vpop.f32.mrb[0].mxu0
        %v2317 = vadd.f32 %v2252, %v2316
        %v2318 = vpop.f32.mrb[0].mxu0
        %v2319 = vpop.f32.mrb[0].mxu0
        %v2320 = vadd.f32 %v2255, %v2319
        %v2321 = vpop.f32.mrb[0].mxu0
        %2322 = vmatprep.mubr.bf16.mxu0 0
        %2323 = vmatmul.mubr.bf16.gmra.mrb[0].mxu0 %v2005
        %v2324 = vpop.f32.mrb[0].mxu0
        %v2325 = vadd.f32 %v2260, %v2324
        %v2326 = vpop.f32.mrb[0].mxu0
        %v2327 = vpop.f32.mrb[0].mxu0
        %v2328 = vadd.f32 %v2263, %v2327
        %v2329 = vpop.f32.mrb[0].mxu0
        %2330 = vmatprep.mubr.bf16.mxu0 0
        %2331 = vmatmul.mubr.bf16.gmra.mrb[0].mxu0 %v2008
        %v2332 = vpop.f32.mrb[0].mxu0
        %v2333 = vadd.f32 %v2268, %v2332
        %v2334 = vpop.f32.mrb[0].mxu0
        %v2335 = vpop.f32.mrb[0].mxu0
        %v2336 = vadd.f32 %v2271, %v2335
        %v2337 = vpop.f32.mrb[0].mxu0
        %2338 = vdwg.mxu0
        %v2339 = vadd.f32 %v2009, %v2309
        %v2340 = vadd.f32 %v2010, %v2312
        %v2341 = vadd.f32 %v2011, %v2317
        %v2342 = vadd.f32 %v2012, %v2320
        %v2343 = vadd.f32 %v2013, %v2325
        %v2344 = vadd.f32 %v2014, %v2328
        %v2345 = vadd.f32 %v2015, %v2333
        %v2346 = vadd.f32 %v2016, %v2336
        %v2347 = vxor.u32 %v2339, 2147483648
        %v2348 = vxor.u32 %v2340, 2147483648
        %v2349 = vxor.u32 %v2341, 2147483648
        %v2350 = vxor.u32 %v2342, 2147483648
        %v2351 = vxor.u32 %v2343, 2147483648
        %v2352 = vxor.u32 %v2344, 2147483648
        %v2353 = vxor.u32 %v2345, 2147483648
        %v2354 = vxor.u32 %v2346, 2147483648
        %v2355 = vmul.f32 %v2347, 1.442695
        %v2356 = vpow.pop %v2355
        %v2357 = vmul.f32 %v2348, 1.442695
        %v2358 = vpow.pop %v2357
        %v2359 = vmul.f32 %v2349, 1.442695
        %v2360 = vpow.pop %v2359
        %v2361 = vmul.f32 %v2350, 1.442695
        %v2362 = vpow.pop %v2361
        %v2363 = vmul.f32 %v2351, 1.442695
        %v2364 = vpow.pop %v2363
        %v2365 = vmul.f32 %v2352, 1.442695
        %v2366 = vpow.pop %v2365
        %v2367 = vmul.f32 %v2353, 1.442695
        %v2368 = vpow.pop %v2367
        %v2369 = vmul.f32 %v2354, 1.442695
        %v2370 = vpow.pop %v2369
        %v2371 = vadd.f32 %v2356, 1.0
        %v2372 = vadd.f32 %v2358, 1.0
        %v2373 = vadd.f32 %v2360, 1.0
        %v2374 = vadd.f32 %v2362, 1.0
        %v2375 = vadd.f32 %v2364, 1.0
        %v2376 = vadd.f32 %v2366, 1.0
        %v2377 = vadd.f32 %v2368, 1.0
        %v2378 = vadd.f32 %v2370, 1.0
        %v2379 = vrcp.pop %v2371
        %v2380 = vmul.f32 1.0, %v2379
        %v2381 = vrcp.pop %v2372
        %v2382 = vmul.f32 1.0, %v2381
        %v2383 = vrcp.pop %v2373
        %v2384 = vmul.f32 1.0, %v2383
        %v2385 = vrcp.pop %v2374
        %v2386 = vmul.f32 1.0, %v2385
        %v2387 = vrcp.pop %v2375
        %v2388 = vmul.f32 1.0, %v2387
        %v2389 = vrcp.pop %v2376
        %v2390 = vmul.f32 1.0, %v2389
        %v2391 = vrcp.pop %v2377
        %v2392 = vmul.f32 1.0, %v2391
        %v2393 = vrcp.pop %v2378
        %v2394 = vmul.f32 1.0, %v2393
        %v2395 = vmul.f32 %v2339, %v2380
        %v2396 = vmul.f32 %v2340, %v2382
        %v2397 = vmul.f32 %v2341, %v2384
        %v2398 = vmul.f32 %v2342, %v2386
        %v2399 = vmul.f32 %v2343, %v2388
        %v2400 = vmul.f32 %v2344, %v2390
        %v2401 = vmul.f32 %v2345, %v2392
        %v2402 = vmul.f32 %v2346, %v2394
        %v2403 = vpack.c.bf16 %v2396, %v2395
        %v2404 = vpack.c.bf16 %v2398, %v2397
        %v2405 = vpack.c.bf16 %v2400, %v2399
        %v2406 = vpack.c.bf16 %v2402, %v2401
        %v2407 = vld [vmem:[%s13] sm:$0xf]
        %v2408 = vld [vmem:[%s13 + $0x4] sm:$0xf]
        %v2409 = vld [vmem:[%s13 + $0x8] sm:$0xf]
        %v2410 = vld [vmem:[%s13 + $0xc] sm:$0xf]
        %v2411 = vld [vmem:[%s13 + $0x10] sm:$0xf]
        %v2412 = vld [vmem:[%s13 + $0x14] sm:$0xf]
        %v2413 = vld [vmem:[%s13 + $0x18] sm:$0xf]
        %v2414 = vld [vmem:[%s13 + $0x1c] sm:$0xf]
        %v2415 = vld [vmem:[%s13 + $0x20] sm:$0xf]
        %v2416 = vld [vmem:[%s13 + $0x24] sm:$0xf]
        %v2417 = vld [vmem:[%s13 + $0x28] sm:$0xf]
        %v2418 = vld [vmem:[%s13 + $0x2c] sm:$0xf]
        %v2419 = vld [vmem:[%s13 + $0x30] sm:$0xf]
        %v2420 = vld [vmem:[%s13 + $0x34] sm:$0xf]
        %v2421 = vld [vmem:[%s13 + $0x38] sm:$0xf]
        %v2422 = vld [vmem:[%s13 + $0x3c] sm:$0xf]
        %v2439 = vunpack.c.l.b16 %v2407
        %v2440 = vunpack.c.l.b16 %v2408
        %v2441 = vunpack.c.l.b16 %v2409
        %v2442 = vunpack.c.l.b16 %v2410
        %v2443 = vunpack.c.l.b16 %v2411
        %v2444 = vunpack.c.l.b16 %v2412
        %v2445 = vunpack.c.l.b16 %v2413
        %v2446 = vunpack.c.l.b16 %v2414
        %v2447 = vunpack.c.l.b16 %v2415
        %v2448 = vunpack.c.l.b16 %v2416
        %v2449 = vunpack.c.l.b16 %v2417
        %v2450 = vunpack.c.l.b16 %v2418
        %v2451 = vunpack.c.l.b16 %v2419
        %v2452 = vunpack.c.l.b16 %v2420
        %v2453 = vunpack.c.l.b16 %v2421
        %v2454 = vunpack.c.l.b16 %v2422
        %v2455 = vpack.c.b16 %v2440, %v2439
        %v2456 = vpack.c.b16 %v2442, %v2441
        %v2457 = vpack.c.b16 %v2444, %v2443
        %v2458 = vpack.c.b16 %v2446, %v2445
        %v2459 = vpack.c.b16 %v2448, %v2447
        %v2460 = vpack.c.b16 %v2450, %v2449
        %v2461 = vpack.c.b16 %v2452, %v2451
        %v2462 = vpack.c.b16 %v2454, %v2453
        %v2464 = vsel %vm987, %v2455, 0
        %v2467 = vsel %vm987, %v2456, 0
        %v2470 = vsel %vm987, %v2457, 0
        %v2473 = vsel %vm987, %v2458, 0
        %v2476 = vsel %vm987, %v2459, 0
        %v2479 = vsel %vm987, %v2460, 0
        %v2482 = vsel %vm987, %v2461, 0
        %v2485 = vsel %vm987, %v2462, 0
        %2487 = vmatprep.subr.bf16.mxu0 0
        %2488 = vmatpush1.bf16.msra.mxu0 %v2403
        %2489 = vmatprep.subr.bf16.mxu0 0
        %2490 = vmatpush1.bf16.msra.mxu0 %v2404
        %2491 = vmatprep.subr.bf16.mxu0 0
        %2492 = vmatpush1.bf16.msra.mxu0 %v2405
        %2493 = vmatprep.subr.bf16.mxu0 0
        %2494 = vmatpush1.bf16.msra.mxu0 %v2406
        %2495 = vmatprep.subr.bf16.mxu0 0
        %2496 = vmatpush1.bf16.msra.mxu0 0
        %2497 = vmatprep.subr.bf16.mxu0 0
        %2498 = vmatpush1.bf16.msra.mxu0 0
        %2499 = vmatprep.subr.bf16.mxu0 0
        %2500 = vmatpush1.bf16.msra.mxu0 0
        %2501 = vmatprep.subr.bf16.mxu0 0
        %2502 = vmatpush1.bf16.msra.mxu0 0
        %2503 = vmatprep.subr.bf16.mxu0 0
        %2504 = vmatpush1.bf16.msra.mxu0 0
        %2505 = vmatprep.subr.bf16.mxu0 0
        %2506 = vmatpush1.bf16.msra.mxu0 0
        %2507 = vmatprep.subr.bf16.mxu0 0
        %2508 = vmatpush1.bf16.msra.mxu0 0
        %2509 = vmatprep.subr.bf16.mxu0 0
        %2510 = vmatpush1.bf16.msra.mxu0 0
        %2511 = vmatprep.subr.bf16.mxu0 0
        %2512 = vmatpush1.bf16.msra.mxu0 0
        %2513 = vmatprep.subr.bf16.mxu0 0
        %2514 = vmatpush1.bf16.msra.mxu0 0
        %2515 = vmatprep.subr.bf16.mxu0 0
        %2516 = vmatpush1.bf16.msra.mxu0 0
        %2517 = vmatprep.subr.bf16.mxu0 0
        %2518 = vmatpush1.bf16.msra.mxu0 0
        %2519 = vmatprep.mubr.bf16.mxu0 0
        %2520 = vmatmul.mubr.bf16.gmra.mrb[0].mxu0 %v2464
        %v2521 = vpop.f32.mrb[0].mxu0
        %v2522 = vadd.f32 0.0, %v2521
        %v2523 = vpop.f32.mrb[0].mxu0
        %v2524 = vpop.f32.mrb[0].mxu0
        %v2525 = vadd.f32 0.0, %v2524
        %v2526 = vpop.f32.mrb[0].mxu0
        %2527 = vmatprep.mubr.bf16.mxu0 0
        %2528 = vmatmul.mubr.bf16.gmra.mrb[0].mxu0 %v2467
        %v2529 = vpop.f32.mrb[0].mxu0
        %v2530 = vadd.f32 0.0, %v2529
        %v2531 = vpop.f32.mrb[0].mxu0
        %v2532 = vpop.f32.mrb[0].mxu0
        %v2533 = vadd.f32 0.0, %v2532
        %v2534 = vpop.f32.mrb[0].mxu0
        %2535 = vmatprep.mubr.bf16.mxu0 0
        %2536 = vmatmul.mubr.bf16.gmra.mrb[0].mxu0 %v2470
        %v2537 = vpop.f32.mrb[0].mxu0
        %v2538 = vadd.f32 0.0, %v2537
        %v2539 = vpop.f32.mrb[0].mxu0
        %v2540 = vpop.f32.mrb[0].mxu0
        %v2541 = vadd.f32 0.0, %v2540
        %v2542 = vpop.f32.mrb[0].mxu0
        %2543 = vmatprep.mubr.bf16.mxu0 0
        %2544 = vmatmul.mubr.bf16.gmra.mrb[0].mxu0 %v2473
        %v2545 = vpop.f32.mrb[0].mxu0
        %v2546 = vadd.f32 0.0, %v2545
        %v2547 = vpop.f32.mrb[0].mxu0
        %v2548 = vpop.f32.mrb[0].mxu0
        %v2549 = vadd.f32 0.0, %v2548
        %v2550 = vpop.f32.mrb[0].mxu0
        %2551 = vmatprep.mubr.bf16.mxu0 0
        %2552 = vmatmul.mubr.bf16.gmra.mrb[0].mxu0 %v2476
        %v2553 = vpop.f32.mrb[0].mxu0
        %v2554 = vadd.f32 0.0, %v2553
        %v2555 = vpop.f32.mrb[0].mxu0
        %v2556 = vpop.f32.mrb[0].mxu0
        %v2557 = vadd.f32 0.0, %v2556
        %v2558 = vpop.f32.mrb[0].mxu0
        %2559 = vmatprep.mubr.bf16.mxu0 0
        %2560 = vmatmul.mubr.bf16.gmra.mrb[0].mxu0 %v2479
        %v2561 = vpop.f32.mrb[0].mxu0
        %v2562 = vadd.f32 0.0, %v2561
        %v2563 = vpop.f32.mrb[0].mxu0
        %v2564 = vpop.f32.mrb[0].mxu0
        %v2565 = vadd.f32 0.0, %v2564
        %v2566 = vpop.f32.mrb[0].mxu0
        %2567 = vmatprep.mubr.bf16.mxu0 0
        %2568 = vmatmul.mubr.bf16.gmra.mrb[0].mxu0 %v2482
        %v2569 = vpop.f32.mrb[0].mxu0
        %v2570 = vadd.f32 0.0, %v2569
        %v2571 = vpop.f32.mrb[0].mxu0
        %v2572 = vpop.f32.mrb[0].mxu0
        %v2573 = vadd.f32 0.0, %v2572
        %v2574 = vpop.f32.mrb[0].mxu0
        %2575 = vmatprep.mubr.bf16.mxu0 0
        %2576 = vmatmul.mubr.bf16.gmra.mrb[0].mxu0 %v2485
        %v2577 = vpop.f32.mrb[0].mxu0
        %v2578 = vadd.f32 0.0, %v2577
        %v2579 = vpop.f32.mrb[0].mxu0
        %v2580 = vpop.f32.mrb[0].mxu0
        %v2581 = vadd.f32 0.0, %v2580
        %v2582 = vpop.f32.mrb[0].mxu0
        %2583 = vdwg.mxu0
        %v2584 = vpack.c.bf16 %v2525, %v2522
        %v2585 = vpack.c.bf16 %v2533, %v2530
        %v2586 = vpack.c.bf16 %v2541, %v2538
        %v2587 = vpack.c.bf16 %v2549, %v2546
        %v2588 = vpack.c.bf16 %v2557, %v2554
        %v2589 = vpack.c.bf16 %v2565, %v2562
        %v2590 = vpack.c.bf16 %v2573, %v2570
        %v2591 = vpack.c.bf16 %v2581, %v2578
        %s2592 = scalar_lea.vmem %s13, 64
        %v2593 = vld [vmem:[%s2592] sm:$0xf]
        %v2594 = vld [vmem:[%s2592 + $0x4] sm:$0xf]
        %v2595 = vld [vmem:[%s2592 + $0x8] sm:$0xf]
        %v2596 = vld [vmem:[%s2592 + $0xc] sm:$0xf]
        %v2597 = vld [vmem:[%s2592 + $0x10] sm:$0xf]
        %v2598 = vld [vmem:[%s2592 + $0x14] sm:$0xf]
        %v2599 = vld [vmem:[%s2592 + $0x18] sm:$0xf]
        %v2600 = vld [vmem:[%s2592 + $0x1c] sm:$0xf]
        %v2601 = vld [vmem:[%s2592 + $0x20] sm:$0xf]
        %v2602 = vld [vmem:[%s2592 + $0x24] sm:$0xf]
        %v2603 = vld [vmem:[%s2592 + $0x28] sm:$0xf]
        %v2604 = vld [vmem:[%s2592 + $0x2c] sm:$0xf]
        %v2605 = vld [vmem:[%s2592 + $0x30] sm:$0xf]
        %v2606 = vld [vmem:[%s2592 + $0x34] sm:$0xf]
        %v2607 = vld [vmem:[%s2592 + $0x38] sm:$0xf]
        %v2608 = vld [vmem:[%s2592 + $0x3c] sm:$0xf]
        %v2625 = vunpack.c.l.b16 %v2593
        %v2626 = vunpack.c.l.b16 %v2594
        %v2627 = vunpack.c.l.b16 %v2595
        %v2628 = vunpack.c.l.b16 %v2596
        %v2629 = vunpack.c.l.b16 %v2597
        %v2630 = vunpack.c.l.b16 %v2598
        %v2631 = vunpack.c.l.b16 %v2599
        %v2632 = vunpack.c.l.b16 %v2600
        %v2633 = vunpack.c.l.b16 %v2601
        %v2634 = vunpack.c.l.b16 %v2602
        %v2635 = vunpack.c.l.b16 %v2603
        %v2636 = vunpack.c.l.b16 %v2604
        %v2637 = vunpack.c.l.b16 %v2605
        %v2638 = vunpack.c.l.b16 %v2606
        %v2639 = vunpack.c.l.b16 %v2607
        %v2640 = vunpack.c.l.b16 %v2608
        %v2641 = vpack.c.b16 %v2626, %v2625
        %v2642 = vpack.c.b16 %v2628, %v2627
        %v2643 = vpack.c.b16 %v2630, %v2629
        %v2644 = vpack.c.b16 %v2632, %v2631
        %v2645 = vpack.c.b16 %v2634, %v2633
        %v2646 = vpack.c.b16 %v2636, %v2635
        %v2647 = vpack.c.b16 %v2638, %v2637
        %v2648 = vpack.c.b16 %v2640, %v2639
        %v2650 = vsel %vm987, %v2641, 0
        %v2653 = vsel %vm987, %v2642, 0
        %v2656 = vsel %vm987, %v2643, 0
        %v2659 = vsel %vm987, %v2644, 0
        %v2662 = vsel %vm987, %v2645, 0
        %v2665 = vsel %vm987, %v2646, 0
        %v2668 = vsel %vm987, %v2647, 0
        %v2671 = vsel %vm987, %v2648, 0
        %2673 = vmatprep.subr.bf16.mxu0 0
        %2674 = vmatpush1.bf16.msra.mxu0 %v2403
        %2675 = vmatprep.subr.bf16.mxu0 0
        %2676 = vmatpush1.bf16.msra.mxu0 %v2404
        %2677 = vmatprep.subr.bf16.mxu0 0
        %2678 = vmatpush1.bf16.msra.mxu0 %v2405
        %2679 = vmatprep.subr.bf16.mxu0 0
        %2680 = vmatpush1.bf16.msra.mxu0 %v2406
        %2681 = vmatprep.subr.bf16.mxu0 0
        %2682 = vmatpush1.bf16.msra.mxu0 0
        %2683 = vmatprep.subr.bf16.mxu0 0
        %2684 = vmatpush1.bf16.msra.mxu0 0
        %2685 = vmatprep.subr.bf16.mxu0 0
        %2686 = vmatpush1.bf16.msra.mxu0 0
        %2687 = vmatprep.subr.bf16.mxu0 0
        %2688 = vmatpush1.bf16.msra.mxu0 0
        %2689 = vmatprep.subr.bf16.mxu0 0
        %2690 = vmatpush1.bf16.msra.mxu0 0
        %2691 = vmatprep.subr.bf16.mxu0 0
        %2692 = vmatpush1.bf16.msra.mxu0 0
        %2693 = vmatprep.subr.bf16.mxu0 0
        %2694 = vmatpush1.bf16.msra.mxu0 0
        %2695 = vmatprep.subr.bf16.mxu0 0
        %2696 = vmatpush1.bf16.msra.mxu0 0
        %2697 = vmatprep.subr.bf16.mxu0 0
        %2698 = vmatpush1.bf16.msra.mxu0 0
        %2699 = vmatprep.subr.bf16.mxu0 0
        %2700 = vmatpush1.bf16.msra.mxu0 0
        %2701 = vmatprep.subr.bf16.mxu0 0
        %2702 = vmatpush1.bf16.msra.mxu0 0
        %2703 = vmatprep.subr.bf16.mxu0 0
        %2704 = vmatpush1.bf16.msra.mxu0 0
        %2705 = vmatprep.mubr.bf16.mxu0 0
        %2706 = vmatmul.mubr.bf16.gmra.mrb[0].mxu0 %v2650
        %v2707 = vpop.f32.mrb[0].mxu0
        %v2708 = vadd.f32 0.0, %v2707
        %v2709 = vpop.f32.mrb[0].mxu0
        %v2710 = vpop.f32.mrb[0].mxu0
        %v2711 = vadd.f32 0.0, %v2710
        %v2712 = vpop.f32.mrb[0].mxu0
        %2713 = vmatprep.mubr.bf16.mxu0 0
        %2714 = vmatmul.mubr.bf16.gmra.mrb[0].mxu0 %v2653
        %v2715 = vpop.f32.mrb[0].mxu0
        %v2716 = vadd.f32 0.0, %v2715
        %v2717 = vpop.f32.mrb[0].mxu0
        %v2718 = vpop.f32.mrb[0].mxu0
        %v2719 = vadd.f32 0.0, %v2718
        %v2720 = vpop.f32.mrb[0].mxu0
        %2721 = vmatprep.mubr.bf16.mxu0 0
        %2722 = vmatmul.mubr.bf16.gmra.mrb[0].mxu0 %v2656
        %v2723 = vpop.f32.mrb[0].mxu0
        %v2724 = vadd.f32 0.0, %v2723
        %v2725 = vpop.f32.mrb[0].mxu0
        %v2726 = vpop.f32.mrb[0].mxu0
        %v2727 = vadd.f32 0.0, %v2726
        %v2728 = vpop.f32.mrb[0].mxu0
        %2729 = vmatprep.mubr.bf16.mxu0 0
        %2730 = vmatmul.mubr.bf16.gmra.mrb[0].mxu0 %v2659
        %v2731 = vpop.f32.mrb[0].mxu0
        %v2732 = vadd.f32 0.0, %v2731
        %v2733 = vpop.f32.mrb[0].mxu0
        %v2734 = vpop.f32.mrb[0].mxu0
        %v2735 = vadd.f32 0.0, %v2734
        %v2736 = vpop.f32.mrb[0].mxu0
        %2737 = vmatprep.mubr.bf16.mxu0 0
        %2738 = vmatmul.mubr.bf16.gmra.mrb[0].mxu0 %v2662
        %v2739 = vpop.f32.mrb[0].mxu0
        %v2740 = vadd.f32 0.0, %v2739
        %v2741 = vpop.f32.mrb[0].mxu0
        %v2742 = vpop.f32.mrb[0].mxu0
        %v2743 = vadd.f32 0.0, %v2742
        %v2744 = vpop.f32.mrb[0].mxu0
        %2745 = vmatprep.mubr.bf16.mxu0 0
        %2746 = vmatmul.mubr.bf16.gmra.mrb[0].mxu0 %v2665
        %v2747 = vpop.f32.mrb[0].mxu0
        %v2748 = vadd.f32 0.0, %v2747
        %v2749 = vpop.f32.mrb[0].mxu0
        %v2750 = vpop.f32.mrb[0].mxu0
        %v2751 = vadd.f32 0.0, %v2750
        %v2752 = vpop.f32.mrb[0].mxu0
        %2753 = vmatprep.mubr.bf16.mxu0 0
        %2754 = vmatmul.mubr.bf16.gmra.mrb[0].mxu0 %v2668
        %v2755 = vpop.f32.mrb[0].mxu0
        %v2756 = vadd.f32 0.0, %v2755
        %v2757 = vpop.f32.mrb[0].mxu0
        %v2758 = vpop.f32.mrb[0].mxu0
        %v2759 = vadd.f32 0.0, %v2758
        %v2760 = vpop.f32.mrb[0].mxu0
        %2761 = vmatprep.mubr.bf16.mxu0 0
        %2762 = vmatmul.mubr.bf16.gmra.mrb[0].mxu0 %v2671
        %v2763 = vpop.f32.mrb[0].mxu0
        %v2764 = vadd.f32 0.0, %v2763
        %v2765 = vpop.f32.mrb[0].mxu0
        %v2766 = vpop.f32.mrb[0].mxu0
        %v2767 = vadd.f32 0.0, %v2766
        %v2768 = vpop.f32.mrb[0].mxu0
        %2769 = vdwg.mxu0
        %v2770 = vpack.c.bf16 %v2711, %v2708
        %v2771 = vpack.c.bf16 %v2719, %v2716
        %v2772 = vpack.c.bf16 %v2727, %v2724
        %v2773 = vpack.c.bf16 %v2735, %v2732
        %v2774 = vpack.c.bf16 %v2743, %v2740
        %v2775 = vpack.c.bf16 %v2751, %v2748
        %v2776 = vpack.c.bf16 %v2759, %v2756
        %v2777 = vpack.c.bf16 %v2767, %v2764
        %s2778 = scalar_lea.vmem %s13, 128
        %v2779 = vld [vmem:[%s2778] sm:$0xf]
        %v2780 = vld [vmem:[%s2778 + $0x4] sm:$0xf]
        %v2781 = vld [vmem:[%s2778 + $0x8] sm:$0xf]
        %v2782 = vld [vmem:[%s2778 + $0xc] sm:$0xf]
        %v2783 = vld [vmem:[%s2778 + $0x10] sm:$0xf]
        %v2784 = vld [vmem:[%s2778 + $0x14] sm:$0xf]
        %v2785 = vld [vmem:[%s2778 + $0x18] sm:$0xf]
        %v2786 = vld [vmem:[%s2778 + $0x1c] sm:$0xf]
        %v2787 = vld [vmem:[%s2778 + $0x20] sm:$0xf]
        %v2788 = vld [vmem:[%s2778 + $0x24] sm:$0xf]
        %v2789 = vld [vmem:[%s2778 + $0x28] sm:$0xf]
        %v2790 = vld [vmem:[%s2778 + $0x2c] sm:$0xf]
        %v2791 = vld [vmem:[%s2778 + $0x30] sm:$0xf]
        %v2792 = vld [vmem:[%s2778 + $0x34] sm:$0xf]
        %v2793 = vld [vmem:[%s2778 + $0x38] sm:$0xf]
        %v2794 = vld [vmem:[%s2778 + $0x3c] sm:$0xf]
        %v2811 = vunpack.c.l.b16 %v2779
        %v2812 = vunpack.c.l.b16 %v2780
        %v2813 = vunpack.c.l.b16 %v2781
        %v2814 = vunpack.c.l.b16 %v2782
        %v2815 = vunpack.c.l.b16 %v2783
        %v2816 = vunpack.c.l.b16 %v2784
        %v2817 = vunpack.c.l.b16 %v2785
        %v2818 = vunpack.c.l.b16 %v2786
        %v2819 = vunpack.c.l.b16 %v2787
        %v2820 = vunpack.c.l.b16 %v2788
        %v2821 = vunpack.c.l.b16 %v2789
        %v2822 = vunpack.c.l.b16 %v2790
        %v2823 = vunpack.c.l.b16 %v2791
        %v2824 = vunpack.c.l.b16 %v2792
        %v2825 = vunpack.c.l.b16 %v2793
        %v2826 = vunpack.c.l.b16 %v2794
        %v2827 = vpack.c.b16 %v2812, %v2811
        %v2828 = vpack.c.b16 %v2814, %v2813
        %v2829 = vpack.c.b16 %v2816, %v2815
        %v2830 = vpack.c.b16 %v2818, %v2817
        %v2831 = vpack.c.b16 %v2820, %v2819
        %v2832 = vpack.c.b16 %v2822, %v2821
        %v2833 = vpack.c.b16 %v2824, %v2823
        %v2834 = vpack.c.b16 %v2826, %v2825
        %v2836 = vsel %vm987, %v2827, 0
        %v2839 = vsel %vm987, %v2828, 0
        %v2842 = vsel %vm987, %v2829, 0
        %v2845 = vsel %vm987, %v2830, 0
        %v2848 = vsel %vm987, %v2831, 0
        %v2851 = vsel %vm987, %v2832, 0
        %v2854 = vsel %vm987, %v2833, 0
        %v2857 = vsel %vm987, %v2834, 0
        %2859 = vmatprep.subr.bf16.mxu0 0
        %2860 = vmatpush1.bf16.msra.mxu0 %v2403
        %2861 = vmatprep.subr.bf16.mxu0 0
        %2862 = vmatpush1.bf16.msra.mxu0 %v2404
        %2863 = vmatprep.subr.bf16.mxu0 0
        %2864 = vmatpush1.bf16.msra.mxu0 %v2405
        %2865 = vmatprep.subr.bf16.mxu0 0
        %2866 = vmatpush1.bf16.msra.mxu0 %v2406
        %2867 = vmatprep.subr.bf16.mxu0 0
        %2868 = vmatpush1.bf16.msra.mxu0 0
        %2869 = vmatprep.subr.bf16.mxu0 0
        %2870 = vmatpush1.bf16.msra.mxu0 0
        %2871 = vmatprep.subr.bf16.mxu0 0
        %2872 = vmatpush1.bf16.msra.mxu0 0
        %2873 = vmatprep.subr.bf16.mxu0 0
        %2874 = vmatpush1.bf16.msra.mxu0 0
        %2875 = vmatprep.subr.bf16.mxu0 0
        %2876 = vmatpush1.bf16.msra.mxu0 0
        %2877 = vmatprep.subr.bf16.mxu0 0
        %2878 = vmatpush1.bf16.msra.mxu0 0
        %2879 = vmatprep.subr.bf16.mxu0 0
        %2880 = vmatpush1.bf16.msra.mxu0 0
        %2881 = vmatprep.subr.bf16.mxu0 0
        %2882 = vmatpush1.bf16.msra.mxu0 0
        %2883 = vmatprep.subr.bf16.mxu0 0
        %2884 = vmatpush1.bf16.msra.mxu0 0
        %2885 = vmatprep.subr.bf16.mxu0 0
        %2886 = vmatpush1.bf16.msra.mxu0 0
        %2887 = vmatprep.subr.bf16.mxu0 0
        %2888 = vmatpush1.bf16.msra.mxu0 0
        %2889 = vmatprep.subr.bf16.mxu0 0
        %2890 = vmatpush1.bf16.msra.mxu0 0
        %2891 = vmatprep.mubr.bf16.mxu0 0
        %2892 = vmatmul.mubr.bf16.gmra.mrb[0].mxu0 %v2836
        %v2893 = vpop.f32.mrb[0].mxu0
        %v2894 = vadd.f32 0.0, %v2893
        %v2895 = vpop.f32.mrb[0].mxu0
        %v2896 = vpop.f32.mrb[0].mxu0
        %v2897 = vadd.f32 0.0, %v2896
        %v2898 = vpop.f32.mrb[0].mxu0
        %2899 = vmatprep.mubr.bf16.mxu0 0
        %2900 = vmatmul.mubr.bf16.gmra.mrb[0].mxu0 %v2839
        %v2901 = vpop.f32.mrb[0].mxu0
        %v2902 = vadd.f32 0.0, %v2901
        %v2903 = vpop.f32.mrb[0].mxu0
        %v2904 = vpop.f32.mrb[0].mxu0
        %v2905 = vadd.f32 0.0, %v2904
        %v2906 = vpop.f32.mrb[0].mxu0
        %2907 = vmatprep.mubr.bf16.mxu0 0
        %2908 = vmatmul.mubr.bf16.gmra.mrb[0].mxu0 %v2842
        %v2909 = vpop.f32.mrb[0].mxu0
        %v2910 = vadd.f32 0.0, %v2909
        %v2911 = vpop.f32.mrb[0].mxu0
        %v2912 = vpop.f32.mrb[0].mxu0
        %v2913 = vadd.f32 0.0, %v2912
        %v2914 = vpop.f32.mrb[0].mxu0
        %2915 = vmatprep.mubr.bf16.mxu0 0
        %2916 = vmatmul.mubr.bf16.gmra.mrb[0].mxu0 %v2845
        %v2917 = vpop.f32.mrb[0].mxu0
        %v2918 = vadd.f32 0.0, %v2917
        %v2919 = vpop.f32.mrb[0].mxu0
        %v2920 = vpop.f32.mrb[0].mxu0
        %v2921 = vadd.f32 0.0, %v2920
        %v2922 = vpop.f32.mrb[0].mxu0
        %2923 = vmatprep.mubr.bf16.mxu0 0
        %2924 = vmatmul.mubr.bf16.gmra.mrb[0].mxu0 %v2848
        %v2925 = vpop.f32.mrb[0].mxu0
        %v2926 = vadd.f32 0.0, %v2925
        %v2927 = vpop.f32.mrb[0].mxu0
        %v2928 = vpop.f32.mrb[0].mxu0
        %v2929 = vadd.f32 0.0, %v2928
        %v2930 = vpop.f32.mrb[0].mxu0
        %2931 = vmatprep.mubr.bf16.mxu0 0
        %2932 = vmatmul.mubr.bf16.gmra.mrb[0].mxu0 %v2851
        %v2933 = vpop.f32.mrb[0].mxu0
        %v2934 = vadd.f32 0.0, %v2933
        %v2935 = vpop.f32.mrb[0].mxu0
        %v2936 = vpop.f32.mrb[0].mxu0
        %v2937 = vadd.f32 0.0, %v2936
        %v2938 = vpop.f32.mrb[0].mxu0
        %2939 = vmatprep.mubr.bf16.mxu0 0
        %2940 = vmatmul.mubr.bf16.gmra.mrb[0].mxu0 %v2854
        %v2941 = vpop.f32.mrb[0].mxu0
        %v2942 = vadd.f32 0.0, %v2941
        %v2943 = vpop.f32.mrb[0].mxu0
        %v2944 = vpop.f32.mrb[0].mxu0
        %v2945 = vadd.f32 0.0, %v2944
        %v2946 = vpop.f32.mrb[0].mxu0
        %2947 = vmatprep.mubr.bf16.mxu0 0
        %2948 = vmatmul.mubr.bf16.gmra.mrb[0].mxu0 %v2857
        %v2949 = vpop.f32.mrb[0].mxu0
        %v2950 = vadd.f32 0.0, %v2949
        %v2951 = vpop.f32.mrb[0].mxu0
        %v2952 = vpop.f32.mrb[0].mxu0
        %v2953 = vadd.f32 0.0, %v2952
        %v2954 = vpop.f32.mrb[0].mxu0
        %2955 = vdwg.mxu0
        %v2956 = vpack.c.bf16 %v2897, %v2894
        %v2957 = vpack.c.bf16 %v2905, %v2902
        %v2958 = vpack.c.bf16 %v2913, %v2910
        %v2959 = vpack.c.bf16 %v2921, %v2918
        %v2960 = vpack.c.bf16 %v2929, %v2926
        %v2961 = vpack.c.bf16 %v2937, %v2934
        %v2962 = vpack.c.bf16 %v2945, %v2942
        %v2963 = vpack.c.bf16 %v2953, %v2950
        %v2964 = vld [vmem:[#allocation15] sm:$0xff]
        %v2965 = vld [vmem:[#allocation15 + $0x8] sm:$0xff]
        %v2966 = vld [vmem:[#allocation15 + $0x10] sm:$0xff]
        %v2967 = vld [vmem:[#allocation15 + $0x18] sm:$0xff]
        %v2968 = vld [vmem:[#allocation15 + $0x20] sm:$0xff]
        %v2969 = vld [vmem:[#allocation15 + $0x28] sm:$0xff]
        %v2970 = vld [vmem:[#allocation15 + $0x30] sm:$0xff]
        %v2971 = vld [vmem:[#allocation15 + $0x38] sm:$0xff]
        %v2972 = vld [vmem:[#allocation15 + $0x40] sm:$0xff]
        %v2973 = vld [vmem:[#allocation15 + $0x48] sm:$0xff]
        %v2974 = vld [vmem:[#allocation15 + $0x50] sm:$0xff]
        %v2975 = vld [vmem:[#allocation15 + $0x58] sm:$0xff]
        %v2976 = vld [vmem:[#allocation15 + $0x60] sm:$0xff]
        %v2977 = vld [vmem:[#allocation15 + $0x68] sm:$0xff]
        %v2978 = vld [vmem:[#allocation15 + $0x70] sm:$0xff]
        %v2979 = vld [vmem:[#allocation15 + $0x78] sm:$0xff]
        %v2980 = vld [vmem:[#allocation13] sm:$0xf]
        %v2981 = vld [vmem:[#allocation13 + $0x4] sm:$0xf]
        %v2982 = vld [vmem:[#allocation13 + $0x8] sm:$0xf]
        %v2983 = vld [vmem:[#allocation13 + $0xc] sm:$0xf]
        %v2984 = vld [vmem:[#allocation13 + $0x10] sm:$0xf]
        %v2985 = vld [vmem:[#allocation13 + $0x14] sm:$0xf]
        %v2986 = vld [vmem:[#allocation13 + $0x18] sm:$0xf]
        %v2987 = vld [vmem:[#allocation13 + $0x1c] sm:$0xf]
        %v2988 = vld [vmem:[#allocation13 + $0x20] sm:$0xf]
        %v2989 = vld [vmem:[#allocation13 + $0x24] sm:$0xf]
        %v2990 = vld [vmem:[#allocation13 + $0x28] sm:$0xf]
        %v2991 = vld [vmem:[#allocation13 + $0x2c] sm:$0xf]
        %v2992 = vld [vmem:[#allocation13 + $0x30] sm:$0xf]
        %v2993 = vld [vmem:[#allocation13 + $0x34] sm:$0xf]
        %v2994 = vld [vmem:[#allocation13 + $0x38] sm:$0xf]
        %v2995 = vld [vmem:[#allocation13 + $0x3c] sm:$0xf]
        %v2996 = vld [vmem:[#allocation13 + $0x40] sm:$0xf]
        %v2997 = vld [vmem:[#allocation13 + $0x44] sm:$0xf]
        %v2998 = vld [vmem:[#allocation13 + $0x48] sm:$0xf]
        %v2999 = vld [vmem:[#allocation13 + $0x4c] sm:$0xf]
        %v3000 = vld [vmem:[#allocation13 + $0x50] sm:$0xf]
        %v3001 = vld [vmem:[#allocation13 + $0x54] sm:$0xf]
        %v3002 = vld [vmem:[#allocation13 + $0x58] sm:$0xf]
        %v3003 = vld [vmem:[#allocation13 + $0x5c] sm:$0xf]
        %v3004 = vld [vmem:[#allocation13 + $0x60] sm:$0xf]
        %v3005 = vld [vmem:[#allocation13 + $0x64] sm:$0xf]
        %v3006 = vld [vmem:[#allocation13 + $0x68] sm:$0xf]
        %v3007 = vld [vmem:[#allocation13 + $0x6c] sm:$0xf]
        %v3008 = vld [vmem:[#allocation13 + $0x70] sm:$0xf]
        %v3009 = vld [vmem:[#allocation13 + $0x74] sm:$0xf]
        %v3010 = vld [vmem:[#allocation13 + $0x78] sm:$0xf]
        %v3011 = vld [vmem:[#allocation13 + $0x7c] sm:$0xf]
        %v3012 = vld [vmem:[#allocation13 + $0x80] sm:$0xf]
        %v3013 = vld [vmem:[#allocation13 + $0x84] sm:$0xf]
        %v3014 = vld [vmem:[#allocation13 + $0x88] sm:$0xf]
        %v3015 = vld [vmem:[#allocation13 + $0x8c] sm:$0xf]
        %v3016 = vld [vmem:[#allocation13 + $0x90] sm:$0xf]
        %v3017 = vld [vmem:[#allocation13 + $0x94] sm:$0xf]
        %v3018 = vld [vmem:[#allocation13 + $0x98] sm:$0xf]
        %v3019 = vld [vmem:[#allocation13 + $0x9c] sm:$0xf]
        %v3020 = vld [vmem:[#allocation13 + $0xa0] sm:$0xf]
        %v3021 = vld [vmem:[#allocation13 + $0xa4] sm:$0xf]
        %v3022 = vld [vmem:[#allocation13 + $0xa8] sm:$0xf]
        %v3023 = vld [vmem:[#allocation13 + $0xac] sm:$0xf]
        %v3024 = vld [vmem:[#allocation13 + $0xb0] sm:$0xf]
        %v3025 = vld [vmem:[#allocation13 + $0xb4] sm:$0xf]
        %v3026 = vld [vmem:[#allocation13 + $0xb8] sm:$0xf]
        %v3027 = vld [vmem:[#allocation13 + $0xbc] sm:$0xf]
        %v3076 = vunpack.c.l.b16 %v2980
        %v3077 = vunpack.c.l.b16 %v2981
        %v3078 = vunpack.c.l.b16 %v2982
        %v3079 = vunpack.c.l.b16 %v2983
        %v3080 = vunpack.c.l.b16 %v2984
        %v3081 = vunpack.c.l.b16 %v2985
        %v3082 = vunpack.c.l.b16 %v2986
        %v3083 = vunpack.c.l.b16 %v2987
        %v3084 = vunpack.c.l.b16 %v2988
        %v3085 = vunpack.c.l.b16 %v2989
        %v3086 = vunpack.c.l.b16 %v2990
        %v3087 = vunpack.c.l.b16 %v2991
        %v3088 = vunpack.c.l.b16 %v2992
        %v3089 = vunpack.c.l.b16 %v2993
        %v3090 = vunpack.c.l.b16 %v2994
        %v3091 = vunpack.c.l.b16 %v2995
        %v3092 = vunpack.c.l.b16 %v2996
        %v3093 = vunpack.c.l.b16 %v2997
        %v3094 = vunpack.c.l.b16 %v2998
        %v3095 = vunpack.c.l.b16 %v2999
        %v3096 = vunpack.c.l.b16 %v3000
        %v3097 = vunpack.c.l.b16 %v3001
        %v3098 = vunpack.c.l.b16 %v3002
        %v3099 = vunpack.c.l.b16 %v3003
        %v3100 = vunpack.c.l.b16 %v3004
        %v3101 = vunpack.c.l.b16 %v3005
        %v3102 = vunpack.c.l.b16 %v3006
        %v3103 = vunpack.c.l.b16 %v3007
        %v3104 = vunpack.c.l.b16 %v3008
        %v3105 = vunpack.c.l.b16 %v3009
        %v3106 = vunpack.c.l.b16 %v3010
        %v3107 = vunpack.c.l.b16 %v3011
        %v3108 = vunpack.c.l.b16 %v3012
        %v3109 = vunpack.c.l.b16 %v3013
        %v3110 = vunpack.c.l.b16 %v3014
        %v3111 = vunpack.c.l.b16 %v3015
        %v3112 = vunpack.c.l.b16 %v3016
        %v3113 = vunpack.c.l.b16 %v3017
        %v3114 = vunpack.c.l.b16 %v3018
        %v3115 = vunpack.c.l.b16 %v3019
        %v3116 = vunpack.c.l.b16 %v3020
        %v3117 = vunpack.c.l.b16 %v3021
        %v3118 = vunpack.c.l.b16 %v3022
        %v3119 = vunpack.c.l.b16 %v3023
        %v3120 = vunpack.c.l.b16 %v3024
        %v3121 = vunpack.c.l.b16 %v3025
        %v3122 = vunpack.c.l.b16 %v3026
        %v3123 = vunpack.c.l.b16 %v3027
        %v3124 = vpack.c.b16 %v3077, %v3076
        %v3125 = vpack.c.b16 %v3079, %v3078
        %v3126 = vpack.c.b16 %v3081, %v3080
        %v3127 = vpack.c.b16 %v3083, %v3082
        %v3128 = vpack.c.b16 %v3085, %v3084
        %v3129 = vpack.c.b16 %v3087, %v3086
        %v3130 = vpack.c.b16 %v3089, %v3088
        %v3131 = vpack.c.b16 %v3091, %v3090
        %v3132 = vpack.c.b16 %v3093, %v3092
        %v3133 = vpack.c.b16 %v3095, %v3094
        %v3134 = vpack.c.b16 %v3097, %v3096
        %v3135 = vpack.c.b16 %v3099, %v3098
        %v3136 = vpack.c.b16 %v3101, %v3100
        %v3137 = vpack.c.b16 %v3103, %v3102
        %v3138 = vpack.c.b16 %v3105, %v3104
        %v3139 = vpack.c.b16 %v3107, %v3106
        %v3140 = vpack.c.b16 %v3109, %v3108
        %v3141 = vpack.c.b16 %v3111, %v3110
        %v3142 = vpack.c.b16 %v3113, %v3112
        %v3143 = vpack.c.b16 %v3115, %v3114
        %v3144 = vpack.c.b16 %v3117, %v3116
        %v3145 = vpack.c.b16 %v3119, %v3118
        %v3146 = vpack.c.b16 %v3121, %v3120
        %v3147 = vpack.c.b16 %v3123, %v3122
        %3172 = vmatprep.subr.bf16.mxu0 0
        %3173 = vmatpush1.bf16.msra.mxu0 %v3124
        %3174 = vmatprep.subr.bf16.mxu0 0
        %3175 = vmatpush1.bf16.msra.mxu0 %v3125
        %3176 = vmatprep.subr.bf16.mxu0 0
        %3177 = vmatpush1.bf16.msra.mxu0 %v3126
        %3178 = vmatprep.subr.bf16.mxu0 0
        %3179 = vmatpush1.bf16.msra.mxu0 %v3127
        %3180 = vmatprep.subr.bf16.mxu0 0
        %3181 = vmatpush1.bf16.msra.mxu0 %v3128
        %3182 = vmatprep.subr.bf16.mxu0 0
        %3183 = vmatpush1.bf16.msra.mxu0 %v3129
        %3184 = vmatprep.subr.bf16.mxu0 0
        %3185 = vmatpush1.bf16.msra.mxu0 %v3130
        %3186 = vmatprep.subr.bf16.mxu0 0
        %3187 = vmatpush1.bf16.msra.mxu0 %v3131
        %3188 = vmatprep.subr.bf16.mxu0 0
        %3189 = vmatpush1.bf16.msra.mxu0 %v3132
        %3190 = vmatprep.subr.bf16.mxu0 0
        %3191 = vmatpush1.bf16.msra.mxu0 %v3133
        %3192 = vmatprep.subr.bf16.mxu0 0
        %3193 = vmatpush1.bf16.msra.mxu0 %v3134
        %3194 = vmatprep.subr.bf16.mxu0 0
        %3195 = vmatpush1.bf16.msra.mxu0 %v3135
        %3196 = vmatprep.subr.bf16.mxu0 0
        %3197 = vmatpush1.bf16.msra.mxu0 %v3136
        %3198 = vmatprep.subr.bf16.mxu0 0
        %3199 = vmatpush1.bf16.msra.mxu0 %v3137
        %3200 = vmatprep.subr.bf16.mxu0 0
        %3201 = vmatpush1.bf16.msra.mxu0 %v3138
        %3202 = vmatprep.subr.bf16.mxu0 0
        %3203 = vmatpush1.bf16.msra.mxu0 %v3139
        %3204 = vmatprep.mubr.bf16.mxu0 %v2770
        %3205 = vmatmul.mubr.bf16.gmra.mrb[0].mxu0 %v2584
        %v3206 = vpop.f32.mrb[0].mxu0
        %v3207 = vadd.f32 0.0, %v3206
        %v3208 = vpop.f32.mrb[0].mxu0
        %v3209 = vpop.f32.mrb[0].mxu0
        %v3210 = vadd.f32 0.0, %v3209
        %v3211 = vpop.f32.mrb[0].mxu0
        %3212 = vmatprep.mubr.bf16.mxu0 %v2771
        %3213 = vmatmul.mubr.bf16.gmra.mrb[0].mxu0 %v2585
        %v3214 = vpop.f32.mrb[0].mxu0
        %v3215 = vadd.f32 0.0, %v3214
        %v3216 = vpop.f32.mrb[0].mxu0
        %v3217 = vpop.f32.mrb[0].mxu0
        %v3218 = vadd.f32 0.0, %v3217
        %v3219 = vpop.f32.mrb[0].mxu0
        %3220 = vmatprep.mubr.bf16.mxu0 %v2772
        %3221 = vmatmul.mubr.bf16.gmra.mrb[0].mxu0 %v2586
        %v3222 = vpop.f32.mrb[0].mxu0
        %v3223 = vadd.f32 0.0, %v3222
        %v3224 = vpop.f32.mrb[0].mxu0
        %v3225 = vpop.f32.mrb[0].mxu0
        %v3226 = vadd.f32 0.0, %v3225
        %v3227 = vpop.f32.mrb[0].mxu0
        %3228 = vmatprep.mubr.bf16.mxu0 %v2773
        %3229 = vmatmul.mubr.bf16.gmra.mrb[0].mxu0 %v2587
        %v3230 = vpop.f32.mrb[0].mxu0
        %v3231 = vadd.f32 0.0, %v3230
        %v3232 = vpop.f32.mrb[0].mxu0
        %v3233 = vpop.f32.mrb[0].mxu0
        %v3234 = vadd.f32 0.0, %v3233
        %v3235 = vpop.f32.mrb[0].mxu0
        %3236 = vmatprep.mubr.bf16.mxu0 %v2774
        %3237 = vmatmul.mubr.bf16.gmra.mrb[0].mxu0 %v2588
        %v3238 = vpop.f32.mrb[0].mxu0
        %v3239 = vadd.f32 0.0, %v3238
        %v3240 = vpop.f32.mrb[0].mxu0
        %v3241 = vpop.f32.mrb[0].mxu0
        %v3242 = vadd.f32 0.0, %v3241
        %v3243 = vpop.f32.mrb[0].mxu0
        %3244 = vmatprep.mubr.bf16.mxu0 %v2775
        %3245 = vmatmul.mubr.bf16.gmra.mrb[0].mxu0 %v2589
        %v3246 = vpop.f32.mrb[0].mxu0
        %v3247 = vadd.f32 0.0, %v3246
        %v3248 = vpop.f32.mrb[0].mxu0
        %v3249 = vpop.f32.mrb[0].mxu0
        %v3250 = vadd.f32 0.0, %v3249
        %v3251 = vpop.f32.mrb[0].mxu0
        %3252 = vmatprep.mubr.bf16.mxu0 %v2776
        %3253 = vmatmul.mubr.bf16.gmra.mrb[0].mxu0 %v2590
        %v3254 = vpop.f32.mrb[0].mxu0
        %v3255 = vadd.f32 0.0, %v3254
        %v3256 = vpop.f32.mrb[0].mxu0
        %v3257 = vpop.f32.mrb[0].mxu0
        %v3258 = vadd.f32 0.0, %v3257
        %v3259 = vpop.f32.mrb[0].mxu0
        %3260 = vmatprep.mubr.bf16.mxu0 %v2777
        %3261 = vmatmul.mubr.bf16.gmra.mrb[0].mxu0 %v2591
        %v3262 = vpop.f32.mrb[0].mxu0
        %v3263 = vadd.f32 0.0, %v3262
        %v3264 = vpop.f32.mrb[0].mxu0
        %v3265 = vpop.f32.mrb[0].mxu0
        %v3266 = vadd.f32 0.0, %v3265
        %v3267 = vpop.f32.mrb[0].mxu0
        %3268 = vdwg.mxu0
        %3269 = vmatprep.subr.bf16.mxu0 0
        %3270 = vmatpush1.bf16.msra.mxu0 %v3140
        %3271 = vmatprep.subr.bf16.mxu0 0
        %3272 = vmatpush1.bf16.msra.mxu0 %v3141
        %3273 = vmatprep.subr.bf16.mxu0 0
        %3274 = vmatpush1.bf16.msra.mxu0 %v3142
        %3275 = vmatprep.subr.bf16.mxu0 0
        %3276 = vmatpush1.bf16.msra.mxu0 %v3143
        %3277 = vmatprep.subr.bf16.mxu0 0
        %3278 = vmatpush1.bf16.msra.mxu0 %v3144
        %3279 = vmatprep.subr.bf16.mxu0 0
        %3280 = vmatpush1.bf16.msra.mxu0 %v3145
        %3281 = vmatprep.subr.bf16.mxu0 0
        %3282 = vmatpush1.bf16.msra.mxu0 %v3146
        %3283 = vmatprep.subr.bf16.mxu0 0
        %3284 = vmatpush1.bf16.msra.mxu0 %v3147
        %3285 = vmatprep.subr.bf16.mxu0 0
        %3286 = vmatpush1.bf16.msra.mxu0 0
        %3287 = vmatprep.subr.bf16.mxu0 0
        %3288 = vmatpush1.bf16.msra.mxu0 0
        %3289 = vmatprep.subr.bf16.mxu0 0
        %3290 = vmatpush1.bf16.msra.mxu0 0
        %3291 = vmatprep.subr.bf16.mxu0 0
        %3292 = vmatpush1.bf16.msra.mxu0 0
        %3293 = vmatprep.subr.bf16.mxu0 0
        %3294 = vmatpush1.bf16.msra.mxu0 0
        %3295 = vmatprep.subr.bf16.mxu0 0
        %3296 = vmatpush1.bf16.msra.mxu0 0
        %3297 = vmatprep.subr.bf16.mxu0 0
        %3298 = vmatpush1.bf16.msra.mxu0 0
        %3299 = vmatprep.subr.bf16.mxu0 0
        %3300 = vmatpush1.bf16.msra.mxu0 0
        %3301 = vmatprep.mubr.bf16.mxu0 0
        %3302 = vmatmul.mubr.bf16.gmra.mrb[0].mxu0 %v2956
        %v3303 = vpop.f32.mrb[0].mxu0
        %v3304 = vadd.f32 %v3207, %v3303
        %v3305 = vpop.f32.mrb[0].mxu0
        %v3306 = vpop.f32.mrb[0].mxu0
        %v3307 = vadd.f32 %v3210, %v3306
        %v3308 = vpop.f32.mrb[0].mxu0
        %3309 = vmatprep.mubr.bf16.mxu0 0
        %3310 = vmatmul.mubr.bf16.gmra.mrb[0].mxu0 %v2957
        %v3311 = vpop.f32.mrb[0].mxu0
        %v3312 = vadd.f32 %v3215, %v3311
        %v3313 = vpop.f32.mrb[0].mxu0
        %v3314 = vpop.f32.mrb[0].mxu0
        %v3315 = vadd.f32 %v3218, %v3314
        %v3316 = vpop.f32.mrb[0].mxu0
        %3317 = vmatprep.mubr.bf16.mxu0 0
        %3318 = vmatmul.mubr.bf16.gmra.mrb[0].mxu0 %v2958
        %v3319 = vpop.f32.mrb[0].mxu0
        %v3320 = vadd.f32 %v3223, %v3319
        %v3321 = vpop.f32.mrb[0].mxu0
        %v3322 = vpop.f32.mrb[0].mxu0
        %v3323 = vadd.f32 %v3226, %v3322
        %v3324 = vpop.f32.mrb[0].mxu0
        %3325 = vmatprep.mubr.bf16.mxu0 0
        %3326 = vmatmul.mubr.bf16.gmra.mrb[0].mxu0 %v2959
        %v3327 = vpop.f32.mrb[0].mxu0
        %v3328 = vadd.f32 %v3231, %v3327
        %v3329 = vpop.f32.mrb[0].mxu0
        %v3330 = vpop.f32.mrb[0].mxu0
        %v3331 = vadd.f32 %v3234, %v3330
        %v3332 = vpop.f32.mrb[0].mxu0
        %3333 = vmatprep.mubr.bf16.mxu0 0
        %3334 = vmatmul.mubr.bf16.gmra.mrb[0].mxu0 %v2960
        %v3335 = vpop.f32.mrb[0].mxu0
        %v3336 = vadd.f32 %v3239, %v3335
        %v3337 = vpop.f32.mrb[0].mxu0
        %v3338 = vpop.f32.mrb[0].mxu0
        %v3339 = vadd.f32 %v3242, %v3338
        %v3340 = vpop.f32.mrb[0].mxu0
        %3341 = vmatprep.mubr.bf16.mxu0 0
        %3342 = vmatmul.mubr.bf16.gmra.mrb[0].mxu0 %v2961
        %v3343 = vpop.f32.mrb[0].mxu0
        %v3344 = vadd.f32 %v3247, %v3343
        %v3345 = vpop.f32.mrb[0].mxu0
        %v3346 = vpop.f32.mrb[0].mxu0
        %v3347 = vadd.f32 %v3250, %v3346
        %v3348 = vpop.f32.mrb[0].mxu0
        %3349 = vmatprep.mubr.bf16.mxu0 0
        %3350 = vmatmul.mubr.bf16.gmra.mrb[0].mxu0 %v2962
        %v3351 = vpop.f32.mrb[0].mxu0
        %v3352 = vadd.f32 %v3255, %v3351
        %v3353 = vpop.f32.mrb[0].mxu0
        %v3354 = vpop.f32.mrb[0].mxu0
        %v3355 = vadd.f32 %v3258, %v3354
        %v3356 = vpop.f32.mrb[0].mxu0
        %3357 = vmatprep.mubr.bf16.mxu0 0
        %3358 = vmatmul.mubr.bf16.gmra.mrb[0].mxu0 %v2963
        %v3359 = vpop.f32.mrb[0].mxu0
        %v3360 = vadd.f32 %v3263, %v3359
        %v3361 = vpop.f32.mrb[0].mxu0
        %v3362 = vpop.f32.mrb[0].mxu0
        %v3363 = vadd.f32 %v3266, %v3362
        %v3364 = vpop.f32.mrb[0].mxu0
        %3365 = vdwg.mxu0
        %v3366 = vadd.f32 %v2964, %v3304
        %v3367 = vadd.f32 %v2965, %v3307
        %v3368 = vadd.f32 %v2966, %v3312
        %v3369 = vadd.f32 %v2967, %v3315
        %v3370 = vadd.f32 %v2968, %v3320
        %v3371 = vadd.f32 %v2969, %v3323
        %v3372 = vadd.f32 %v2970, %v3328
        %v3373 = vadd.f32 %v2971, %v3331
        %v3374 = vadd.f32 %v2972, %v3336
        %v3375 = vadd.f32 %v2973, %v3339
        %v3376 = vadd.f32 %v2974, %v3344
        %v3377 = vadd.f32 %v2975, %v3347
        %v3378 = vadd.f32 %v2976, %v3352
        %v3379 = vadd.f32 %v2977, %v3355
        %v3380 = vadd.f32 %v2978, %v3360
        %v3381 = vadd.f32 %v2979, %v3363
        %v3382 = vxor.u32 %v3366, 2147483648
        %v3383 = vxor.u32 %v3367, 2147483648
        %v3384 = vxor.u32 %v3368, 2147483648
        %v3385 = vxor.u32 %v3369, 2147483648
        %v3386 = vxor.u32 %v3370, 2147483648
        %v3387 = vxor.u32 %v3371, 2147483648
        %v3388 = vxor.u32 %v3372, 2147483648
        %v3389 = vxor.u32 %v3373, 2147483648
        %v3390 = vxor.u32 %v3374, 2147483648
        %v3391 = vxor.u32 %v3375, 2147483648
        %v3392 = vxor.u32 %v3376, 2147483648
        %v3393 = vxor.u32 %v3377, 2147483648
        %v3394 = vxor.u32 %v3378, 2147483648
        %v3395 = vxor.u32 %v3379, 2147483648
        %v3396 = vxor.u32 %v3380, 2147483648
        %v3397 = vxor.u32 %v3381, 2147483648
        %v3398 = vmul.f32 %v3382, 1.442695
        %v3399 = vpow.pop %v3398
        %v3400 = vmul.f32 %v3383, 1.442695
        %v3401 = vpow.pop %v3400
        %v3402 = vmul.f32 %v3384, 1.442695
        %v3403 = vpow.pop %v3402
        %v3404 = vmul.f32 %v3385, 1.442695
        %v3405 = vpow.pop %v3404
        %v3406 = vmul.f32 %v3386, 1.442695
        %v3407 = vpow.pop %v3406
        %v3408 = vmul.f32 %v3387, 1.442695
        %v3409 = vpow.pop %v3408
        %v3410 = vmul.f32 %v3388, 1.442695
        %v3411 = vpow.pop %v3410
        %v3412 = vmul.f32 %v3389, 1.442695
        %v3413 = vpow.pop %v3412
        %v3414 = vmul.f32 %v3390, 1.442695
        %v3415 = vpow.pop %v3414
        %v3416 = vmul.f32 %v3391, 1.442695
        %v3417 = vpow.pop %v3416
        %v3418 = vmul.f32 %v3392, 1.442695
        %v3419 = vpow.pop %v3418
        %v3420 = vmul.f32 %v3393, 1.442695
        %v3421 = vpow.pop %v3420
        %v3422 = vmul.f32 %v3394, 1.442695
        %v3423 = vpow.pop %v3422
        %v3424 = vmul.f32 %v3395, 1.442695
        %v3425 = vpow.pop %v3424
        %v3426 = vmul.f32 %v3396, 1.442695
        %v3427 = vpow.pop %v3426
        %v3428 = vmul.f32 %v3397, 1.442695
        %v3429 = vpow.pop %v3428
        %v3430 = vadd.f32 %v3399, 1.0
        %v3431 = vadd.f32 %v3401, 1.0
        %v3432 = vadd.f32 %v3403, 1.0
        %v3433 = vadd.f32 %v3405, 1.0
        %v3434 = vadd.f32 %v3407, 1.0
        %v3435 = vadd.f32 %v3409, 1.0
        %v3436 = vadd.f32 %v3411, 1.0
        %v3437 = vadd.f32 %v3413, 1.0
        %v3438 = vadd.f32 %v3415, 1.0
        %v3439 = vadd.f32 %v3417, 1.0
        %v3440 = vadd.f32 %v3419, 1.0
        %v3441 = vadd.f32 %v3421, 1.0
        %v3442 = vadd.f32 %v3423, 1.0
        %v3443 = vadd.f32 %v3425, 1.0
        %v3444 = vadd.f32 %v3427, 1.0
        %v3445 = vadd.f32 %v3429, 1.0
        %v3446 = vrcp.pop %v3430
        %v3447 = vmul.f32 1.0, %v3446
        %v3448 = vrcp.pop %v3431
        %v3449 = vmul.f32 1.0, %v3448
        %v3450 = vrcp.pop %v3432
        %v3451 = vmul.f32 1.0, %v3450
        %v3452 = vrcp.pop %v3433
        %v3453 = vmul.f32 1.0, %v3452
        %v3454 = vrcp.pop %v3434
        %v3455 = vmul.f32 1.0, %v3454
        %v3456 = vrcp.pop %v3435
        %v3457 = vmul.f32 1.0, %v3456
        %v3458 = vrcp.pop %v3436
        %v3459 = vmul.f32 1.0, %v3458
        %v3460 = vrcp.pop %v3437
        %v3461 = vmul.f32 1.0, %v3460
        %v3462 = vrcp.pop %v3438
        %v3463 = vmul.f32 1.0, %v3462
        %v3464 = vrcp.pop %v3439
        %v3465 = vmul.f32 1.0, %v3464
        %v3466 = vrcp.pop %v3440
        %v3467 = vmul.f32 1.0, %v3466
        %v3468 = vrcp.pop %v3441
        %v3469 = vmul.f32 1.0, %v3468
        %v3470 = vrcp.pop %v3442
        %v3471 = vmul.f32 1.0, %v3470
        %v3472 = vrcp.pop %v3443
        %v3473 = vmul.f32 1.0, %v3472
        %v3474 = vrcp.pop %v3444
        %v3475 = vmul.f32 1.0, %v3474
        %v3476 = vrcp.pop %v3445
        %v3477 = vmul.f32 1.0, %v3476
        %v3478 = vmul.f32 %v3366, %v3447
        %v3479 = vmul.f32 %v3367, %v3449
        %v3480 = vmul.f32 %v3368, %v3451
        %v3481 = vmul.f32 %v3369, %v3453
        %v3482 = vmul.f32 %v3370, %v3455
        %v3483 = vmul.f32 %v3371, %v3457
        %v3484 = vmul.f32 %v3372, %v3459
        %v3485 = vmul.f32 %v3373, %v3461
        %v3486 = vmul.f32 %v3374, %v3463
        %v3487 = vmul.f32 %v3375, %v3465
        %v3488 = vmul.f32 %v3376, %v3467
        %v3489 = vmul.f32 %v3377, %v3469
        %v3490 = vmul.f32 %v3378, %v3471
        %v3491 = vmul.f32 %v3379, %v3473
        %v3492 = vmul.f32 %v3380, %v3475
        %v3493 = vmul.f32 %v3381, %v3477
        %v3510 = vrot.slane %v3478, 7
        %v3511 = vrot.slane %v3479, 7
        %v3512 = vsel %vm1778, %v3510, %v3511
        %v3513 = vrot.slane %v3480, 7
        %v3514 = vsel %vm1778, %v3511, %v3513
        %v3515 = vrot.slane %v3481, 7
        %v3516 = vsel %vm1778, %v3513, %v3515
        %v3517 = vrot.slane %v3482, 7
        %v3518 = vsel %vm1778, %v3515, %v3517
        %v3519 = vrot.slane %v3483, 7
        %v3520 = vsel %vm1778, %v3517, %v3519
        %v3521 = vrot.slane %v3484, 7
        %v3522 = vsel %vm1778, %v3519, %v3521
        %v3523 = vrot.slane %v3485, 7
        %v3524 = vsel %vm1778, %v3521, %v3523
        %v3525 = vrot.slane %v3486, 7
        %v3526 = vsel %vm1778, %v3523, %v3525
        %v3527 = vrot.slane %v3487, 7
        %v3528 = vsel %vm1778, %v3525, %v3527
        %v3529 = vrot.slane %v3488, 7
        %v3530 = vsel %vm1778, %v3527, %v3529
        %v3531 = vrot.slane %v3489, 7
        %v3532 = vsel %vm1778, %v3529, %v3531
        %v3533 = vrot.slane %v3490, 7
        %v3534 = vsel %vm1778, %v3531, %v3533
        %v3535 = vrot.slane %v3491, 7
        %v3536 = vsel %vm1778, %v3533, %v3535
        %v3537 = vrot.slane %v3492, 7
        %v3538 = vsel %vm1778, %v3535, %v3537
        %v3539 = vrot.slane %v3493, 7
        %v3540 = vsel %vm1778, %v3537, %v3539
        %v3557 = vsel %vm1778, 0.0, %v3510
        %v3558 = vrot.slane %v3478, 1
        %v3559 = vrot.slane %v3479, 1
        %v3560 = vsel %vm1803, %v3558, %v3559
        %v3561 = vrot.slane %v3480, 1
        %v3562 = vsel %vm1803, %v3559, %v3561
        %v3563 = vrot.slane %v3481, 1
        %v3564 = vsel %vm1803, %v3561, %v3563
        %v3565 = vrot.slane %v3482, 1
        %v3566 = vsel %vm1803, %v3563, %v3565
        %v3567 = vrot.slane %v3483, 1
        %v3568 = vsel %vm1803, %v3565, %v3567
        %v3569 = vrot.slane %v3484, 1
        %v3570 = vsel %vm1803, %v3567, %v3569
        %v3571 = vrot.slane %v3485, 1
        %v3572 = vsel %vm1803, %v3569, %v3571
        %v3573 = vrot.slane %v3486, 1
        %v3574 = vsel %vm1803, %v3571, %v3573
        %v3575 = vrot.slane %v3487, 1
        %v3576 = vsel %vm1803, %v3573, %v3575
        %v3577 = vrot.slane %v3488, 1
        %v3578 = vsel %vm1803, %v3575, %v3577
        %v3579 = vrot.slane %v3489, 1
        %v3580 = vsel %vm1803, %v3577, %v3579
        %v3581 = vrot.slane %v3490, 1
        %v3582 = vsel %vm1803, %v3579, %v3581
        %v3583 = vrot.slane %v3491, 1
        %v3584 = vsel %vm1803, %v3581, %v3583
        %v3585 = vrot.slane %v3492, 1
        %v3586 = vsel %vm1803, %v3583, %v3585
        %v3587 = vrot.slane %v3493, 1
        %v3588 = vsel %vm1803, %v3585, %v3587
        %v3605 = vsel %vm1803, %v3587, 0.0
        %v3606 = vadd.s32 %v1829, 64
        %v3607 = vadd.s32 %v1829, 72
        %v3608 = vadd.s32 %v1829, 80
        %v3609 = vadd.s32 %v1829, 88
        %v3610 = vadd.s32 %v1829, 96
        %v3611 = vadd.s32 %v1829, 104
        %v3612 = vadd.s32 %v1829, 112
        %v3613 = vadd.s32 %v1829, 120
        %vm3614 = vcmp.lt.s32.totalorder %v1829, 0
        %v3615 = vsub.s32 0, %v1829
        %v3616 = vsel %vm3614, %v3615, %v1829
        %v3617 = vshrl.u32 %v3616, 4
        %v3618 = vand.u32 %v3616, 15
        %v3619 = vsub.s32 0, %v3618
        %v3620 = vsel %vm3614, %v3619, %v3618
        %vm3621 = vcmp.lt.s32.totalorder %v1830, 0
        %v3622 = vsub.s32 0, %v1830
        %v3623 = vsel %vm3621, %v3622, %v1830
        %v3624 = vshrl.u32 %v3623, 4
        %v3625 = vand.u32 %v3623, 15
        %v3626 = vsub.s32 0, %v3625
        %v3627 = vsel %vm3621, %v3626, %v3625
        %vm3628 = vcmp.lt.s32.totalorder %v1831, 0
        %v3629 = vsub.s32 0, %v1831
        %v3630 = vsel %vm3628, %v3629, %v1831
        %v3631 = vshrl.u32 %v3630, 4
        %v3632 = vand.u32 %v3630, 15
        %v3633 = vsub.s32 0, %v3632
        %v3634 = vsel %vm3628, %v3633, %v3632
        %vm3635 = vcmp.lt.s32.totalorder %v1832, 0
        %v3636 = vsub.s32 0, %v1832
        %v3637 = vsel %vm3635, %v3636, %v1832
        %v3638 = vshrl.u32 %v3637, 4
        %v3639 = vand.u32 %v3637, 15
        %v3640 = vsub.s32 0, %v3639
        %v3641 = vsel %vm3635, %v3640, %v3639
        %vm3642 = vcmp.lt.s32.totalorder %v1833, 0
        %v3643 = vsub.s32 0, %v1833
        %v3644 = vsel %vm3642, %v3643, %v1833
        %v3645 = vshrl.u32 %v3644, 4
        %v3646 = vand.u32 %v3644, 15
        %v3647 = vsub.s32 0, %v3646
        %v3648 = vsel %vm3642, %v3647, %v3646
        %vm3649 = vcmp.lt.s32.totalorder %v1834, 0
        %v3650 = vsub.s32 0, %v1834
        %v3651 = vsel %vm3649, %v3650, %v1834
        %v3652 = vshrl.u32 %v3651, 4
        %v3653 = vand.u32 %v3651, 15
        %v3654 = vsub.s32 0, %v3653
        %v3655 = vsel %vm3649, %v3654, %v3653
        %vm3656 = vcmp.lt.s32.totalorder %v1835, 0
        %v3657 = vsub.s32 0, %v1835
        %v3658 = vsel %vm3656, %v3657, %v1835
        %v3659 = vshrl.u32 %v3658, 4
        %v3660 = vand.u32 %v3658, 15
        %v3661 = vsub.s32 0, %v3660
        %v3662 = vsel %vm3656, %v3661, %v3660
        %vm3663 = vcmp.lt.s32.totalorder %v1836, 0
        %v3664 = vsub.s32 0, %v1836
        %v3665 = vsel %vm3663, %v3664, %v1836
        %v3666 = vshrl.u32 %v3665, 4
        %v3667 = vand.u32 %v3665, 15
        %v3668 = vsub.s32 0, %v3667
        %v3669 = vsel %vm3663, %v3668, %v3667
        %vm3670 = vcmp.lt.s32.totalorder %v3606, 0
        %v3671 = vsub.s32 0, %v3606
        %v3672 = vsel %vm3670, %v3671, %v3606
        %v3673 = vshrl.u32 %v3672, 4
        %v3674 = vand.u32 %v3672, 15
        %v3675 = vsub.s32 0, %v3674
        %v3676 = vsel %vm3670, %v3675, %v3674
        %vm3677 = vcmp.lt.s32.totalorder %v3607, 0
        %v3678 = vsub.s32 0, %v3607
        %v3679 = vsel %vm3677, %v3678, %v3607
        %v3680 = vshrl.u32 %v3679, 4
        %v3681 = vand.u32 %v3679, 15
        %v3682 = vsub.s32 0, %v3681
        %v3683 = vsel %vm3677, %v3682, %v3681
        %vm3684 = vcmp.lt.s32.totalorder %v3608, 0
        %v3685 = vsub.s32 0, %v3608
        %v3686 = vsel %vm3684, %v3685, %v3608
        %v3687 = vshrl.u32 %v3686, 4
        %v3688 = vand.u32 %v3686, 15
        %v3689 = vsub.s32 0, %v3688
        %v3690 = vsel %vm3684, %v3689, %v3688
        %vm3691 = vcmp.lt.s32.totalorder %v3609, 0
        %v3692 = vsub.s32 0, %v3609
        %v3693 = vsel %vm3691, %v3692, %v3609
        %v3694 = vshrl.u32 %v3693, 4
        %v3695 = vand.u32 %v3693, 15
        %v3696 = vsub.s32 0, %v3695
        %v3697 = vsel %vm3691, %v3696, %v3695
        %vm3698 = vcmp.lt.s32.totalorder %v3610, 0
        %v3699 = vsub.s32 0, %v3610
        %v3700 = vsel %vm3698, %v3699, %v3610
        %v3701 = vshrl.u32 %v3700, 4
        %v3702 = vand.u32 %v3700, 15
        %v3703 = vsub.s32 0, %v3702
        %v3704 = vsel %vm3698, %v3703, %v3702
        %vm3705 = vcmp.lt.s32.totalorder %v3611, 0
        %v3706 = vsub.s32 0, %v3611
        %v3707 = vsel %vm3705, %v3706, %v3611
        %v3708 = vshrl.u32 %v3707, 4
        %v3709 = vand.u32 %v3707, 15
        %v3710 = vsub.s32 0, %v3709
        %v3711 = vsel %vm3705, %v3710, %v3709
        %vm3712 = vcmp.lt.s32.totalorder %v3612, 0
        %v3713 = vsub.s32 0, %v3612
        %v3714 = vsel %vm3712, %v3713, %v3612
        %v3715 = vshrl.u32 %v3714, 4
        %v3716 = vand.u32 %v3714, 15
        %v3717 = vsub.s32 0, %v3716
        %v3718 = vsel %vm3712, %v3717, %v3716
        %vm3719 = vcmp.lt.s32.totalorder %v3613, 0
        %v3720 = vsub.s32 0, %v3613
        %v3721 = vsel %vm3719, %v3720, %v3613
        %v3722 = vshrl.u32 %v3721, 4
        %v3723 = vand.u32 %v3721, 15
        %v3724 = vsub.s32 0, %v3723
        %v3725 = vsel %vm3719, %v3724, %v3723
        %vm3726 = vcmp.ne.s32.totalorder %v3620, 0
        %vm3727 = vcmp.ne.s32.totalorder %v3627, 0
        %vm3728 = vcmp.ne.s32.totalorder %v3634, 0
        %vm3729 = vcmp.ne.s32.totalorder %v3641, 0
        %vm3730 = vcmp.ne.s32.totalorder %v3648, 0
        %vm3731 = vcmp.ne.s32.totalorder %v3655, 0
        %vm3732 = vcmp.ne.s32.totalorder %v3662, 0
        %vm3733 = vcmp.ne.s32.totalorder %v3669, 0
        %vm3734 = vcmp.ne.s32.totalorder %v3676, 0
        %vm3735 = vcmp.ne.s32.totalorder %v3683, 0
        %vm3736 = vcmp.ne.s32.totalorder %v3690, 0
        %vm3737 = vcmp.ne.s32.totalorder %v3697, 0
        %vm3738 = vcmp.ne.s32.totalorder %v3704, 0
        %vm3739 = vcmp.ne.s32.totalorder %v3711, 0
        %vm3740 = vcmp.ne.s32.totalorder %v3718, 0
        %vm3741 = vcmp.ne.s32.totalorder %v3725, 0
        %vm3742 = vcmp.lt.s32.totalorder %v3620, 0
        %vm3743 = vcmp.lt.s32.totalorder %v3627, 0
        %vm3744 = vcmp.lt.s32.totalorder %v3634, 0
        %vm3745 = vcmp.lt.s32.totalorder %v3641, 0
        %vm3746 = vcmp.lt.s32.totalorder %v3648, 0
        %vm3747 = vcmp.lt.s32.totalorder %v3655, 0
        %vm3748 = vcmp.lt.s32.totalorder %v3662, 0
        %vm3749 = vcmp.lt.s32.totalorder %v3669, 0
        %vm3750 = vcmp.lt.s32.totalorder %v3676, 0
        %vm3751 = vcmp.lt.s32.totalorder %v3683, 0
        %vm3752 = vcmp.lt.s32.totalorder %v3690, 0
        %vm3753 = vcmp.lt.s32.totalorder %v3697, 0
        %vm3754 = vcmp.lt.s32.totalorder %v3704, 0
        %vm3755 = vcmp.lt.s32.totalorder %v3711, 0
        %vm3756 = vcmp.lt.s32.totalorder %v3718, 0
        %vm3757 = vcmp.lt.s32.totalorder %v3725, 0
        %vm3758 = vmand %vm3742, %vm3726
        %vm3759 = vmand %vm3743, %vm3727
        %vm3760 = vmand %vm3744, %vm3728
        %vm3761 = vmand %vm3745, %vm3729
        %vm3762 = vmand %vm3746, %vm3730
        %vm3763 = vmand %vm3747, %vm3731
        %vm3764 = vmand %vm3748, %vm3732
        %vm3765 = vmand %vm3749, %vm3733
        %vm3766 = vmand %vm3750, %vm3734
        %vm3767 = vmand %vm3751, %vm3735
        %vm3768 = vmand %vm3752, %vm3736
        %vm3769 = vmand %vm3753, %vm3737
        %vm3770 = vmand %vm3754, %vm3738
        %vm3771 = vmand %vm3755, %vm3739
        %vm3772 = vmand %vm3756, %vm3740
        %vm3773 = vmand %vm3757, %vm3741
        %v3774 = vadd.s32 %v3620, 16
        %v3775 = vadd.s32 %v3627, 16
        %v3776 = vadd.s32 %v3634, 16
        %v3777 = vadd.s32 %v3641, 16
        %v3778 = vadd.s32 %v3648, 16
        %v3779 = vadd.s32 %v3655, 16
        %v3780 = vadd.s32 %v3662, 16
        %v3781 = vadd.s32 %v3669, 16
        %v3782 = vadd.s32 %v3676, 16
        %v3783 = vadd.s32 %v3683, 16
        %v3784 = vadd.s32 %v3690, 16
        %v3785 = vadd.s32 %v3697, 16
        %v3786 = vadd.s32 %v3704, 16
        %v3787 = vadd.s32 %v3711, 16
        %v3788 = vadd.s32 %v3718, 16
        %v3789 = vadd.s32 %v3725, 16
        %v3790 = vsel %vm3758, %v3774, %v3620
        %v3791 = vsel %vm3759, %v3775, %v3627
        %v3792 = vsel %vm3760, %v3776, %v3634
        %v3793 = vsel %vm3761, %v3777, %v3641
        %v3794 = vsel %vm3762, %v3778, %v3648
        %v3795 = vsel %vm3763, %v3779, %v3655
        %v3796 = vsel %vm3764, %v3780, %v3662
        %v3797 = vsel %vm3765, %v3781, %v3669
        %v3798 = vsel %vm3766, %v3782, %v3676
        %v3799 = vsel %vm3767, %v3783, %v3683
        %v3800 = vsel %vm3768, %v3784, %v3690
        %v3801 = vsel %vm3769, %v3785, %v3697
        %v3802 = vsel %vm3770, %v3786, %v3704
        %v3803 = vsel %vm3771, %v3787, %v3711
        %v3804 = vsel %vm3772, %v3788, %v3718
        %v3805 = vsel %vm3773, %v3789, %v3725
        %vm3806 = vcmp.eq.s32.totalorder %v3790, 0
        %vm3807 = vcmp.eq.s32.totalorder %v3791, 0
        %vm3808 = vcmp.eq.s32.totalorder %v3792, 0
        %vm3809 = vcmp.eq.s32.totalorder %v3793, 0
        %vm3810 = vcmp.eq.s32.totalorder %v3794, 0
        %vm3811 = vcmp.eq.s32.totalorder %v3795, 0
        %vm3812 = vcmp.eq.s32.totalorder %v3796, 0
        %vm3813 = vcmp.eq.s32.totalorder %v3797, 0
        %vm3814 = vcmp.eq.s32.totalorder %v3798, 0
        %vm3815 = vcmp.eq.s32.totalorder %v3799, 0
        %vm3816 = vcmp.eq.s32.totalorder %v3800, 0
        %vm3817 = vcmp.eq.s32.totalorder %v3801, 0
        %vm3818 = vcmp.eq.s32.totalorder %v3802, 0
        %vm3819 = vcmp.eq.s32.totalorder %v3803, 0
        %vm3820 = vcmp.eq.s32.totalorder %v3804, 0
        %vm3821 = vcmp.eq.s32.totalorder %v3805, 0
        %v3822 = vsel %vm3806, 1, 0
        %v3823 = vsel %vm3807, 1, 0
        %v3824 = vsel %vm3808, 1, 0
        %v3825 = vsel %vm3809, 1, 0
        %v3826 = vsel %vm3810, 1, 0
        %v3827 = vsel %vm3811, 1, 0
        %v3828 = vsel %vm3812, 1, 0
        %v3829 = vsel %vm3813, 1, 0
        %v3830 = vsel %vm3814, 1, 0
        %v3831 = vsel %vm3815, 1, 0
        %v3832 = vsel %vm3816, 1, 0
        %v3833 = vsel %vm3817, 1, 0
        %v3834 = vsel %vm3818, 1, 0
        %v3835 = vsel %vm3819, 1, 0
        %v3836 = vsel %vm3820, 1, 0
        %v3837 = vsel %vm3821, 1, 0
        %vm3838 = vcmp.eq.s32.totalorder %v3822, 1
        %vm3839 = vcmp.eq.s32.totalorder %v3823, 1
        %vm3840 = vcmp.eq.s32.totalorder %v3824, 1
        %vm3841 = vcmp.eq.s32.totalorder %v3825, 1
        %vm3842 = vcmp.eq.s32.totalorder %v3826, 1
        %vm3843 = vcmp.eq.s32.totalorder %v3827, 1
        %vm3844 = vcmp.eq.s32.totalorder %v3828, 1
        %vm3845 = vcmp.eq.s32.totalorder %v3829, 1
        %vm3846 = vcmp.eq.s32.totalorder %v3830, 1
        %vm3847 = vcmp.eq.s32.totalorder %v3831, 1
        %vm3848 = vcmp.eq.s32.totalorder %v3832, 1
        %vm3849 = vcmp.eq.s32.totalorder %v3833, 1
        %vm3850 = vcmp.eq.s32.totalorder %v3834, 1
        %vm3851 = vcmp.eq.s32.totalorder %v3835, 1
        %vm3852 = vcmp.eq.s32.totalorder %v3836, 1
        %vm3853 = vcmp.eq.s32.totalorder %v3837, 1
        %v3854 = vsel %vm3838, 0.0, %v3557
        %v3855 = vsel %vm3839, 0.0, %v3512
        %v3856 = vsel %vm3840, 0.0, %v3514
        %v3857 = vsel %vm3841, 0.0, %v3516
        %v3858 = vsel %vm3842, 0.0, %v3518
        %v3859 = vsel %vm3843, 0.0, %v3520
        %v3860 = vsel %vm3844, 0.0, %v3522
        %v3861 = vsel %vm3845, 0.0, %v3524
        %v3862 = vsel %vm3846, 0.0, %v3526
        %v3863 = vsel %vm3847, 0.0, %v3528
        %v3864 = vsel %vm3848, 0.0, %v3530
        %v3865 = vsel %vm3849, 0.0, %v3532
        %v3866 = vsel %vm3850, 0.0, %v3534
        %v3867 = vsel %vm3851, 0.0, %v3536
        %v3868 = vsel %vm3852, 0.0, %v3538
        %v3869 = vsel %vm3853, 0.0, %v3540
        %vm3870 = vcmp.eq.s32.totalorder %v3790, 15
        %vm3871 = vcmp.eq.s32.totalorder %v3791, 15
        %vm3872 = vcmp.eq.s32.totalorder %v3792, 15
        %vm3873 = vcmp.eq.s32.totalorder %v3793, 15
        %vm3874 = vcmp.eq.s32.totalorder %v3794, 15
        %vm3875 = vcmp.eq.s32.totalorder %v3795, 15
        %vm3876 = vcmp.eq.s32.totalorder %v3796, 15
        %vm3877 = vcmp.eq.s32.totalorder %v3797, 15
        %vm3878 = vcmp.eq.s32.totalorder %v3798, 15
        %vm3879 = vcmp.eq.s32.totalorder %v3799, 15
        %vm3880 = vcmp.eq.s32.totalorder %v3800, 15
        %vm3881 = vcmp.eq.s32.totalorder %v3801, 15
        %vm3882 = vcmp.eq.s32.totalorder %v3802, 15
        %vm3883 = vcmp.eq.s32.totalorder %v3803, 15
        %vm3884 = vcmp.eq.s32.totalorder %v3804, 15
        %vm3885 = vcmp.eq.s32.totalorder %v3805, 15
        %v3886 = vsel %vm3870, 1, 0
        %v3887 = vsel %vm3871, 1, 0
        %v3888 = vsel %vm3872, 1, 0
        %v3889 = vsel %vm3873, 1, 0
        %v3890 = vsel %vm3874, 1, 0
        %v3891 = vsel %vm3875, 1, 0
        %v3892 = vsel %vm3876, 1, 0
        %v3893 = vsel %vm3877, 1, 0
        %v3894 = vsel %vm3878, 1, 0
        %v3895 = vsel %vm3879, 1, 0
        %v3896 = vsel %vm3880, 1, 0
        %v3897 = vsel %vm3881, 1, 0
        %v3898 = vsel %vm3882, 1, 0
        %v3899 = vsel %vm3883, 1, 0
        %v3900 = vsel %vm3884, 1, 0
        %v3901 = vsel %vm3885, 1, 0
        %vm3902 = vcmp.eq.s32.totalorder %v3886, 1
        %vm3903 = vcmp.eq.s32.totalorder %v3887, 1
        %vm3904 = vcmp.eq.s32.totalorder %v3888, 1
        %vm3905 = vcmp.eq.s32.totalorder %v3889, 1
        %vm3906 = vcmp.eq.s32.totalorder %v3890, 1
        %vm3907 = vcmp.eq.s32.totalorder %v3891, 1
        %vm3908 = vcmp.eq.s32.totalorder %v3892, 1
        %vm3909 = vcmp.eq.s32.totalorder %v3893, 1
        %vm3910 = vcmp.eq.s32.totalorder %v3894, 1
        %vm3911 = vcmp.eq.s32.totalorder %v3895, 1
        %vm3912 = vcmp.eq.s32.totalorder %v3896, 1
        %vm3913 = vcmp.eq.s32.totalorder %v3897, 1
        %vm3914 = vcmp.eq.s32.totalorder %v3898, 1
        %vm3915 = vcmp.eq.s32.totalorder %v3899, 1
        %vm3916 = vcmp.eq.s32.totalorder %v3900, 1
        %vm3917 = vcmp.eq.s32.totalorder %v3901, 1
        %v3918 = vsel %vm3902, 0.0, %v3560
        %v3919 = vsel %vm3903, 0.0, %v3562
        %v3920 = vsel %vm3904, 0.0, %v3564
        %v3921 = vsel %vm3905, 0.0, %v3566
        %v3922 = vsel %vm3906, 0.0, %v3568
        %v3923 = vsel %vm3907, 0.0, %v3570
        %v3924 = vsel %vm3908, 0.0, %v3572
        %v3925 = vsel %vm3909, 0.0, %v3574
        %v3926 = vsel %vm3910, 0.0, %v3576
        %v3927 = vsel %vm3911, 0.0, %v3578
        %v3928 = vsel %vm3912, 0.0, %v3580
        %v3929 = vsel %vm3913, 0.0, %v3582
        %v3930 = vsel %vm3914, 0.0, %v3584
        %v3931 = vsel %vm3915, 0.0, %v3586
        %v3932 = vsel %vm3916, 0.0, %v3588
        %v3933 = vsel %vm3917, 0.0, %v3605
        %v3934 = vpack.c.bf16 %v3855, %v3854
        %v3935 = vpack.c.bf16 %v3479, %v3478
        %v3936 = vpack.c.bf16 %v3919, %v3918
        %v3937 = vpack.c.bf16 %v3857, %v3856
        %v3938 = vpack.c.bf16 %v3481, %v3480
        %v3939 = vpack.c.bf16 %v3921, %v3920
        %v3940 = vpack.c.bf16 %v3859, %v3858
        %v3941 = vpack.c.bf16 %v3483, %v3482
        %v3942 = vpack.c.bf16 %v3923, %v3922
        %v3943 = vpack.c.bf16 %v3861, %v3860
        %v3944 = vpack.c.bf16 %v3485, %v3484
        %v3945 = vpack.c.bf16 %v3925, %v3924
        %v3946 = vpack.c.bf16 %v3863, %v3862
        %v3947 = vpack.c.bf16 %v3487, %v3486
        %v3948 = vpack.c.bf16 %v3927, %v3926
        %v3949 = vpack.c.bf16 %v3865, %v3864
        %v3950 = vpack.c.bf16 %v3489, %v3488
        %v3951 = vpack.c.bf16 %v3929, %v3928
        %v3952 = vpack.c.bf16 %v3867, %v3866
        %v3953 = vpack.c.bf16 %v3491, %v3490
        %v3954 = vpack.c.bf16 %v3931, %v3930
        %v3955 = vpack.c.bf16 %v3869, %v3868
        %v3956 = vpack.c.bf16 %v3493, %v3492
        %v3957 = vpack.c.bf16 %v3933, %v3932
        %v3958 = vld [vmem:[#allocation18] sm:$0xff]
        %v3959 = vld [vmem:[#allocation18 + $0x8] sm:$0xff]
        %v3960 = vld [vmem:[#allocation18 + $0x10] sm:$0xff]
        %v3961 = vld [vmem:[#allocation18 + $0x18] sm:$0xff]
        %v3962 = vld [vmem:[#allocation18 + $0x20] sm:$0xff]
        %v3963 = vld [vmem:[#allocation18 + $0x28] sm:$0xff]
        %v3964 = vld [vmem:[#allocation18 + $0x30] sm:$0xff]
        %v3965 = vld [vmem:[#allocation18 + $0x38] sm:$0xff]
        %v3966 = vld [vmem:[#allocation18 + $0x40] sm:$0xff]
        %v3967 = vld [vmem:[#allocation18 + $0x48] sm:$0xff]
        %v3968 = vld [vmem:[#allocation18 + $0x50] sm:$0xff]
        %v3969 = vld [vmem:[#allocation18 + $0x58] sm:$0xff]
        %v3970 = vld [vmem:[#allocation18 + $0x60] sm:$0xff]
        %v3971 = vld [vmem:[#allocation18 + $0x68] sm:$0xff]
        %v3972 = vld [vmem:[#allocation18 + $0x70] sm:$0xff]
        %v3973 = vld [vmem:[#allocation18 + $0x78] sm:$0xff]
        %v3974 = vld [vmem:[#allocation16] sm:$0xf]
        %v3975 = vld [vmem:[#allocation16 + $0x4] sm:$0xf]
        %v3976 = vld [vmem:[#allocation16 + $0x8] sm:$0xf]
        %v3977 = vld [vmem:[#allocation16 + $0xc] sm:$0xf]
        %v3978 = vld [vmem:[#allocation16 + $0x10] sm:$0xf]
        %v3979 = vld [vmem:[#allocation16 + $0x14] sm:$0xf]
        %v3980 = vld [vmem:[#allocation16 + $0x18] sm:$0xf]
        %v3981 = vld [vmem:[#allocation16 + $0x1c] sm:$0xf]
        %v3982 = vld [vmem:[#allocation16 + $0x20] sm:$0xf]
        %v3983 = vld [vmem:[#allocation16 + $0x24] sm:$0xf]
        %v3984 = vld [vmem:[#allocation16 + $0x28] sm:$0xf]
        %v3985 = vld [vmem:[#allocation16 + $0x2c] sm:$0xf]
        %v3986 = vld [vmem:[#allocation16 + $0x30] sm:$0xf]
        %v3987 = vld [vmem:[#allocation16 + $0x34] sm:$0xf]
        %v3988 = vld [vmem:[#allocation16 + $0x38] sm:$0xf]
        %v3989 = vld [vmem:[#allocation16 + $0x3c] sm:$0xf]
        %v3990 = vld [vmem:[#allocation16 + $0x40] sm:$0xf]
        %v3991 = vld [vmem:[#allocation16 + $0x44] sm:$0xf]
        %v3992 = vld [vmem:[#allocation16 + $0x48] sm:$0xf]
        %v3993 = vld [vmem:[#allocation16 + $0x4c] sm:$0xf]
        %v3994 = vld [vmem:[#allocation16 + $0x50] sm:$0xf]
        %v3995 = vld [vmem:[#allocation16 + $0x54] sm:$0xf]
        %v3996 = vld [vmem:[#allocation16 + $0x58] sm:$0xf]
        %v3997 = vld [vmem:[#allocation16 + $0x5c] sm:$0xf]
        %v3998 = vld [vmem:[#allocation16 + $0x60] sm:$0xf]
        %v3999 = vld [vmem:[#allocation16 + $0x64] sm:$0xf]
        %v4000 = vld [vmem:[#allocation16 + $0x68] sm:$0xf]
        %v4001 = vld [vmem:[#allocation16 + $0x6c] sm:$0xf]
        %v4002 = vld [vmem:[#allocation16 + $0x70] sm:$0xf]
        %v4003 = vld [vmem:[#allocation16 + $0x74] sm:$0xf]
        %v4004 = vld [vmem:[#allocation16 + $0x78] sm:$0xf]
        %v4005 = vld [vmem:[#allocation16 + $0x7c] sm:$0xf]
        %v4006 = vld [vmem:[#allocation16 + $0x80] sm:$0xf]
        %v4007 = vld [vmem:[#allocation16 + $0x84] sm:$0xf]
        %v4008 = vld [vmem:[#allocation16 + $0x88] sm:$0xf]
        %v4009 = vld [vmem:[#allocation16 + $0x8c] sm:$0xf]
        %v4010 = vld [vmem:[#allocation16 + $0x90] sm:$0xf]
        %v4011 = vld [vmem:[#allocation16 + $0x94] sm:$0xf]
        %v4012 = vld [vmem:[#allocation16 + $0x98] sm:$0xf]
        %v4013 = vld [vmem:[#allocation16 + $0x9c] sm:$0xf]
        %v4014 = vld [vmem:[#allocation16 + $0xa0] sm:$0xf]
        %v4015 = vld [vmem:[#allocation16 + $0xa4] sm:$0xf]
        %v4016 = vld [vmem:[#allocation16 + $0xa8] sm:$0xf]
        %v4017 = vld [vmem:[#allocation16 + $0xac] sm:$0xf]
        %v4018 = vld [vmem:[#allocation16 + $0xb0] sm:$0xf]
        %v4019 = vld [vmem:[#allocation16 + $0xb4] sm:$0xf]
        %v4020 = vld [vmem:[#allocation16 + $0xb8] sm:$0xf]
        %v4021 = vld [vmem:[#allocation16 + $0xbc] sm:$0xf]
        %v4070 = vunpack.c.l.b16 %v3974
        %v4071 = vunpack.c.l.b16 %v3975
        %v4072 = vunpack.c.l.b16 %v3976
        %v4073 = vunpack.c.l.b16 %v3977
        %v4074 = vunpack.c.l.b16 %v3978
        %v4075 = vunpack.c.l.b16 %v3979
        %v4076 = vunpack.c.l.b16 %v3980
        %v4077 = vunpack.c.l.b16 %v3981
        %v4078 = vunpack.c.l.b16 %v3982
        %v4079 = vunpack.c.l.b16 %v3983
        %v4080 = vunpack.c.l.b16 %v3984
        %v4081 = vunpack.c.l.b16 %v3985
        %v4082 = vunpack.c.l.b16 %v3986
        %v4083 = vunpack.c.l.b16 %v3987
        %v4084 = vunpack.c.l.b16 %v3988
        %v4085 = vunpack.c.l.b16 %v3989
        %v4086 = vunpack.c.l.b16 %v3990
        %v4087 = vunpack.c.l.b16 %v3991
        %v4088 = vunpack.c.l.b16 %v3992
        %v4089 = vunpack.c.l.b16 %v3993
        %v4090 = vunpack.c.l.b16 %v3994
        %v4091 = vunpack.c.l.b16 %v3995
        %v4092 = vunpack.c.l.b16 %v3996
        %v4093 = vunpack.c.l.b16 %v3997
        %v4094 = vunpack.c.l.b16 %v3998
        %v4095 = vunpack.c.l.b16 %v3999
        %v4096 = vunpack.c.l.b16 %v4000
        %v4097 = vunpack.c.l.b16 %v4001
        %v4098 = vunpack.c.l.b16 %v4002
        %v4099 = vunpack.c.l.b16 %v4003
        %v4100 = vunpack.c.l.b16 %v4004
        %v4101 = vunpack.c.l.b16 %v4005
        %v4102 = vunpack.c.l.b16 %v4006
        %v4103 = vunpack.c.l.b16 %v4007
        %v4104 = vunpack.c.l.b16 %v4008
        %v4105 = vunpack.c.l.b16 %v4009
        %v4106 = vunpack.c.l.b16 %v4010
        %v4107 = vunpack.c.l.b16 %v4011
        %v4108 = vunpack.c.l.b16 %v4012
        %v4109 = vunpack.c.l.b16 %v4013
        %v4110 = vunpack.c.l.b16 %v4014
        %v4111 = vunpack.c.l.b16 %v4015
        %v4112 = vunpack.c.l.b16 %v4016
        %v4113 = vunpack.c.l.b16 %v4017
        %v4114 = vunpack.c.l.b16 %v4018
        %v4115 = vunpack.c.l.b16 %v4019
        %v4116 = vunpack.c.l.b16 %v4020
        %v4117 = vunpack.c.l.b16 %v4021
        %v4118 = vpack.c.b16 %v4071, %v4070
        %v4119 = vpack.c.b16 %v4073, %v4072
        %v4120 = vpack.c.b16 %v4075, %v4074
        %v4121 = vpack.c.b16 %v4077, %v4076
        %v4122 = vpack.c.b16 %v4079, %v4078
        %v4123 = vpack.c.b16 %v4081, %v4080
        %v4124 = vpack.c.b16 %v4083, %v4082
        %v4125 = vpack.c.b16 %v4085, %v4084
        %v4126 = vpack.c.b16 %v4087, %v4086
        %v4127 = vpack.c.b16 %v4089, %v4088
        %v4128 = vpack.c.b16 %v4091, %v4090
        %v4129 = vpack.c.b16 %v4093, %v4092
        %v4130 = vpack.c.b16 %v4095, %v4094
        %v4131 = vpack.c.b16 %v4097, %v4096
        %v4132 = vpack.c.b16 %v4099, %v4098
        %v4133 = vpack.c.b16 %v4101, %v4100
        %v4134 = vpack.c.b16 %v4103, %v4102
        %v4135 = vpack.c.b16 %v4105, %v4104
        %v4136 = vpack.c.b16 %v4107, %v4106
        %v4137 = vpack.c.b16 %v4109, %v4108
        %v4138 = vpack.c.b16 %v4111, %v4110
        %v4139 = vpack.c.b16 %v4113, %v4112
        %v4140 = vpack.c.b16 %v4115, %v4114
        %v4141 = vpack.c.b16 %v4117, %v4116
        %4166 = vmatprep.subr.bf16.mxu0 0
        %4167 = vmatpush1.bf16.msra.mxu0 %v4118
        %4168 = vmatprep.subr.bf16.mxu0 0
        %4169 = vmatpush1.bf16.msra.mxu0 %v4119
        %4170 = vmatprep.subr.bf16.mxu0 0
        %4171 = vmatpush1.bf16.msra.mxu0 %v4120
        %4172 = vmatprep.subr.bf16.mxu0 0
        %4173 = vmatpush1.bf16.msra.mxu0 %v4121
        %4174 = vmatprep.subr.bf16.mxu0 0
        %4175 = vmatpush1.bf16.msra.mxu0 %v4122
        %4176 = vmatprep.subr.bf16.mxu0 0
        %4177 = vmatpush1.bf16.msra.mxu0 %v4123
        %4178 = vmatprep.subr.bf16.mxu0 0
        %4179 = vmatpush1.bf16.msra.mxu0 %v4124
        %4180 = vmatprep.subr.bf16.mxu0 0
        %4181 = vmatpush1.bf16.msra.mxu0 %v4125
        %4182 = vmatprep.subr.bf16.mxu0 0
        %4183 = vmatpush1.bf16.msra.mxu0 %v4126
        %4184 = vmatprep.subr.bf16.mxu0 0
        %4185 = vmatpush1.bf16.msra.mxu0 %v4127
        %4186 = vmatprep.subr.bf16.mxu0 0
        %4187 = vmatpush1.bf16.msra.mxu0 %v4128
        %4188 = vmatprep.subr.bf16.mxu0 0
        %4189 = vmatpush1.bf16.msra.mxu0 %v4129
        %4190 = vmatprep.subr.bf16.mxu0 0
        %4191 = vmatpush1.bf16.msra.mxu0 %v4130
        %4192 = vmatprep.subr.bf16.mxu0 0
        %4193 = vmatpush1.bf16.msra.mxu0 %v4131
        %4194 = vmatprep.subr.bf16.mxu0 0
        %4195 = vmatpush1.bf16.msra.mxu0 %v4132
        %4196 = vmatprep.subr.bf16.mxu0 0
        %4197 = vmatpush1.bf16.msra.mxu0 %v4133
        %4198 = vmatprep.mubr.bf16.mxu0 %v3935
        %4199 = vmatmul.mubr.bf16.gmra.mrb[0].mxu0 %v3934
        %v4200 = vpop.f32.mrb[0].mxu0
        %v4201 = vadd.f32 0.0, %v4200
        %v4202 = vpop.f32.mrb[0].mxu0
        %v4203 = vpop.f32.mrb[0].mxu0
        %v4204 = vadd.f32 0.0, %v4203
        %v4205 = vpop.f32.mrb[0].mxu0
        %4206 = vmatprep.mubr.bf16.mxu0 %v3938
        %4207 = vmatmul.mubr.bf16.gmra.mrb[0].mxu0 %v3937
        %v4208 = vpop.f32.mrb[0].mxu0
        %v4209 = vadd.f32 0.0, %v4208
        %v4210 = vpop.f32.mrb[0].mxu0
        %v4211 = vpop.f32.mrb[0].mxu0
        %v4212 = vadd.f32 0.0, %v4211
        %v4213 = vpop.f32.mrb[0].mxu0
        %4214 = vmatprep.mubr.bf16.mxu0 %v3941
        %4215 = vmatmul.mubr.bf16.gmra.mrb[0].mxu0 %v3940
        %v4216 = vpop.f32.mrb[0].mxu0
        %v4217 = vadd.f32 0.0, %v4216
        %v4218 = vpop.f32.mrb[0].mxu0
        %v4219 = vpop.f32.mrb[0].mxu0
        %v4220 = vadd.f32 0.0, %v4219
        %v4221 = vpop.f32.mrb[0].mxu0
        %4222 = vmatprep.mubr.bf16.mxu0 %v3944
        %4223 = vmatmul.mubr.bf16.gmra.mrb[0].mxu0 %v3943
        %v4224 = vpop.f32.mrb[0].mxu0
        %v4225 = vadd.f32 0.0, %v4224
        %v4226 = vpop.f32.mrb[0].mxu0
        %v4227 = vpop.f32.mrb[0].mxu0
        %v4228 = vadd.f32 0.0, %v4227
        %v4229 = vpop.f32.mrb[0].mxu0
        %4230 = vmatprep.mubr.bf16.mxu0 %v3947
        %4231 = vmatmul.mubr.bf16.gmra.mrb[0].mxu0 %v3946
        %v4232 = vpop.f32.mrb[0].mxu0
        %v4233 = vadd.f32 0.0, %v4232
        %v4234 = vpop.f32.mrb[0].mxu0
        %v4235 = vpop.f32.mrb[0].mxu0
        %v4236 = vadd.f32 0.0, %v4235
        %v4237 = vpop.f32.mrb[0].mxu0
        %4238 = vmatprep.mubr.bf16.mxu0 %v3950
        %4239 = vmatmul.mubr.bf16.gmra.mrb[0].mxu0 %v3949
        %v4240 = vpop.f32.mrb[0].mxu0
        %v4241 = vadd.f32 0.0, %v4240
        %v4242 = vpop.f32.mrb[0].mxu0
        %v4243 = vpop.f32.mrb[0].mxu0
        %v4244 = vadd.f32 0.0, %v4243
        %v4245 = vpop.f32.mrb[0].mxu0
        %4246 = vmatprep.mubr.bf16.mxu0 %v3953
        %4247 = vmatmul.mubr.bf16.gmra.mrb[0].mxu0 %v3952
        %v4248 = vpop.f32.mrb[0].mxu0
        %v4249 = vadd.f32 0.0, %v4248
        %v4250 = vpop.f32.mrb[0].mxu0
        %v4251 = vpop.f32.mrb[0].mxu0
        %v4252 = vadd.f32 0.0, %v4251
        %v4253 = vpop.f32.mrb[0].mxu0
        %4254 = vmatprep.mubr.bf16.mxu0 %v3956
        %4255 = vmatmul.mubr.bf16.gmra.mrb[0].mxu0 %v3955
        %v4256 = vpop.f32.mrb[0].mxu0
        %v4257 = vadd.f32 0.0, %v4256
        %v4258 = vpop.f32.mrb[0].mxu0
        %v4259 = vpop.f32.mrb[0].mxu0
        %v4260 = vadd.f32 0.0, %v4259
        %v4261 = vpop.f32.mrb[0].mxu0
        %4262 = vdwg.mxu0
        %4263 = vmatprep.subr.bf16.mxu0 0
        %4264 = vmatpush1.bf16.msra.mxu0 %v4134
        %4265 = vmatprep.subr.bf16.mxu0 0
        %4266 = vmatpush1.bf16.msra.mxu0 %v4135
        %4267 = vmatprep.subr.bf16.mxu0 0
        %4268 = vmatpush1.bf16.msra.mxu0 %v4136
        %4269 = vmatprep.subr.bf16.mxu0 0
        %4270 = vmatpush1.bf16.msra.mxu0 %v4137
        %4271 = vmatprep.subr.bf16.mxu0 0
        %4272 = vmatpush1.bf16.msra.mxu0 %v4138
        %4273 = vmatprep.subr.bf16.mxu0 0
        %4274 = vmatpush1.bf16.msra.mxu0 %v4139
        %4275 = vmatprep.subr.bf16.mxu0 0
        %4276 = vmatpush1.bf16.msra.mxu0 %v4140
        %4277 = vmatprep.subr.bf16.mxu0 0
        %4278 = vmatpush1.bf16.msra.mxu0 %v4141
        %4279 = vmatprep.subr.bf16.mxu0 0
        %4280 = vmatpush1.bf16.msra.mxu0 0
        %4281 = vmatprep.subr.bf16.mxu0 0
        %4282 = vmatpush1.bf16.msra.mxu0 0
        %4283 = vmatprep.subr.bf16.mxu0 0
        %4284 = vmatpush1.bf16.msra.mxu0 0
        %4285 = vmatprep.subr.bf16.mxu0 0
        %4286 = vmatpush1.bf16.msra.mxu0 0
        %4287 = vmatprep.subr.bf16.mxu0 0
        %4288 = vmatpush1.bf16.msra.mxu0 0
        %4289 = vmatprep.subr.bf16.mxu0 0
        %4290 = vmatpush1.bf16.msra.mxu0 0
        %4291 = vmatprep.subr.bf16.mxu0 0
        %4292 = vmatpush1.bf16.msra.mxu0 0
        %4293 = vmatprep.subr.bf16.mxu0 0
        %4294 = vmatpush1.bf16.msra.mxu0 0
        %4295 = vmatprep.mubr.bf16.mxu0 0
        %4296 = vmatmul.mubr.bf16.gmra.mrb[0].mxu0 %v3936
        %v4297 = vpop.f32.mrb[0].mxu0
        %v4298 = vadd.f32 %v4201, %v4297
        %v4299 = vpop.f32.mrb[0].mxu0
        %v4300 = vpop.f32.mrb[0].mxu0
        %v4301 = vadd.f32 %v4204, %v4300
        %v4302 = vpop.f32.mrb[0].mxu0
        %4303 = vmatprep.mubr.bf16.mxu0 0
        %4304 = vmatmul.mubr.bf16.gmra.mrb[0].mxu0 %v3939
        %v4305 = vpop.f32.mrb[0].mxu0
        %v4306 = vadd.f32 %v4209, %v4305
        %v4307 = vpop.f32.mrb[0].mxu0
        %v4308 = vpop.f32.mrb[0].mxu0
        %v4309 = vadd.f32 %v4212, %v4308
        %v4310 = vpop.f32.mrb[0].mxu0
        %4311 = vmatprep.mubr.bf16.mxu0 0
        %4312 = vmatmul.mubr.bf16.gmra.mrb[0].mxu0 %v3942
        %v4313 = vpop.f32.mrb[0].mxu0
        %v4314 = vadd.f32 %v4217, %v4313
        %v4315 = vpop.f32.mrb[0].mxu0
        %v4316 = vpop.f32.mrb[0].mxu0
        %v4317 = vadd.f32 %v4220, %v4316
        %v4318 = vpop.f32.mrb[0].mxu0
        %4319 = vmatprep.mubr.bf16.mxu0 0
        %4320 = vmatmul.mubr.bf16.gmra.mrb[0].mxu0 %v3945
        %v4321 = vpop.f32.mrb[0].mxu0
        %v4322 = vadd.f32 %v4225, %v4321
        %v4323 = vpop.f32.mrb[0].mxu0
        %v4324 = vpop.f32.mrb[0].mxu0
        %v4325 = vadd.f32 %v4228, %v4324
        %v4326 = vpop.f32.mrb[0].mxu0
        %4327 = vmatprep.mubr.bf16.mxu0 0
        %4328 = vmatmul.mubr.bf16.gmra.mrb[0].mxu0 %v3948
        %v4329 = vpop.f32.mrb[0].mxu0
        %v4330 = vadd.f32 %v4233, %v4329
        %v4331 = vpop.f32.mrb[0].mxu0
        %v4332 = vpop.f32.mrb[0].mxu0
        %v4333 = vadd.f32 %v4236, %v4332
        %v4334 = vpop.f32.mrb[0].mxu0
        %4335 = vmatprep.mubr.bf16.mxu0 0
        %4336 = vmatmul.mubr.bf16.gmra.mrb[0].mxu0 %v3951
        %v4337 = vpop.f32.mrb[0].mxu0
        %v4338 = vadd.f32 %v4241, %v4337
        %v4339 = vpop.f32.mrb[0].mxu0
        %v4340 = vpop.f32.mrb[0].mxu0
        %v4341 = vadd.f32 %v4244, %v4340
        %v4342 = vpop.f32.mrb[0].mxu0
        %4343 = vmatprep.mubr.bf16.mxu0 0
        %4344 = vmatmul.mubr.bf16.gmra.mrb[0].mxu0 %v3954
        %v4345 = vpop.f32.mrb[0].mxu0
        %v4346 = vadd.f32 %v4249, %v4345
        %v4347 = vpop.f32.mrb[0].mxu0
        %v4348 = vpop.f32.mrb[0].mxu0
        %v4349 = vadd.f32 %v4252, %v4348
        %v4350 = vpop.f32.mrb[0].mxu0
        %4351 = vmatprep.mubr.bf16.mxu0 0
        %4352 = vmatmul.mubr.bf16.gmra.mrb[0].mxu0 %v3957
        %v4353 = vpop.f32.mrb[0].mxu0
        %v4354 = vadd.f32 %v4257, %v4353
        %v4355 = vpop.f32.mrb[0].mxu0
        %v4356 = vpop.f32.mrb[0].mxu0
        %v4357 = vadd.f32 %v4260, %v4356
        %v4358 = vpop.f32.mrb[0].mxu0
        %4359 = vdwg.mxu0
        %v4360 = vadd.f32 %v3958, %v4298
        %v4361 = vadd.f32 %v3959, %v4301
        %v4362 = vadd.f32 %v3960, %v4306
        %v4363 = vadd.f32 %v3961, %v4309
        %v4364 = vadd.f32 %v3962, %v4314
        %v4365 = vadd.f32 %v3963, %v4317
        %v4366 = vadd.f32 %v3964, %v4322
        %v4367 = vadd.f32 %v3965, %v4325
        %v4368 = vadd.f32 %v3966, %v4330
        %v4369 = vadd.f32 %v3967, %v4333
        %v4370 = vadd.f32 %v3968, %v4338
        %v4371 = vadd.f32 %v3969, %v4341
        %v4372 = vadd.f32 %v3970, %v4346
        %v4373 = vadd.f32 %v3971, %v4349
        %v4374 = vadd.f32 %v3972, %v4354
        %v4375 = vadd.f32 %v3973, %v4357
        %v4376 = vxor.u32 %v4360, 2147483648
        %v4377 = vxor.u32 %v4361, 2147483648
        %v4378 = vxor.u32 %v4362, 2147483648
        %v4379 = vxor.u32 %v4363, 2147483648
        %v4380 = vxor.u32 %v4364, 2147483648
        %v4381 = vxor.u32 %v4365, 2147483648
        %v4382 = vxor.u32 %v4366, 2147483648
        %v4383 = vxor.u32 %v4367, 2147483648
        %v4384 = vxor.u32 %v4368, 2147483648
        %v4385 = vxor.u32 %v4369, 2147483648
        %v4386 = vxor.u32 %v4370, 2147483648
        %v4387 = vxor.u32 %v4371, 2147483648
        %v4388 = vxor.u32 %v4372, 2147483648
        %v4389 = vxor.u32 %v4373, 2147483648
        %v4390 = vxor.u32 %v4374, 2147483648
        %v4391 = vxor.u32 %v4375, 2147483648
        %v4392 = vmul.f32 %v4376, 1.442695
        %v4393 = vpow.pop %v4392
        %v4394 = vmul.f32 %v4377, 1.442695
        %v4395 = vpow.pop %v4394
        %v4396 = vmul.f32 %v4378, 1.442695
        %v4397 = vpow.pop %v4396
        %v4398 = vmul.f32 %v4379, 1.442695
        %v4399 = vpow.pop %v4398
        %v4400 = vmul.f32 %v4380, 1.442695
        %v4401 = vpow.pop %v4400
        %v4402 = vmul.f32 %v4381, 1.442695
        %v4403 = vpow.pop %v4402
        %v4404 = vmul.f32 %v4382, 1.442695
        %v4405 = vpow.pop %v4404
        %v4406 = vmul.f32 %v4383, 1.442695
        %v4407 = vpow.pop %v4406
        %v4408 = vmul.f32 %v4384, 1.442695
        %v4409 = vpow.pop %v4408
        %v4410 = vmul.f32 %v4385, 1.442695
        %v4411 = vpow.pop %v4410
        %v4412 = vmul.f32 %v4386, 1.442695
        %v4413 = vpow.pop %v4412
        %v4414 = vmul.f32 %v4387, 1.442695
        %v4415 = vpow.pop %v4414
        %v4416 = vmul.f32 %v4388, 1.442695
        %v4417 = vpow.pop %v4416
        %v4418 = vmul.f32 %v4389, 1.442695
        %v4419 = vpow.pop %v4418
        %v4420 = vmul.f32 %v4390, 1.442695
        %v4421 = vpow.pop %v4420
        %v4422 = vmul.f32 %v4391, 1.442695
        %v4423 = vpow.pop %v4422
        %v4424 = vadd.f32 %v4393, 1.0
        %v4425 = vadd.f32 %v4395, 1.0
        %v4426 = vadd.f32 %v4397, 1.0
        %v4427 = vadd.f32 %v4399, 1.0
        %v4428 = vadd.f32 %v4401, 1.0
        %v4429 = vadd.f32 %v4403, 1.0
        %v4430 = vadd.f32 %v4405, 1.0
        %v4431 = vadd.f32 %v4407, 1.0
        %v4432 = vadd.f32 %v4409, 1.0
        %v4433 = vadd.f32 %v4411, 1.0
        %v4434 = vadd.f32 %v4413, 1.0
        %v4435 = vadd.f32 %v4415, 1.0
        %v4436 = vadd.f32 %v4417, 1.0
        %v4437 = vadd.f32 %v4419, 1.0
        %v4438 = vadd.f32 %v4421, 1.0
        %v4439 = vadd.f32 %v4423, 1.0
        %v4440 = vrcp.pop %v4424
        %v4441 = vmul.f32 1.0, %v4440
        %v4442 = vrcp.pop %v4425
        %v4443 = vmul.f32 1.0, %v4442
        %v4444 = vrcp.pop %v4426
        %v4445 = vmul.f32 1.0, %v4444
        %v4446 = vrcp.pop %v4427
        %v4447 = vmul.f32 1.0, %v4446
        %v4448 = vrcp.pop %v4428
        %v4449 = vmul.f32 1.0, %v4448
        %v4450 = vrcp.pop %v4429
        %v4451 = vmul.f32 1.0, %v4450
        %v4452 = vrcp.pop %v4430
        %v4453 = vmul.f32 1.0, %v4452
        %v4454 = vrcp.pop %v4431
        %v4455 = vmul.f32 1.0, %v4454
        %v4456 = vrcp.pop %v4432
        %v4457 = vmul.f32 1.0, %v4456
        %v4458 = vrcp.pop %v4433
        %v4459 = vmul.f32 1.0, %v4458
        %v4460 = vrcp.pop %v4434
        %v4461 = vmul.f32 1.0, %v4460
        %v4462 = vrcp.pop %v4435
        %v4463 = vmul.f32 1.0, %v4462
        %v4464 = vrcp.pop %v4436
        %v4465 = vmul.f32 1.0, %v4464
        %v4466 = vrcp.pop %v4437
        %v4467 = vmul.f32 1.0, %v4466
        %v4468 = vrcp.pop %v4438
        %v4469 = vmul.f32 1.0, %v4468
        %v4470 = vrcp.pop %v4439
        %v4471 = vmul.f32 1.0, %v4470
        %v4472 = vmul.f32 %v4360, %v4441
        %v4473 = vmul.f32 %v4361, %v4443
        %v4474 = vmul.f32 %v4362, %v4445
        %v4475 = vmul.f32 %v4363, %v4447
        %v4476 = vmul.f32 %v4364, %v4449
        %v4477 = vmul.f32 %v4365, %v4451
        %v4478 = vmul.f32 %v4366, %v4453
        %v4479 = vmul.f32 %v4367, %v4455
        %v4480 = vmul.f32 %v4368, %v4457
        %v4481 = vmul.f32 %v4369, %v4459
        %v4482 = vmul.f32 %v4370, %v4461
        %v4483 = vmul.f32 %v4371, %v4463
        %v4484 = vmul.f32 %v4372, %v4465
        %v4485 = vmul.f32 %v4373, %v4467
        %v4486 = vmul.f32 %v4374, %v4469
        %v4487 = vmul.f32 %v4375, %v4471
        %v4488 = vpack.c.bf16 %v4473, %v4472
        %v4489 = vpack.c.bf16 %v4475, %v4474
        %v4490 = vpack.c.bf16 %v4477, %v4476
        %v4491 = vpack.c.bf16 %v4479, %v4478
        %v4492 = vpack.c.bf16 %v4481, %v4480
        %v4493 = vpack.c.bf16 %v4483, %v4482
        %v4494 = vpack.c.bf16 %v4485, %v4484
        %v4495 = vpack.c.bf16 %v4487, %v4486
        %v4496 = vld [vmem:[%s18] sm:$0xf]
        %v4497 = vld [vmem:[%s18 + $0x4] sm:$0xf]
        %v4498 = vld [vmem:[%s18 + $0x8] sm:$0xf]
        %v4499 = vld [vmem:[%s18 + $0xc] sm:$0xf]
        %v4500 = vld [vmem:[%s18 + $0x10] sm:$0xf]
        %v4501 = vld [vmem:[%s18 + $0x14] sm:$0xf]
        %v4502 = vld [vmem:[%s18 + $0x18] sm:$0xf]
        %v4503 = vld [vmem:[%s18 + $0x1c] sm:$0xf]
        %v4504 = vld [vmem:[%s18 + $0x20] sm:$0xf]
        %v4505 = vld [vmem:[%s18 + $0x24] sm:$0xf]
        %v4506 = vld [vmem:[%s18 + $0x28] sm:$0xf]
        %v4507 = vld [vmem:[%s18 + $0x2c] sm:$0xf]
        %v4508 = vld [vmem:[%s18 + $0x30] sm:$0xf]
        %v4509 = vld [vmem:[%s18 + $0x34] sm:$0xf]
        %v4510 = vld [vmem:[%s18 + $0x38] sm:$0xf]
        %v4511 = vld [vmem:[%s18 + $0x3c] sm:$0xf]
        %v4512 = vld [vmem:[%s18 + $0x40] sm:$0xf]
        %v4513 = vld [vmem:[%s18 + $0x44] sm:$0xf]
        %v4514 = vld [vmem:[%s18 + $0x48] sm:$0xf]
        %v4515 = vld [vmem:[%s18 + $0x4c] sm:$0xf]
        %v4516 = vld [vmem:[%s18 + $0x50] sm:$0xf]
        %v4517 = vld [vmem:[%s18 + $0x54] sm:$0xf]
        %v4518 = vld [vmem:[%s18 + $0x58] sm:$0xf]
        %v4519 = vld [vmem:[%s18 + $0x5c] sm:$0xf]
        %v4520 = vld [vmem:[%s18 + $0x60] sm:$0xf]
        %v4521 = vld [vmem:[%s18 + $0x64] sm:$0xf]
        %v4522 = vld [vmem:[%s18 + $0x68] sm:$0xf]
        %v4523 = vld [vmem:[%s18 + $0x6c] sm:$0xf]
        %v4524 = vld [vmem:[%s18 + $0x70] sm:$0xf]
        %v4525 = vld [vmem:[%s18 + $0x74] sm:$0xf]
        %v4526 = vld [vmem:[%s18 + $0x78] sm:$0xf]
        %v4527 = vld [vmem:[%s18 + $0x7c] sm:$0xf]
        %v4560 = vunpack.c.l.b16 %v4496
        %v4561 = vunpack.c.l.b16 %v4497
        %v4562 = vunpack.c.l.b16 %v4498
        %v4563 = vunpack.c.l.b16 %v4499
        %v4564 = vunpack.c.l.b16 %v4500
        %v4565 = vunpack.c.l.b16 %v4501
        %v4566 = vunpack.c.l.b16 %v4502
        %v4567 = vunpack.c.l.b16 %v4503
        %v4568 = vunpack.c.l.b16 %v4504
        %v4569 = vunpack.c.l.b16 %v4505
        %v4570 = vunpack.c.l.b16 %v4506
        %v4571 = vunpack.c.l.b16 %v4507
        %v4572 = vunpack.c.l.b16 %v4508
        %v4573 = vunpack.c.l.b16 %v4509
        %v4574 = vunpack.c.l.b16 %v4510
        %v4575 = vunpack.c.l.b16 %v4511
        %v4576 = vunpack.c.l.b16 %v4512
        %v4577 = vunpack.c.l.b16 %v4513
        %v4578 = vunpack.c.l.b16 %v4514
        %v4579 = vunpack.c.l.b16 %v4515
        %v4580 = vunpack.c.l.b16 %v4516
        %v4581 = vunpack.c.l.b16 %v4517
        %v4582 = vunpack.c.l.b16 %v4518
        %v4583 = vunpack.c.l.b16 %v4519
        %v4584 = vunpack.c.l.b16 %v4520
        %v4585 = vunpack.c.l.b16 %v4521
        %v4586 = vunpack.c.l.b16 %v4522
        %v4587 = vunpack.c.l.b16 %v4523
        %v4588 = vunpack.c.l.b16 %v4524
        %v4589 = vunpack.c.l.b16 %v4525
        %v4590 = vunpack.c.l.b16 %v4526
        %v4591 = vunpack.c.l.b16 %v4527
        %v4592 = vpack.c.b16 %v4561, %v4560
        %v4593 = vpack.c.b16 %v4563, %v4562
        %v4594 = vpack.c.b16 %v4565, %v4564
        %v4595 = vpack.c.b16 %v4567, %v4566
        %v4596 = vpack.c.b16 %v4569, %v4568
        %v4597 = vpack.c.b16 %v4571, %v4570
        %v4598 = vpack.c.b16 %v4573, %v4572
        %v4599 = vpack.c.b16 %v4575, %v4574
        %v4600 = vpack.c.b16 %v4577, %v4576
        %v4601 = vpack.c.b16 %v4579, %v4578
        %v4602 = vpack.c.b16 %v4581, %v4580
        %v4603 = vpack.c.b16 %v4583, %v4582
        %v4604 = vpack.c.b16 %v4585, %v4584
        %v4605 = vpack.c.b16 %v4587, %v4586
        %v4606 = vpack.c.b16 %v4589, %v4588
        %v4607 = vpack.c.b16 %v4591, %v4590
        %4624 = vmatprep.subr.bf16.mxu0 0
        %4625 = vmatpush1.bf16.msra.mxu0 %v4488
        %4626 = vmatprep.subr.bf16.mxu0 0
        %4627 = vmatpush1.bf16.msra.mxu0 %v4489
        %4628 = vmatprep.subr.bf16.mxu0 0
        %4629 = vmatpush1.bf16.msra.mxu0 %v4490
        %4630 = vmatprep.subr.bf16.mxu0 0
        %4631 = vmatpush1.bf16.msra.mxu0 %v4491
        %4632 = vmatprep.subr.bf16.mxu0 0
        %4633 = vmatpush1.bf16.msra.mxu0 %v4492
        %4634 = vmatprep.subr.bf16.mxu0 0
        %4635 = vmatpush1.bf16.msra.mxu0 %v4493
        %4636 = vmatprep.subr.bf16.mxu0 0
        %4637 = vmatpush1.bf16.msra.mxu0 %v4494
        %4638 = vmatprep.subr.bf16.mxu0 0
        %4639 = vmatpush1.bf16.msra.mxu0 %v4495
        %4640 = vmatprep.subr.bf16.mxu0 0
        %4641 = vmatpush1.bf16.msra.mxu0 0
        %4642 = vmatprep.subr.bf16.mxu0 0
        %4643 = vmatpush1.bf16.msra.mxu0 0
        %4644 = vmatprep.subr.bf16.mxu0 0
        %4645 = vmatpush1.bf16.msra.mxu0 0
        %4646 = vmatprep.subr.bf16.mxu0 0
        %4647 = vmatpush1.bf16.msra.mxu0 0
        %4648 = vmatprep.subr.bf16.mxu0 0
        %4649 = vmatpush1.bf16.msra.mxu0 0
        %4650 = vmatprep.subr.bf16.mxu0 0
        %4651 = vmatpush1.bf16.msra.mxu0 0
        %4652 = vmatprep.subr.bf16.mxu0 0
        %4653 = vmatpush1.bf16.msra.mxu0 0
        %4654 = vmatprep.subr.bf16.mxu0 0
        %4655 = vmatpush1.bf16.msra.mxu0 0
        %4656 = vmatprep.mubr.bf16.mxu0 0
        %4657 = vmatmul.mubr.bf16.gmra.mrb[0].mxu0 %v4592
        %v4658 = vpop.f32.mrb[0].mxu0
        %v4659 = vadd.f32 0.0, %v4658
        %v4660 = vpop.f32.mrb[0].mxu0
        %v4661 = vpop.f32.mrb[0].mxu0
        %v4662 = vadd.f32 0.0, %v4661
        %v4663 = vpop.f32.mrb[0].mxu0
        %4664 = vmatprep.mubr.bf16.mxu0 0
        %4665 = vmatmul.mubr.bf16.gmra.mrb[0].mxu0 %v4593
        %v4666 = vpop.f32.mrb[0].mxu0
        %v4667 = vadd.f32 0.0, %v4666
        %v4668 = vpop.f32.mrb[0].mxu0
        %v4669 = vpop.f32.mrb[0].mxu0
        %v4670 = vadd.f32 0.0, %v4669
        %v4671 = vpop.f32.mrb[0].mxu0
        %4672 = vmatprep.mubr.bf16.mxu0 0
        %4673 = vmatmul.mubr.bf16.gmra.mrb[0].mxu0 %v4594
        %v4674 = vpop.f32.mrb[0].mxu0
        %v4675 = vadd.f32 0.0, %v4674
        %v4676 = vpop.f32.mrb[0].mxu0
        %v4677 = vpop.f32.mrb[0].mxu0
        %v4678 = vadd.f32 0.0, %v4677
        %v4679 = vpop.f32.mrb[0].mxu0
        %4680 = vmatprep.mubr.bf16.mxu0 0
        %4681 = vmatmul.mubr.bf16.gmra.mrb[0].mxu0 %v4595
        %v4682 = vpop.f32.mrb[0].mxu0
        %v4683 = vadd.f32 0.0, %v4682
        %v4684 = vpop.f32.mrb[0].mxu0
        %v4685 = vpop.f32.mrb[0].mxu0
        %v4686 = vadd.f32 0.0, %v4685
        %v4687 = vpop.f32.mrb[0].mxu0
        %4688 = vmatprep.mubr.bf16.mxu0 0
        %4689 = vmatmul.mubr.bf16.gmra.mrb[0].mxu0 %v4596
        %v4690 = vpop.f32.mrb[0].mxu0
        %v4691 = vadd.f32 0.0, %v4690
        %v4692 = vpop.f32.mrb[0].mxu0
        %v4693 = vpop.f32.mrb[0].mxu0
        %v4694 = vadd.f32 0.0, %v4693
        %v4695 = vpop.f32.mrb[0].mxu0
        %4696 = vmatprep.mubr.bf16.mxu0 0
        %4697 = vmatmul.mubr.bf16.gmra.mrb[0].mxu0 %v4597
        %v4698 = vpop.f32.mrb[0].mxu0
        %v4699 = vadd.f32 0.0, %v4698
        %v4700 = vpop.f32.mrb[0].mxu0
        %v4701 = vpop.f32.mrb[0].mxu0
        %v4702 = vadd.f32 0.0, %v4701
        %v4703 = vpop.f32.mrb[0].mxu0
        %4704 = vmatprep.mubr.bf16.mxu0 0
        %4705 = vmatmul.mubr.bf16.gmra.mrb[0].mxu0 %v4598
        %v4706 = vpop.f32.mrb[0].mxu0
        %v4707 = vadd.f32 0.0, %v4706
        %v4708 = vpop.f32.mrb[0].mxu0
        %v4709 = vpop.f32.mrb[0].mxu0
        %v4710 = vadd.f32 0.0, %v4709
        %v4711 = vpop.f32.mrb[0].mxu0
        %4712 = vmatprep.mubr.bf16.mxu0 0
        %4713 = vmatmul.mubr.bf16.gmra.mrb[0].mxu0 %v4599
        %v4714 = vpop.f32.mrb[0].mxu0
        %v4715 = vadd.f32 0.0, %v4714
        %v4716 = vpop.f32.mrb[0].mxu0
        %v4717 = vpop.f32.mrb[0].mxu0
        %v4718 = vadd.f32 0.0, %v4717
        %v4719 = vpop.f32.mrb[0].mxu0
        %4720 = vmatprep.mubr.bf16.mxu0 0
        %4721 = vmatmul.mubr.bf16.gmra.mrb[0].mxu0 %v4600
        %v4722 = vpop.f32.mrb[0].mxu0
        %v4723 = vadd.f32 0.0, %v4722
        %v4724 = vpop.f32.mrb[0].mxu0
        %v4725 = vpop.f32.mrb[0].mxu0
        %v4726 = vadd.f32 0.0, %v4725
        %v4727 = vpop.f32.mrb[0].mxu0
        %4728 = vmatprep.mubr.bf16.mxu0 0
        %4729 = vmatmul.mubr.bf16.gmra.mrb[0].mxu0 %v4601
        %v4730 = vpop.f32.mrb[0].mxu0
        %v4731 = vadd.f32 0.0, %v4730
        %v4732 = vpop.f32.mrb[0].mxu0
        %v4733 = vpop.f32.mrb[0].mxu0
        %v4734 = vadd.f32 0.0, %v4733
        %v4735 = vpop.f32.mrb[0].mxu0
        %4736 = vmatprep.mubr.bf16.mxu0 0
        %4737 = vmatmul.mubr.bf16.gmra.mrb[0].mxu0 %v4602
        %v4738 = vpop.f32.mrb[0].mxu0
        %v4739 = vadd.f32 0.0, %v4738
        %v4740 = vpop.f32.mrb[0].mxu0
        %v4741 = vpop.f32.mrb[0].mxu0
        %v4742 = vadd.f32 0.0, %v4741
        %v4743 = vpop.f32.mrb[0].mxu0
        %4744 = vmatprep.mubr.bf16.mxu0 0
        %4745 = vmatmul.mubr.bf16.gmra.mrb[0].mxu0 %v4603
        %v4746 = vpop.f32.mrb[0].mxu0
        %v4747 = vadd.f32 0.0, %v4746
        %v4748 = vpop.f32.mrb[0].mxu0
        %v4749 = vpop.f32.mrb[0].mxu0
        %v4750 = vadd.f32 0.0, %v4749
        %v4751 = vpop.f32.mrb[0].mxu0
        %4752 = vmatprep.mubr.bf16.mxu0 0
        %4753 = vmatmul.mubr.bf16.gmra.mrb[0].mxu0 %v4604
        %v4754 = vpop.f32.mrb[0].mxu0
        %v4755 = vadd.f32 0.0, %v4754
        %v4756 = vpop.f32.mrb[0].mxu0
        %v4757 = vpop.f32.mrb[0].mxu0
        %v4758 = vadd.f32 0.0, %v4757
        %v4759 = vpop.f32.mrb[0].mxu0
        %4760 = vmatprep.mubr.bf16.mxu0 0
        %4761 = vmatmul.mubr.bf16.gmra.mrb[0].mxu0 %v4605
        %v4762 = vpop.f32.mrb[0].mxu0
        %v4763 = vadd.f32 0.0, %v4762
        %v4764 = vpop.f32.mrb[0].mxu0
        %v4765 = vpop.f32.mrb[0].mxu0
        %v4766 = vadd.f32 0.0, %v4765
        %v4767 = vpop.f32.mrb[0].mxu0
        %4768 = vmatprep.mubr.bf16.mxu0 0
        %4769 = vmatmul.mubr.bf16.gmra.mrb[0].mxu0 %v4606
        %v4770 = vpop.f32.mrb[0].mxu0
        %v4771 = vadd.f32 0.0, %v4770
        %v4772 = vpop.f32.mrb[0].mxu0
        %v4773 = vpop.f32.mrb[0].mxu0
        %v4774 = vadd.f32 0.0, %v4773
        %v4775 = vpop.f32.mrb[0].mxu0
        %4776 = vmatprep.mubr.bf16.mxu0 0
        %4777 = vmatmul.mubr.bf16.gmra.mrb[0].mxu0 %v4607
        %v4778 = vpop.f32.mrb[0].mxu0
        %v4779 = vadd.f32 0.0, %v4778
        %v4780 = vpop.f32.mrb[0].mxu0
        %v4781 = vpop.f32.mrb[0].mxu0
        %v4782 = vadd.f32 0.0, %v4781
        %v4783 = vpop.f32.mrb[0].mxu0
        %4784 = vdwg.mxu0
        %v4785 = vpack.c.bf16 %v4662, %v4659
        %v4786 = vpack.c.bf16 %v4670, %v4667
        %v4787 = vpack.c.bf16 %v4678, %v4675
        %v4788 = vpack.c.bf16 %v4686, %v4683
        %v4789 = vpack.c.bf16 %v4694, %v4691
        %v4790 = vpack.c.bf16 %v4702, %v4699
        %v4791 = vpack.c.bf16 %v4710, %v4707
        %v4792 = vpack.c.bf16 %v4718, %v4715
        %v4793 = vpack.c.bf16 %v4726, %v4723
        %v4794 = vpack.c.bf16 %v4734, %v4731
        %v4795 = vpack.c.bf16 %v4742, %v4739
        %v4796 = vpack.c.bf16 %v4750, %v4747
        %v4797 = vpack.c.bf16 %v4758, %v4755
        %v4798 = vpack.c.bf16 %v4766, %v4763
        %v4799 = vpack.c.bf16 %v4774, %v4771
        %v4800 = vpack.c.bf16 %v4782, %v4779
        %s4801 = scalar_lea.vmem %s18, 128
        %v4802 = vld [vmem:[%s4801] sm:$0xf]
        %v4803 = vld [vmem:[%s4801 + $0x4] sm:$0xf]
        %v4804 = vld [vmem:[%s4801 + $0x8] sm:$0xf]
        %v4805 = vld [vmem:[%s4801 + $0xc] sm:$0xf]
        %v4806 = vld [vmem:[%s4801 + $0x10] sm:$0xf]
        %v4807 = vld [vmem:[%s4801 + $0x14] sm:$0xf]
        %v4808 = vld [vmem:[%s4801 + $0x18] sm:$0xf]
        %v4809 = vld [vmem:[%s4801 + $0x1c] sm:$0xf]
        %v4810 = vld [vmem:[%s4801 + $0x20] sm:$0xf]
        %v4811 = vld [vmem:[%s4801 + $0x24] sm:$0xf]
        %v4812 = vld [vmem:[%s4801 + $0x28] sm:$0xf]
        %v4813 = vld [vmem:[%s4801 + $0x2c] sm:$0xf]
        %v4814 = vld [vmem:[%s4801 + $0x30] sm:$0xf]
        %v4815 = vld [vmem:[%s4801 + $0x34] sm:$0xf]
        %v4816 = vld [vmem:[%s4801 + $0x38] sm:$0xf]
        %v4817 = vld [vmem:[%s4801 + $0x3c] sm:$0xf]
        %v4818 = vld [vmem:[%s4801 + $0x40] sm:$0xf]
        %v4819 = vld [vmem:[%s4801 + $0x44] sm:$0xf]
        %v4820 = vld [vmem:[%s4801 + $0x48] sm:$0xf]
        %v4821 = vld [vmem:[%s4801 + $0x4c] sm:$0xf]
        %v4822 = vld [vmem:[%s4801 + $0x50] sm:$0xf]
        %v4823 = vld [vmem:[%s4801 + $0x54] sm:$0xf]
        %v4824 = vld [vmem:[%s4801 + $0x58] sm:$0xf]
        %v4825 = vld [vmem:[%s4801 + $0x5c] sm:$0xf]
        %v4826 = vld [vmem:[%s4801 + $0x60] sm:$0xf]
        %v4827 = vld [vmem:[%s4801 + $0x64] sm:$0xf]
        %v4828 = vld [vmem:[%s4801 + $0x68] sm:$0xf]
        %v4829 = vld [vmem:[%s4801 + $0x6c] sm:$0xf]
        %v4830 = vld [vmem:[%s4801 + $0x70] sm:$0xf]
        %v4831 = vld [vmem:[%s4801 + $0x74] sm:$0xf]
        %v4832 = vld [vmem:[%s4801 + $0x78] sm:$0xf]
        %v4833 = vld [vmem:[%s4801 + $0x7c] sm:$0xf]
        %v4866 = vunpack.c.l.b16 %v4802
        %v4867 = vunpack.c.l.b16 %v4803
        %v4868 = vunpack.c.l.b16 %v4804
        %v4869 = vunpack.c.l.b16 %v4805
        %v4870 = vunpack.c.l.b16 %v4806
        %v4871 = vunpack.c.l.b16 %v4807
        %v4872 = vunpack.c.l.b16 %v4808
        %v4873 = vunpack.c.l.b16 %v4809
        %v4874 = vunpack.c.l.b16 %v4810
        %v4875 = vunpack.c.l.b16 %v4811
        %v4876 = vunpack.c.l.b16 %v4812
        %v4877 = vunpack.c.l.b16 %v4813
        %v4878 = vunpack.c.l.b16 %v4814
        %v4879 = vunpack.c.l.b16 %v4815
        %v4880 = vunpack.c.l.b16 %v4816
        %v4881 = vunpack.c.l.b16 %v4817
        %v4882 = vunpack.c.l.b16 %v4818
        %v4883 = vunpack.c.l.b16 %v4819
        %v4884 = vunpack.c.l.b16 %v4820
        %v4885 = vunpack.c.l.b16 %v4821
        %v4886 = vunpack.c.l.b16 %v4822
        %v4887 = vunpack.c.l.b16 %v4823
        %v4888 = vunpack.c.l.b16 %v4824
        %v4889 = vunpack.c.l.b16 %v4825
        %v4890 = vunpack.c.l.b16 %v4826
        %v4891 = vunpack.c.l.b16 %v4827
        %v4892 = vunpack.c.l.b16 %v4828
        %v4893 = vunpack.c.l.b16 %v4829
        %v4894 = vunpack.c.l.b16 %v4830
        %v4895 = vunpack.c.l.b16 %v4831
        %v4896 = vunpack.c.l.b16 %v4832
        %v4897 = vunpack.c.l.b16 %v4833
        %v4898 = vpack.c.b16 %v4867, %v4866
        %v4899 = vpack.c.b16 %v4869, %v4868
        %v4900 = vpack.c.b16 %v4871, %v4870
        %v4901 = vpack.c.b16 %v4873, %v4872
        %v4902 = vpack.c.b16 %v4875, %v4874
        %v4903 = vpack.c.b16 %v4877, %v4876
        %v4904 = vpack.c.b16 %v4879, %v4878
        %v4905 = vpack.c.b16 %v4881, %v4880
        %v4906 = vpack.c.b16 %v4883, %v4882
        %v4907 = vpack.c.b16 %v4885, %v4884
        %v4908 = vpack.c.b16 %v4887, %v4886
        %v4909 = vpack.c.b16 %v4889, %v4888
        %v4910 = vpack.c.b16 %v4891, %v4890
        %v4911 = vpack.c.b16 %v4893, %v4892
        %v4912 = vpack.c.b16 %v4895, %v4894
        %v4913 = vpack.c.b16 %v4897, %v4896
        %4930 = vmatprep.subr.bf16.mxu0 0
        %4931 = vmatpush1.bf16.msra.mxu0 %v4488
        %4932 = vmatprep.subr.bf16.mxu0 0
        %4933 = vmatpush1.bf16.msra.mxu0 %v4489
        %4934 = vmatprep.subr.bf16.mxu0 0
        %4935 = vmatpush1.bf16.msra.mxu0 %v4490
        %4936 = vmatprep.subr.bf16.mxu0 0
        %4937 = vmatpush1.bf16.msra.mxu0 %v4491
        %4938 = vmatprep.subr.bf16.mxu0 0
        %4939 = vmatpush1.bf16.msra.mxu0 %v4492
        %4940 = vmatprep.subr.bf16.mxu0 0
        %4941 = vmatpush1.bf16.msra.mxu0 %v4493
        %4942 = vmatprep.subr.bf16.mxu0 0
        %4943 = vmatpush1.bf16.msra.mxu0 %v4494
        %4944 = vmatprep.subr.bf16.mxu0 0
        %4945 = vmatpush1.bf16.msra.mxu0 %v4495
        %4946 = vmatprep.subr.bf16.mxu0 0
        %4947 = vmatpush1.bf16.msra.mxu0 0
        %4948 = vmatprep.subr.bf16.mxu0 0
        %4949 = vmatpush1.bf16.msra.mxu0 0
        %4950 = vmatprep.subr.bf16.mxu0 0
        %4951 = vmatpush1.bf16.msra.mxu0 0
        %4952 = vmatprep.subr.bf16.mxu0 0
        %4953 = vmatpush1.bf16.msra.mxu0 0
        %4954 = vmatprep.subr.bf16.mxu0 0
        %4955 = vmatpush1.bf16.msra.mxu0 0
        %4956 = vmatprep.subr.bf16.mxu0 0
        %4957 = vmatpush1.bf16.msra.mxu0 0
        %4958 = vmatprep.subr.bf16.mxu0 0
        %4959 = vmatpush1.bf16.msra.mxu0 0
        %4960 = vmatprep.subr.bf16.mxu0 0
        %4961 = vmatpush1.bf16.msra.mxu0 0
        %4962 = vmatprep.mubr.bf16.mxu0 0
        %4963 = vmatmul.mubr.bf16.gmra.mrb[0].mxu0 %v4898
        %v4964 = vpop.f32.mrb[0].mxu0
        %v4965 = vadd.f32 0.0, %v4964
        %v4966 = vpop.f32.mrb[0].mxu0
        %v4967 = vpop.f32.mrb[0].mxu0
        %v4968 = vadd.f32 0.0, %v4967
        %v4969 = vpop.f32.mrb[0].mxu0
        %4970 = vmatprep.mubr.bf16.mxu0 0
        %4971 = vmatmul.mubr.bf16.gmra.mrb[0].mxu0 %v4899
        %v4972 = vpop.f32.mrb[0].mxu0
        %v4973 = vadd.f32 0.0, %v4972
        %v4974 = vpop.f32.mrb[0].mxu0
        %v4975 = vpop.f32.mrb[0].mxu0
        %v4976 = vadd.f32 0.0, %v4975
        %v4977 = vpop.f32.mrb[0].mxu0
        %4978 = vmatprep.mubr.bf16.mxu0 0
        %4979 = vmatmul.mubr.bf16.gmra.mrb[0].mxu0 %v4900
        %v4980 = vpop.f32.mrb[0].mxu0
        %v4981 = vadd.f32 0.0, %v4980
        %v4982 = vpop.f32.mrb[0].mxu0
        %v4983 = vpop.f32.mrb[0].mxu0
        %v4984 = vadd.f32 0.0, %v4983
        %v4985 = vpop.f32.mrb[0].mxu0
        %4986 = vmatprep.mubr.bf16.mxu0 0
        %4987 = vmatmul.mubr.bf16.gmra.mrb[0].mxu0 %v4901
        %v4988 = vpop.f32.mrb[0].mxu0
        %v4989 = vadd.f32 0.0, %v4988
        %v4990 = vpop.f32.mrb[0].mxu0
        %v4991 = vpop.f32.mrb[0].mxu0
        %v4992 = vadd.f32 0.0, %v4991
        %v4993 = vpop.f32.mrb[0].mxu0
        %4994 = vmatprep.mubr.bf16.mxu0 0
        %4995 = vmatmul.mubr.bf16.gmra.mrb[0].mxu0 %v4902
        %v4996 = vpop.f32.mrb[0].mxu0
        %v4997 = vadd.f32 0.0, %v4996
        %v4998 = vpop.f32.mrb[0].mxu0
        %v4999 = vpop.f32.mrb[0].mxu0
        %v5000 = vadd.f32 0.0, %v4999
        %v5001 = vpop.f32.mrb[0].mxu0
        %5002 = vmatprep.mubr.bf16.mxu0 0
        %5003 = vmatmul.mubr.bf16.gmra.mrb[0].mxu0 %v4903
        %v5004 = vpop.f32.mrb[0].mxu0
        %v5005 = vadd.f32 0.0, %v5004
        %v5006 = vpop.f32.mrb[0].mxu0
        %v5007 = vpop.f32.mrb[0].mxu0
        %v5008 = vadd.f32 0.0, %v5007
        %v5009 = vpop.f32.mrb[0].mxu0
        %5010 = vmatprep.mubr.bf16.mxu0 0
        %5011 = vmatmul.mubr.bf16.gmra.mrb[0].mxu0 %v4904
        %v5012 = vpop.f32.mrb[0].mxu0
        %v5013 = vadd.f32 0.0, %v5012
        %v5014 = vpop.f32.mrb[0].mxu0
        %v5015 = vpop.f32.mrb[0].mxu0
        %v5016 = vadd.f32 0.0, %v5015
        %v5017 = vpop.f32.mrb[0].mxu0
        %5018 = vmatprep.mubr.bf16.mxu0 0
        %5019 = vmatmul.mubr.bf16.gmra.mrb[0].mxu0 %v4905
        %v5020 = vpop.f32.mrb[0].mxu0
        %v5021 = vadd.f32 0.0, %v5020
        %v5022 = vpop.f32.mrb[0].mxu0
        %v5023 = vpop.f32.mrb[0].mxu0
        %v5024 = vadd.f32 0.0, %v5023
        %v5025 = vpop.f32.mrb[0].mxu0
        %5026 = vmatprep.mubr.bf16.mxu0 0
        %5027 = vmatmul.mubr.bf16.gmra.mrb[0].mxu0 %v4906
        %v5028 = vpop.f32.mrb[0].mxu0
        %v5029 = vadd.f32 0.0, %v5028
        %v5030 = vpop.f32.mrb[0].mxu0
        %v5031 = vpop.f32.mrb[0].mxu0
        %v5032 = vadd.f32 0.0, %v5031
        %v5033 = vpop.f32.mrb[0].mxu0
        %5034 = vmatprep.mubr.bf16.mxu0 0
        %5035 = vmatmul.mubr.bf16.gmra.mrb[0].mxu0 %v4907
        %v5036 = vpop.f32.mrb[0].mxu0
        %v5037 = vadd.f32 0.0, %v5036
        %v5038 = vpop.f32.mrb[0].mxu0
        %v5039 = vpop.f32.mrb[0].mxu0
        %v5040 = vadd.f32 0.0, %v5039
        %v5041 = vpop.f32.mrb[0].mxu0
        %5042 = vmatprep.mubr.bf16.mxu0 0
        %5043 = vmatmul.mubr.bf16.gmra.mrb[0].mxu0 %v4908
        %v5044 = vpop.f32.mrb[0].mxu0
        %v5045 = vadd.f32 0.0, %v5044
        %v5046 = vpop.f32.mrb[0].mxu0
        %v5047 = vpop.f32.mrb[0].mxu0
        %v5048 = vadd.f32 0.0, %v5047
        %v5049 = vpop.f32.mrb[0].mxu0
        %5050 = vmatprep.mubr.bf16.mxu0 0
        %5051 = vmatmul.mubr.bf16.gmra.mrb[0].mxu0 %v4909
        %v5052 = vpop.f32.mrb[0].mxu0
        %v5053 = vadd.f32 0.0, %v5052
        %v5054 = vpop.f32.mrb[0].mxu0
        %v5055 = vpop.f32.mrb[0].mxu0
        %v5056 = vadd.f32 0.0, %v5055
        %v5057 = vpop.f32.mrb[0].mxu0
        %5058 = vmatprep.mubr.bf16.mxu0 0
        %5059 = vmatmul.mubr.bf16.gmra.mrb[0].mxu0 %v4910
        %v5060 = vpop.f32.mrb[0].mxu0
        %v5061 = vadd.f32 0.0, %v5060
        %v5062 = vpop.f32.mrb[0].mxu0
        %v5063 = vpop.f32.mrb[0].mxu0
        %v5064 = vadd.f32 0.0, %v5063
        %v5065 = vpop.f32.mrb[0].mxu0
        %5066 = vmatprep.mubr.bf16.mxu0 0
        %5067 = vmatmul.mubr.bf16.gmra.mrb[0].mxu0 %v4911
        %v5068 = vpop.f32.mrb[0].mxu0
        %v5069 = vadd.f32 0.0, %v5068
        %v5070 = vpop.f32.mrb[0].mxu0
        %v5071 = vpop.f32.mrb[0].mxu0
        %v5072 = vadd.f32 0.0, %v5071
        %v5073 = vpop.f32.mrb[0].mxu0
        %5074 = vmatprep.mubr.bf16.mxu0 0
        %5075 = vmatmul.mubr.bf16.gmra.mrb[0].mxu0 %v4912
        %v5076 = vpop.f32.mrb[0].mxu0
        %v5077 = vadd.f32 0.0, %v5076
        %v5078 = vpop.f32.mrb[0].mxu0
        %v5079 = vpop.f32.mrb[0].mxu0
        %v5080 = vadd.f32 0.0, %v5079
        %v5081 = vpop.f32.mrb[0].mxu0
        %5082 = vmatprep.mubr.bf16.mxu0 0
        %5083 = vmatmul.mubr.bf16.gmra.mrb[0].mxu0 %v4913
        %v5084 = vpop.f32.mrb[0].mxu0
        %v5085 = vadd.f32 0.0, %v5084
        %v5086 = vpop.f32.mrb[0].mxu0
        %v5087 = vpop.f32.mrb[0].mxu0
        %v5088 = vadd.f32 0.0, %v5087
        %v5089 = vpop.f32.mrb[0].mxu0
        %5090 = vdwg.mxu0
        %v5091 = vpack.c.bf16 %v4968, %v4965
        %v5092 = vpack.c.bf16 %v4976, %v4973
        %v5093 = vpack.c.bf16 %v4984, %v4981
        %v5094 = vpack.c.bf16 %v4992, %v4989
        %v5095 = vpack.c.bf16 %v5000, %v4997
        %v5096 = vpack.c.bf16 %v5008, %v5005
        %v5097 = vpack.c.bf16 %v5016, %v5013
        %v5098 = vpack.c.bf16 %v5024, %v5021
        %v5099 = vpack.c.bf16 %v5032, %v5029
        %v5100 = vpack.c.bf16 %v5040, %v5037
        %v5101 = vpack.c.bf16 %v5048, %v5045
        %v5102 = vpack.c.bf16 %v5056, %v5053
        %v5103 = vpack.c.bf16 %v5064, %v5061
        %v5104 = vpack.c.bf16 %v5072, %v5069
        %v5105 = vpack.c.bf16 %v5080, %v5077
        %v5106 = vpack.c.bf16 %v5088, %v5085
        %s5107 = scalar_lea.vmem %s18, 256
        %v5108 = vld [vmem:[%s5107] sm:$0xf]
        %v5109 = vld [vmem:[%s5107 + $0x4] sm:$0xf]
        %v5110 = vld [vmem:[%s5107 + $0x8] sm:$0xf]
        %v5111 = vld [vmem:[%s5107 + $0xc] sm:$0xf]
        %v5112 = vld [vmem:[%s5107 + $0x10] sm:$0xf]
        %v5113 = vld [vmem:[%s5107 + $0x14] sm:$0xf]
        %v5114 = vld [vmem:[%s5107 + $0x18] sm:$0xf]
        %v5115 = vld [vmem:[%s5107 + $0x1c] sm:$0xf]
        %v5116 = vld [vmem:[%s5107 + $0x20] sm:$0xf]
        %v5117 = vld [vmem:[%s5107 + $0x24] sm:$0xf]
        %v5118 = vld [vmem:[%s5107 + $0x28] sm:$0xf]
        %v5119 = vld [vmem:[%s5107 + $0x2c] sm:$0xf]
        %v5120 = vld [vmem:[%s5107 + $0x30] sm:$0xf]
        %v5121 = vld [vmem:[%s5107 + $0x34] sm:$0xf]
        %v5122 = vld [vmem:[%s5107 + $0x38] sm:$0xf]
        %v5123 = vld [vmem:[%s5107 + $0x3c] sm:$0xf]
        %v5124 = vld [vmem:[%s5107 + $0x40] sm:$0xf]
        %v5125 = vld [vmem:[%s5107 + $0x44] sm:$0xf]
        %v5126 = vld [vmem:[%s5107 + $0x48] sm:$0xf]
        %v5127 = vld [vmem:[%s5107 + $0x4c] sm:$0xf]
        %v5128 = vld [vmem:[%s5107 + $0x50] sm:$0xf]
        %v5129 = vld [vmem:[%s5107 + $0x54] sm:$0xf]
        %v5130 = vld [vmem:[%s5107 + $0x58] sm:$0xf]
        %v5131 = vld [vmem:[%s5107 + $0x5c] sm:$0xf]
        %v5132 = vld [vmem:[%s5107 + $0x60] sm:$0xf]
        %v5133 = vld [vmem:[%s5107 + $0x64] sm:$0xf]
        %v5134 = vld [vmem:[%s5107 + $0x68] sm:$0xf]
        %v5135 = vld [vmem:[%s5107 + $0x6c] sm:$0xf]
        %v5136 = vld [vmem:[%s5107 + $0x70] sm:$0xf]
        %v5137 = vld [vmem:[%s5107 + $0x74] sm:$0xf]
        %v5138 = vld [vmem:[%s5107 + $0x78] sm:$0xf]
        %v5139 = vld [vmem:[%s5107 + $0x7c] sm:$0xf]
        %v5172 = vunpack.c.l.b16 %v5108
        %v5173 = vunpack.c.l.b16 %v5109
        %v5174 = vunpack.c.l.b16 %v5110
        %v5175 = vunpack.c.l.b16 %v5111
        %v5176 = vunpack.c.l.b16 %v5112
        %v5177 = vunpack.c.l.b16 %v5113
        %v5178 = vunpack.c.l.b16 %v5114
        %v5179 = vunpack.c.l.b16 %v5115
        %v5180 = vunpack.c.l.b16 %v5116
        %v5181 = vunpack.c.l.b16 %v5117
        %v5182 = vunpack.c.l.b16 %v5118
        %v5183 = vunpack.c.l.b16 %v5119
        %v5184 = vunpack.c.l.b16 %v5120
        %v5185 = vunpack.c.l.b16 %v5121
        %v5186 = vunpack.c.l.b16 %v5122
        %v5187 = vunpack.c.l.b16 %v5123
        %v5188 = vunpack.c.l.b16 %v5124
        %v5189 = vunpack.c.l.b16 %v5125
        %v5190 = vunpack.c.l.b16 %v5126
        %v5191 = vunpack.c.l.b16 %v5127
        %v5192 = vunpack.c.l.b16 %v5128
        %v5193 = vunpack.c.l.b16 %v5129
        %v5194 = vunpack.c.l.b16 %v5130
        %v5195 = vunpack.c.l.b16 %v5131
        %v5196 = vunpack.c.l.b16 %v5132
        %v5197 = vunpack.c.l.b16 %v5133
        %v5198 = vunpack.c.l.b16 %v5134
        %v5199 = vunpack.c.l.b16 %v5135
        %v5200 = vunpack.c.l.b16 %v5136
        %v5201 = vunpack.c.l.b16 %v5137
        %v5202 = vunpack.c.l.b16 %v5138
        %v5203 = vunpack.c.l.b16 %v5139
        %v5204 = vpack.c.b16 %v5173, %v5172
        %v5205 = vpack.c.b16 %v5175, %v5174
        %v5206 = vpack.c.b16 %v5177, %v5176
        %v5207 = vpack.c.b16 %v5179, %v5178
        %v5208 = vpack.c.b16 %v5181, %v5180
        %v5209 = vpack.c.b16 %v5183, %v5182
        %v5210 = vpack.c.b16 %v5185, %v5184
        %v5211 = vpack.c.b16 %v5187, %v5186
        %v5212 = vpack.c.b16 %v5189, %v5188
        %v5213 = vpack.c.b16 %v5191, %v5190
        %v5214 = vpack.c.b16 %v5193, %v5192
        %v5215 = vpack.c.b16 %v5195, %v5194
        %v5216 = vpack.c.b16 %v5197, %v5196
        %v5217 = vpack.c.b16 %v5199, %v5198
        %v5218 = vpack.c.b16 %v5201, %v5200
        %v5219 = vpack.c.b16 %v5203, %v5202
        %5236 = vmatprep.subr.bf16.mxu0 0
        %5237 = vmatpush1.bf16.msra.mxu0 %v4488
        %5238 = vmatprep.subr.bf16.mxu0 0
        %5239 = vmatpush1.bf16.msra.mxu0 %v4489
        %5240 = vmatprep.subr.bf16.mxu0 0
        %5241 = vmatpush1.bf16.msra.mxu0 %v4490
        %5242 = vmatprep.subr.bf16.mxu0 0
        %5243 = vmatpush1.bf16.msra.mxu0 %v4491
        %5244 = vmatprep.subr.bf16.mxu0 0
        %5245 = vmatpush1.bf16.msra.mxu0 %v4492
        %5246 = vmatprep.subr.bf16.mxu0 0
        %5247 = vmatpush1.bf16.msra.mxu0 %v4493
        %5248 = vmatprep.subr.bf16.mxu0 0
        %5249 = vmatpush1.bf16.msra.mxu0 %v4494
        %5250 = vmatprep.subr.bf16.mxu0 0
        %5251 = vmatpush1.bf16.msra.mxu0 %v4495
        %5252 = vmatprep.subr.bf16.mxu0 0
        %5253 = vmatpush1.bf16.msra.mxu0 0
        %5254 = vmatprep.subr.bf16.mxu0 0
        %5255 = vmatpush1.bf16.msra.mxu0 0
        %5256 = vmatprep.subr.bf16.mxu0 0
        %5257 = vmatpush1.bf16.msra.mxu0 0
        %5258 = vmatprep.subr.bf16.mxu0 0
        %5259 = vmatpush1.bf16.msra.mxu0 0
        %5260 = vmatprep.subr.bf16.mxu0 0
        %5261 = vmatpush1.bf16.msra.mxu0 0
        %5262 = vmatprep.subr.bf16.mxu0 0
        %5263 = vmatpush1.bf16.msra.mxu0 0
        %5264 = vmatprep.subr.bf16.mxu0 0
        %5265 = vmatpush1.bf16.msra.mxu0 0
        %5266 = vmatprep.subr.bf16.mxu0 0
        %5267 = vmatpush1.bf16.msra.mxu0 0
        %5268 = vmatprep.mubr.bf16.mxu0 0
        %5269 = vmatmul.mubr.bf16.gmra.mrb[0].mxu0 %v5204
        %v5270 = vpop.f32.mrb[0].mxu0
        %v5271 = vadd.f32 0.0, %v5270
        %v5272 = vpop.f32.mrb[0].mxu0
        %v5273 = vpop.f32.mrb[0].mxu0
        %v5274 = vadd.f32 0.0, %v5273
        %v5275 = vpop.f32.mrb[0].mxu0
        %5276 = vmatprep.mubr.bf16.mxu0 0
        %5277 = vmatmul.mubr.bf16.gmra.mrb[0].mxu0 %v5205
        %v5278 = vpop.f32.mrb[0].mxu0
        %v5279 = vadd.f32 0.0, %v5278
        %v5280 = vpop.f32.mrb[0].mxu0
        %v5281 = vpop.f32.mrb[0].mxu0
        %v5282 = vadd.f32 0.0, %v5281
        %v5283 = vpop.f32.mrb[0].mxu0
        %5284 = vmatprep.mubr.bf16.mxu0 0
        %5285 = vmatmul.mubr.bf16.gmra.mrb[0].mxu0 %v5206
        %v5286 = vpop.f32.mrb[0].mxu0
        %v5287 = vadd.f32 0.0, %v5286
        %v5288 = vpop.f32.mrb[0].mxu0
        %v5289 = vpop.f32.mrb[0].mxu0
        %v5290 = vadd.f32 0.0, %v5289
        %v5291 = vpop.f32.mrb[0].mxu0
        %5292 = vmatprep.mubr.bf16.mxu0 0
        %5293 = vmatmul.mubr.bf16.gmra.mrb[0].mxu0 %v5207
        %v5294 = vpop.f32.mrb[0].mxu0
        %v5295 = vadd.f32 0.0, %v5294
        %v5296 = vpop.f32.mrb[0].mxu0
        %v5297 = vpop.f32.mrb[0].mxu0
        %v5298 = vadd.f32 0.0, %v5297
        %v5299 = vpop.f32.mrb[0].mxu0
        %5300 = vmatprep.mubr.bf16.mxu0 0
        %5301 = vmatmul.mubr.bf16.gmra.mrb[0].mxu0 %v5208
        %v5302 = vpop.f32.mrb[0].mxu0
        %v5303 = vadd.f32 0.0, %v5302
        %v5304 = vpop.f32.mrb[0].mxu0
        %v5305 = vpop.f32.mrb[0].mxu0
        %v5306 = vadd.f32 0.0, %v5305
        %v5307 = vpop.f32.mrb[0].mxu0
        %5308 = vmatprep.mubr.bf16.mxu0 0
        %5309 = vmatmul.mubr.bf16.gmra.mrb[0].mxu0 %v5209
        %v5310 = vpop.f32.mrb[0].mxu0
        %v5311 = vadd.f32 0.0, %v5310
        %v5312 = vpop.f32.mrb[0].mxu0
        %v5313 = vpop.f32.mrb[0].mxu0
        %v5314 = vadd.f32 0.0, %v5313
        %v5315 = vpop.f32.mrb[0].mxu0
        %5316 = vmatprep.mubr.bf16.mxu0 0
        %5317 = vmatmul.mubr.bf16.gmra.mrb[0].mxu0 %v5210
        %v5318 = vpop.f32.mrb[0].mxu0
        %v5319 = vadd.f32 0.0, %v5318
        %v5320 = vpop.f32.mrb[0].mxu0
        %v5321 = vpop.f32.mrb[0].mxu0
        %v5322 = vadd.f32 0.0, %v5321
        %v5323 = vpop.f32.mrb[0].mxu0
        %5324 = vmatprep.mubr.bf16.mxu0 0
        %5325 = vmatmul.mubr.bf16.gmra.mrb[0].mxu0 %v5211
        %v5326 = vpop.f32.mrb[0].mxu0
        %v5327 = vadd.f32 0.0, %v5326
        %v5328 = vpop.f32.mrb[0].mxu0
        %v5329 = vpop.f32.mrb[0].mxu0
        %v5330 = vadd.f32 0.0, %v5329
        %v5331 = vpop.f32.mrb[0].mxu0
        %5332 = vmatprep.mubr.bf16.mxu0 0
        %5333 = vmatmul.mubr.bf16.gmra.mrb[0].mxu0 %v5212
        %v5334 = vpop.f32.mrb[0].mxu0
        %v5335 = vadd.f32 0.0, %v5334
        %v5336 = vpop.f32.mrb[0].mxu0
        %v5337 = vpop.f32.mrb[0].mxu0
        %v5338 = vadd.f32 0.0, %v5337
        %v5339 = vpop.f32.mrb[0].mxu0
        %5340 = vmatprep.mubr.bf16.mxu0 0
        %5341 = vmatmul.mubr.bf16.gmra.mrb[0].mxu0 %v5213
        %v5342 = vpop.f32.mrb[0].mxu0
        %v5343 = vadd.f32 0.0, %v5342
        %v5344 = vpop.f32.mrb[0].mxu0
        %v5345 = vpop.f32.mrb[0].mxu0
        %v5346 = vadd.f32 0.0, %v5345
        %v5347 = vpop.f32.mrb[0].mxu0
        %5348 = vmatprep.mubr.bf16.mxu0 0
        %5349 = vmatmul.mubr.bf16.gmra.mrb[0].mxu0 %v5214
        %v5350 = vpop.f32.mrb[0].mxu0
        %v5351 = vadd.f32 0.0, %v5350
        %v5352 = vpop.f32.mrb[0].mxu0
        %v5353 = vpop.f32.mrb[0].mxu0
        %v5354 = vadd.f32 0.0, %v5353
        %v5355 = vpop.f32.mrb[0].mxu0
        %5356 = vmatprep.mubr.bf16.mxu0 0
        %5357 = vmatmul.mubr.bf16.gmra.mrb[0].mxu0 %v5215
        %v5358 = vpop.f32.mrb[0].mxu0
        %v5359 = vadd.f32 0.0, %v5358
        %v5360 = vpop.f32.mrb[0].mxu0
        %v5361 = vpop.f32.mrb[0].mxu0
        %v5362 = vadd.f32 0.0, %v5361
        %v5363 = vpop.f32.mrb[0].mxu0
        %5364 = vmatprep.mubr.bf16.mxu0 0
        %5365 = vmatmul.mubr.bf16.gmra.mrb[0].mxu0 %v5216
        %v5366 = vpop.f32.mrb[0].mxu0
        %v5367 = vadd.f32 0.0, %v5366
        %v5368 = vpop.f32.mrb[0].mxu0
        %v5369 = vpop.f32.mrb[0].mxu0
        %v5370 = vadd.f32 0.0, %v5369
        %v5371 = vpop.f32.mrb[0].mxu0
        %5372 = vmatprep.mubr.bf16.mxu0 0
        %5373 = vmatmul.mubr.bf16.gmra.mrb[0].mxu0 %v5217
        %v5374 = vpop.f32.mrb[0].mxu0
        %v5375 = vadd.f32 0.0, %v5374
        %v5376 = vpop.f32.mrb[0].mxu0
        %v5377 = vpop.f32.mrb[0].mxu0
        %v5378 = vadd.f32 0.0, %v5377
        %v5379 = vpop.f32.mrb[0].mxu0
        %5380 = vmatprep.mubr.bf16.mxu0 0
        %5381 = vmatmul.mubr.bf16.gmra.mrb[0].mxu0 %v5218
        %v5382 = vpop.f32.mrb[0].mxu0
        %v5383 = vadd.f32 0.0, %v5382
        %v5384 = vpop.f32.mrb[0].mxu0
        %v5385 = vpop.f32.mrb[0].mxu0
        %v5386 = vadd.f32 0.0, %v5385
        %v5387 = vpop.f32.mrb[0].mxu0
        %5388 = vmatprep.mubr.bf16.mxu0 0
        %5389 = vmatmul.mubr.bf16.gmra.mrb[0].mxu0 %v5219
        %v5390 = vpop.f32.mrb[0].mxu0
        %v5391 = vadd.f32 0.0, %v5390
        %v5392 = vpop.f32.mrb[0].mxu0
        %v5393 = vpop.f32.mrb[0].mxu0
        %v5394 = vadd.f32 0.0, %v5393
        %v5395 = vpop.f32.mrb[0].mxu0
        %5396 = vdwg.mxu0
        %v5397 = vpack.c.bf16 %v5274, %v5271
        %v5398 = vpack.c.bf16 %v5282, %v5279
        %v5399 = vpack.c.bf16 %v5290, %v5287
        %v5400 = vpack.c.bf16 %v5298, %v5295
        %v5401 = vpack.c.bf16 %v5306, %v5303
        %v5402 = vpack.c.bf16 %v5314, %v5311
        %v5403 = vpack.c.bf16 %v5322, %v5319
        %v5404 = vpack.c.bf16 %v5330, %v5327
        %v5405 = vpack.c.bf16 %v5338, %v5335
        %v5406 = vpack.c.bf16 %v5346, %v5343
        %v5407 = vpack.c.bf16 %v5354, %v5351
        %v5408 = vpack.c.bf16 %v5362, %v5359
        %v5409 = vpack.c.bf16 %v5370, %v5367
        %v5410 = vpack.c.bf16 %v5378, %v5375
        %v5411 = vpack.c.bf16 %v5386, %v5383
        %v5412 = vpack.c.bf16 %v5394, %v5391
        %v5413 = vld [vmem:[#allocation21] sm:$0xff]
        %v5414 = vld [vmem:[#allocation21 + $0x8] sm:$0xff]
        %v5415 = vld [vmem:[#allocation21 + $0x10] sm:$0xff]
        %v5416 = vld [vmem:[#allocation21 + $0x18] sm:$0xff]
        %v5417 = vld [vmem:[#allocation21 + $0x20] sm:$0xff]
        %v5418 = vld [vmem:[#allocation21 + $0x28] sm:$0xff]
        %v5419 = vld [vmem:[#allocation21 + $0x30] sm:$0xff]
        %v5420 = vld [vmem:[#allocation21 + $0x38] sm:$0xff]
        %v5421 = vld [vmem:[#allocation21 + $0x40] sm:$0xff]
        %v5422 = vld [vmem:[#allocation21 + $0x48] sm:$0xff]
        %v5423 = vld [vmem:[#allocation21 + $0x50] sm:$0xff]
        %v5424 = vld [vmem:[#allocation21 + $0x58] sm:$0xff]
        %v5425 = vld [vmem:[#allocation21 + $0x60] sm:$0xff]
        %v5426 = vld [vmem:[#allocation21 + $0x68] sm:$0xff]
        %v5427 = vld [vmem:[#allocation21 + $0x70] sm:$0xff]
        %v5428 = vld [vmem:[#allocation21 + $0x78] sm:$0xff]
        %v5429 = vld [vmem:[#allocation21 + $0x80] sm:$0xff]
        %v5430 = vld [vmem:[#allocation21 + $0x88] sm:$0xff]
        %v5431 = vld [vmem:[#allocation21 + $0x90] sm:$0xff]
        %v5432 = vld [vmem:[#allocation21 + $0x98] sm:$0xff]
        %v5433 = vld [vmem:[#allocation21 + $0xa0] sm:$0xff]
        %v5434 = vld [vmem:[#allocation21 + $0xa8] sm:$0xff]
        %v5435 = vld [vmem:[#allocation21 + $0xb0] sm:$0xff]
        %v5436 = vld [vmem:[#allocation21 + $0xb8] sm:$0xff]
        %v5437 = vld [vmem:[#allocation21 + $0xc0] sm:$0xff]
        %v5438 = vld [vmem:[#allocation21 + $0xc8] sm:$0xff]
        %v5439 = vld [vmem:[#allocation21 + $0xd0] sm:$0xff]
        %v5440 = vld [vmem:[#allocation21 + $0xd8] sm:$0xff]
        %v5441 = vld [vmem:[#allocation21 + $0xe0] sm:$0xff]
        %v5442 = vld [vmem:[#allocation21 + $0xe8] sm:$0xff]
        %v5443 = vld [vmem:[#allocation21 + $0xf0] sm:$0xff]
        %v5444 = vld [vmem:[#allocation21 + $0xf8] sm:$0xff]
        %v5445 = vld [vmem:[#allocation19] sm:$0xf]
        %v5446 = vld [vmem:[#allocation19 + $0x4] sm:$0xf]
        %v5447 = vld [vmem:[#allocation19 + $0x8] sm:$0xf]
        %v5448 = vld [vmem:[#allocation19 + $0xc] sm:$0xf]
        %v5449 = vld [vmem:[#allocation19 + $0x10] sm:$0xf]
        %v5450 = vld [vmem:[#allocation19 + $0x14] sm:$0xf]
        %v5451 = vld [vmem:[#allocation19 + $0x18] sm:$0xf]
        %v5452 = vld [vmem:[#allocation19 + $0x1c] sm:$0xf]
        %v5453 = vld [vmem:[#allocation19 + $0x20] sm:$0xf]
        %v5454 = vld [vmem:[#allocation19 + $0x24] sm:$0xf]
        %v5455 = vld [vmem:[#allocation19 + $0x28] sm:$0xf]
        %v5456 = vld [vmem:[#allocation19 + $0x2c] sm:$0xf]
        %v5457 = vld [vmem:[#allocation19 + $0x30] sm:$0xf]
        %v5458 = vld [vmem:[#allocation19 + $0x34] sm:$0xf]
        %v5459 = vld [vmem:[#allocation19 + $0x38] sm:$0xf]
        %v5460 = vld [vmem:[#allocation19 + $0x3c] sm:$0xf]
        %v5461 = vld [vmem:[#allocation19 + $0x40] sm:$0xf]
        %v5462 = vld [vmem:[#allocation19 + $0x44] sm:$0xf]
        %v5463 = vld [vmem:[#allocation19 + $0x48] sm:$0xf]
        %v5464 = vld [vmem:[#allocation19 + $0x4c] sm:$0xf]
        %v5465 = vld [vmem:[#allocation19 + $0x50] sm:$0xf]
        %v5466 = vld [vmem:[#allocation19 + $0x54] sm:$0xf]
        %v5467 = vld [vmem:[#allocation19 + $0x58] sm:$0xf]
        %v5468 = vld [vmem:[#allocation19 + $0x5c] sm:$0xf]
        %v5469 = vld [vmem:[#allocation19 + $0x60] sm:$0xf]
        %v5470 = vld [vmem:[#allocation19 + $0x64] sm:$0xf]
        %v5471 = vld [vmem:[#allocation19 + $0x68] sm:$0xf]
        %v5472 = vld [vmem:[#allocation19 + $0x6c] sm:$0xf]
        %v5473 = vld [vmem:[#allocation19 + $0x70] sm:$0xf]
        %v5474 = vld [vmem:[#allocation19 + $0x74] sm:$0xf]
        %v5475 = vld [vmem:[#allocation19 + $0x78] sm:$0xf]
        %v5476 = vld [vmem:[#allocation19 + $0x7c] sm:$0xf]
        %v5477 = vld [vmem:[#allocation19 + $0x80] sm:$0xf]
        %v5478 = vld [vmem:[#allocation19 + $0x84] sm:$0xf]
        %v5479 = vld [vmem:[#allocation19 + $0x88] sm:$0xf]
        %v5480 = vld [vmem:[#allocation19 + $0x8c] sm:$0xf]
        %v5481 = vld [vmem:[#allocation19 + $0x90] sm:$0xf]
        %v5482 = vld [vmem:[#allocation19 + $0x94] sm:$0xf]
        %v5483 = vld [vmem:[#allocation19 + $0x98] sm:$0xf]
        %v5484 = vld [vmem:[#allocation19 + $0x9c] sm:$0xf]
        %v5485 = vld [vmem:[#allocation19 + $0xa0] sm:$0xf]
        %v5486 = vld [vmem:[#allocation19 + $0xa4] sm:$0xf]
        %v5487 = vld [vmem:[#allocation19 + $0xa8] sm:$0xf]
        %v5488 = vld [vmem:[#allocation19 + $0xac] sm:$0xf]
        %v5489 = vld [vmem:[#allocation19 + $0xb0] sm:$0xf]
        %v5490 = vld [vmem:[#allocation19 + $0xb4] sm:$0xf]
        %v5491 = vld [vmem:[#allocation19 + $0xb8] sm:$0xf]
        %v5492 = vld [vmem:[#allocation19 + $0xbc] sm:$0xf]
        %v5541 = vunpack.c.l.b16 %v5445
        %v5542 = vunpack.c.l.b16 %v5446
        %v5543 = vunpack.c.l.b16 %v5447
        %v5544 = vunpack.c.l.b16 %v5448
        %v5545 = vunpack.c.l.b16 %v5449
        %v5546 = vunpack.c.l.b16 %v5450
        %v5547 = vunpack.c.l.b16 %v5451
        %v5548 = vunpack.c.l.b16 %v5452
        %v5549 = vunpack.c.l.b16 %v5453
        %v5550 = vunpack.c.l.b16 %v5454
        %v5551 = vunpack.c.l.b16 %v5455
        %v5552 = vunpack.c.l.b16 %v5456
        %v5553 = vunpack.c.l.b16 %v5457
        %v5554 = vunpack.c.l.b16 %v5458
        %v5555 = vunpack.c.l.b16 %v5459
        %v5556 = vunpack.c.l.b16 %v5460
        %v5557 = vunpack.c.l.b16 %v5461
        %v5558 = vunpack.c.l.b16 %v5462
        %v5559 = vunpack.c.l.b16 %v5463
        %v5560 = vunpack.c.l.b16 %v5464
        %v5561 = vunpack.c.l.b16 %v5465
        %v5562 = vunpack.c.l.b16 %v5466
        %v5563 = vunpack.c.l.b16 %v5467
        %v5564 = vunpack.c.l.b16 %v5468
        %v5565 = vunpack.c.l.b16 %v5469
        %v5566 = vunpack.c.l.b16 %v5470
        %v5567 = vunpack.c.l.b16 %v5471
        %v5568 = vunpack.c.l.b16 %v5472
        %v5569 = vunpack.c.l.b16 %v5473
        %v5570 = vunpack.c.l.b16 %v5474
        %v5571 = vunpack.c.l.b16 %v5475
        %v5572 = vunpack.c.l.b16 %v5476
        %v5573 = vunpack.c.l.b16 %v5477
        %v5574 = vunpack.c.l.b16 %v5478
        %v5575 = vunpack.c.l.b16 %v5479
        %v5576 = vunpack.c.l.b16 %v5480
        %v5577 = vunpack.c.l.b16 %v5481
        %v5578 = vunpack.c.l.b16 %v5482
        %v5579 = vunpack.c.l.b16 %v5483
        %v5580 = vunpack.c.l.b16 %v5484
        %v5581 = vunpack.c.l.b16 %v5485
        %v5582 = vunpack.c.l.b16 %v5486
        %v5583 = vunpack.c.l.b16 %v5487
        %v5584 = vunpack.c.l.b16 %v5488
        %v5585 = vunpack.c.l.b16 %v5489
        %v5586 = vunpack.c.l.b16 %v5490
        %v5587 = vunpack.c.l.b16 %v5491
        %v5588 = vunpack.c.l.b16 %v5492
        %v5589 = vpack.c.b16 %v5542, %v5541
        %v5590 = vpack.c.b16 %v5544, %v5543
        %v5591 = vpack.c.b16 %v5546, %v5545
        %v5592 = vpack.c.b16 %v5548, %v5547
        %v5593 = vpack.c.b16 %v5550, %v5549
        %v5594 = vpack.c.b16 %v5552, %v5551
        %v5595 = vpack.c.b16 %v5554, %v5553
        %v5596 = vpack.c.b16 %v5556, %v5555
        %v5597 = vpack.c.b16 %v5558, %v5557
        %v5598 = vpack.c.b16 %v5560, %v5559
        %v5599 = vpack.c.b16 %v5562, %v5561
        %v5600 = vpack.c.b16 %v5564, %v5563
        %v5601 = vpack.c.b16 %v5566, %v5565
        %v5602 = vpack.c.b16 %v5568, %v5567
        %v5603 = vpack.c.b16 %v5570, %v5569
        %v5604 = vpack.c.b16 %v5572, %v5571
        %v5605 = vpack.c.b16 %v5574, %v5573
        %v5606 = vpack.c.b16 %v5576, %v5575
        %v5607 = vpack.c.b16 %v5578, %v5577
        %v5608 = vpack.c.b16 %v5580, %v5579
        %v5609 = vpack.c.b16 %v5582, %v5581
        %v5610 = vpack.c.b16 %v5584, %v5583
        %v5611 = vpack.c.b16 %v5586, %v5585
        %v5612 = vpack.c.b16 %v5588, %v5587
        %5637 = vmatprep.subr.bf16.mxu0 0
        %5638 = vmatpush1.bf16.msra.mxu0 %v5589
        %5639 = vmatprep.subr.bf16.mxu0 0
        %5640 = vmatpush1.bf16.msra.mxu0 %v5590
        %5641 = vmatprep.subr.bf16.mxu0 0
        %5642 = vmatpush1.bf16.msra.mxu0 %v5591
        %5643 = vmatprep.subr.bf16.mxu0 0
        %5644 = vmatpush1.bf16.msra.mxu0 %v5592
        %5645 = vmatprep.subr.bf16.mxu0 0
        %5646 = vmatpush1.bf16.msra.mxu0 %v5593
        %5647 = vmatprep.subr.bf16.mxu0 0
        %5648 = vmatpush1.bf16.msra.mxu0 %v5594
        %5649 = vmatprep.subr.bf16.mxu0 0
        %5650 = vmatpush1.bf16.msra.mxu0 %v5595
        %5651 = vmatprep.subr.bf16.mxu0 0
        %5652 = vmatpush1.bf16.msra.mxu0 %v5596
        %5653 = vmatprep.subr.bf16.mxu0 0
        %5654 = vmatpush1.bf16.msra.mxu0 %v5597
        %5655 = vmatprep.subr.bf16.mxu0 0
        %5656 = vmatpush1.bf16.msra.mxu0 %v5598
        %5657 = vmatprep.subr.bf16.mxu0 0
        %5658 = vmatpush1.bf16.msra.mxu0 %v5599
        %5659 = vmatprep.subr.bf16.mxu0 0
        %5660 = vmatpush1.bf16.msra.mxu0 %v5600
        %5661 = vmatprep.subr.bf16.mxu0 0
        %5662 = vmatpush1.bf16.msra.mxu0 %v5601
        %5663 = vmatprep.subr.bf16.mxu0 0
        %5664 = vmatpush1.bf16.msra.mxu0 %v5602
        %5665 = vmatprep.subr.bf16.mxu0 0
        %5666 = vmatpush1.bf16.msra.mxu0 %v5603
        %5667 = vmatprep.subr.bf16.mxu0 0
        %5668 = vmatpush1.bf16.msra.mxu0 %v5604
        %5669 = vmatprep.mubr.bf16.mxu0 %v5091
        %5670 = vmatmul.mubr.bf16.gmra.mrb[0].mxu0 %v4785
        %v5671 = vpop.f32.mrb[0].mxu0
        %v5672 = vadd.f32 0.0, %v5671
        %v5673 = vpop.f32.mrb[0].mxu0
        %v5674 = vpop.f32.mrb[0].mxu0
        %v5675 = vadd.f32 0.0, %v5674
        %v5676 = vpop.f32.mrb[0].mxu0
        %5677 = vmatprep.mubr.bf16.mxu0 %v5092
        %5678 = vmatmul.mubr.bf16.gmra.mrb[0].mxu0 %v4786
        %v5679 = vpop.f32.mrb[0].mxu0
        %v5680 = vadd.f32 0.0, %v5679
        %v5681 = vpop.f32.mrb[0].mxu0
        %v5682 = vpop.f32.mrb[0].mxu0
        %v5683 = vadd.f32 0.0, %v5682
        %v5684 = vpop.f32.mrb[0].mxu0
        %5685 = vmatprep.mubr.bf16.mxu0 %v5093
        %5686 = vmatmul.mubr.bf16.gmra.mrb[0].mxu0 %v4787
        %v5687 = vpop.f32.mrb[0].mxu0
        %v5688 = vadd.f32 0.0, %v5687
        %v5689 = vpop.f32.mrb[0].mxu0
        %v5690 = vpop.f32.mrb[0].mxu0
        %v5691 = vadd.f32 0.0, %v5690
        %v5692 = vpop.f32.mrb[0].mxu0
        %5693 = vmatprep.mubr.bf16.mxu0 %v5094
        %5694 = vmatmul.mubr.bf16.gmra.mrb[0].mxu0 %v4788
        %v5695 = vpop.f32.mrb[0].mxu0
        %v5696 = vadd.f32 0.0, %v5695
        %v5697 = vpop.f32.mrb[0].mxu0
        %v5698 = vpop.f32.mrb[0].mxu0
        %v5699 = vadd.f32 0.0, %v5698
        %v5700 = vpop.f32.mrb[0].mxu0
        %5701 = vmatprep.mubr.bf16.mxu0 %v5095
        %5702 = vmatmul.mubr.bf16.gmra.mrb[0].mxu0 %v4789
        %v5703 = vpop.f32.mrb[0].mxu0
        %v5704 = vadd.f32 0.0, %v5703
        %v5705 = vpop.f32.mrb[0].mxu0
        %v5706 = vpop.f32.mrb[0].mxu0
        %v5707 = vadd.f32 0.0, %v5706
        %v5708 = vpop.f32.mrb[0].mxu0
        %5709 = vmatprep.mubr.bf16.mxu0 %v5096
        %5710 = vmatmul.mubr.bf16.gmra.mrb[0].mxu0 %v4790
        %v5711 = vpop.f32.mrb[0].mxu0
        %v5712 = vadd.f32 0.0, %v5711
        %v5713 = vpop.f32.mrb[0].mxu0
        %v5714 = vpop.f32.mrb[0].mxu0
        %v5715 = vadd.f32 0.0, %v5714
        %v5716 = vpop.f32.mrb[0].mxu0
        %5717 = vmatprep.mubr.bf16.mxu0 %v5097
        %5718 = vmatmul.mubr.bf16.gmra.mrb[0].mxu0 %v4791
        %v5719 = vpop.f32.mrb[0].mxu0
        %v5720 = vadd.f32 0.0, %v5719
        %v5721 = vpop.f32.mrb[0].mxu0
        %v5722 = vpop.f32.mrb[0].mxu0
        %v5723 = vadd.f32 0.0, %v5722
        %v5724 = vpop.f32.mrb[0].mxu0
        %5725 = vmatprep.mubr.bf16.mxu0 %v5098
        %5726 = vmatmul.mubr.bf16.gmra.mrb[0].mxu0 %v4792
        %v5727 = vpop.f32.mrb[0].mxu0
        %v5728 = vadd.f32 0.0, %v5727
        %v5729 = vpop.f32.mrb[0].mxu0
        %v5730 = vpop.f32.mrb[0].mxu0
        %v5731 = vadd.f32 0.0, %v5730
        %v5732 = vpop.f32.mrb[0].mxu0
        %5733 = vmatprep.mubr.bf16.mxu0 %v5099
        %5734 = vmatmul.mubr.bf16.gmra.mrb[0].mxu0 %v4793
        %v5735 = vpop.f32.mrb[0].mxu0
        %v5736 = vadd.f32 0.0, %v5735
        %v5737 = vpop.f32.mrb[0].mxu0
        %v5738 = vpop.f32.mrb[0].mxu0
        %v5739 = vadd.f32 0.0, %v5738
        %v5740 = vpop.f32.mrb[0].mxu0
        %5741 = vmatprep.mubr.bf16.mxu0 %v5100
        %5742 = vmatmul.mubr.bf16.gmra.mrb[0].mxu0 %v4794
        %v5743 = vpop.f32.mrb[0].mxu0
        %v5744 = vadd.f32 0.0, %v5743
        %v5745 = vpop.f32.mrb[0].mxu0
        %v5746 = vpop.f32.mrb[0].mxu0
        %v5747 = vadd.f32 0.0, %v5746
        %v5748 = vpop.f32.mrb[0].mxu0
        %5749 = vmatprep.mubr.bf16.mxu0 %v5101
        %5750 = vmatmul.mubr.bf16.gmra.mrb[0].mxu0 %v4795
        %v5751 = vpop.f32.mrb[0].mxu0
        %v5752 = vadd.f32 0.0, %v5751
        %v5753 = vpop.f32.mrb[0].mxu0
        %v5754 = vpop.f32.mrb[0].mxu0
        %v5755 = vadd.f32 0.0, %v5754
        %v5756 = vpop.f32.mrb[0].mxu0
        %5757 = vmatprep.mubr.bf16.mxu0 %v5102
        %5758 = vmatmul.mubr.bf16.gmra.mrb[0].mxu0 %v4796
        %v5759 = vpop.f32.mrb[0].mxu0
        %v5760 = vadd.f32 0.0, %v5759
        %v5761 = vpop.f32.mrb[0].mxu0
        %v5762 = vpop.f32.mrb[0].mxu0
        %v5763 = vadd.f32 0.0, %v5762
        %v5764 = vpop.f32.mrb[0].mxu0
        %5765 = vmatprep.mubr.bf16.mxu0 %v5103
        %5766 = vmatmul.mubr.bf16.gmra.mrb[0].mxu0 %v4797
        %v5767 = vpop.f32.mrb[0].mxu0
        %v5768 = vadd.f32 0.0, %v5767
        %v5769 = vpop.f32.mrb[0].mxu0
        %v5770 = vpop.f32.mrb[0].mxu0
        %v5771 = vadd.f32 0.0, %v5770
        %v5772 = vpop.f32.mrb[0].mxu0
        %5773 = vmatprep.mubr.bf16.mxu0 %v5104
        %5774 = vmatmul.mubr.bf16.gmra.mrb[0].mxu0 %v4798
        %v5775 = vpop.f32.mrb[0].mxu0
        %v5776 = vadd.f32 0.0, %v5775
        %v5777 = vpop.f32.mrb[0].mxu0
        %v5778 = vpop.f32.mrb[0].mxu0
        %v5779 = vadd.f32 0.0, %v5778
        %v5780 = vpop.f32.mrb[0].mxu0
        %5781 = vmatprep.mubr.bf16.mxu0 %v5105
        %5782 = vmatmul.mubr.bf16.gmra.mrb[0].mxu0 %v4799
        %v5783 = vpop.f32.mrb[0].mxu0
        %v5784 = vadd.f32 0.0, %v5783
        %v5785 = vpop.f32.mrb[0].mxu0
        %v5786 = vpop.f32.mrb[0].mxu0
        %v5787 = vadd.f32 0.0, %v5786
        %v5788 = vpop.f32.mrb[0].mxu0
        %5789 = vmatprep.mubr.bf16.mxu0 %v5106
        %5790 = vmatmul.mubr.bf16.gmra.mrb[0].mxu0 %v4800
        %v5791 = vpop.f32.mrb[0].mxu0
        %v5792 = vadd.f32 0.0, %v5791
        %v5793 = vpop.f32.mrb[0].mxu0
        %v5794 = vpop.f32.mrb[0].mxu0
        %v5795 = vadd.f32 0.0, %v5794
        %v5796 = vpop.f32.mrb[0].mxu0
        %5797 = vdwg.mxu0
        %5798 = vmatprep.subr.bf16.mxu0 0
        %5799 = vmatpush1.bf16.msra.mxu0 %v5605
        %5800 = vmatprep.subr.bf16.mxu0 0
        %5801 = vmatpush1.bf16.msra.mxu0 %v5606
        %5802 = vmatprep.subr.bf16.mxu0 0
        %5803 = vmatpush1.bf16.msra.mxu0 %v5607
        %5804 = vmatprep.subr.bf16.mxu0 0
        %5805 = vmatpush1.bf16.msra.mxu0 %v5608
        %5806 = vmatprep.subr.bf16.mxu0 0
        %5807 = vmatpush1.bf16.msra.mxu0 %v5609
        %5808 = vmatprep.subr.bf16.mxu0 0
        %5809 = vmatpush1.bf16.msra.mxu0 %v5610
        %5810 = vmatprep.subr.bf16.mxu0 0
        %5811 = vmatpush1.bf16.msra.mxu0 %v5611
        %5812 = vmatprep.subr.bf16.mxu0 0
        %5813 = vmatpush1.bf16.msra.mxu0 %v5612
        %5814 = vmatprep.subr.bf16.mxu0 0
        %5815 = vmatpush1.bf16.msra.mxu0 0
        %5816 = vmatprep.subr.bf16.mxu0 0
        %5817 = vmatpush1.bf16.msra.mxu0 0
        %5818 = vmatprep.subr.bf16.mxu0 0
        %5819 = vmatpush1.bf16.msra.mxu0 0
        %5820 = vmatprep.subr.bf16.mxu0 0
        %5821 = vmatpush1.bf16.msra.mxu0 0
        %5822 = vmatprep.subr.bf16.mxu0 0
        %5823 = vmatpush1.bf16.msra.mxu0 0
        %5824 = vmatprep.subr.bf16.mxu0 0
        %5825 = vmatpush1.bf16.msra.mxu0 0
        %5826 = vmatprep.subr.bf16.mxu0 0
        %5827 = vmatpush1.bf16.msra.mxu0 0
        %5828 = vmatprep.subr.bf16.mxu0 0
        %5829 = vmatpush1.bf16.msra.mxu0 0
        %5830 = vmatprep.mubr.bf16.mxu0 0
        %5831 = vmatmul.mubr.bf16.gmra.mrb[0].mxu0 %v5397
        %v5832 = vpop.f32.mrb[0].mxu0
        %v5833 = vadd.f32 %v5672, %v5832
        %v5834 = vpop.f32.mrb[0].mxu0
        %v5835 = vpop.f32.mrb[0].mxu0
        %v5836 = vadd.f32 %v5675, %v5835
        %v5837 = vpop.f32.mrb[0].mxu0
        %5838 = vmatprep.mubr.bf16.mxu0 0
        %5839 = vmatmul.mubr.bf16.gmra.mrb[0].mxu0 %v5398
        %v5840 = vpop.f32.mrb[0].mxu0
        %v5841 = vadd.f32 %v5680, %v5840
        %v5842 = vpop.f32.mrb[0].mxu0
        %v5843 = vpop.f32.mrb[0].mxu0
        %v5844 = vadd.f32 %v5683, %v5843
        %v5845 = vpop.f32.mrb[0].mxu0
        %5846 = vmatprep.mubr.bf16.mxu0 0
        %5847 = vmatmul.mubr.bf16.gmra.mrb[0].mxu0 %v5399
        %v5848 = vpop.f32.mrb[0].mxu0
        %v5849 = vadd.f32 %v5688, %v5848
        %v5850 = vpop.f32.mrb[0].mxu0
        %v5851 = vpop.f32.mrb[0].mxu0
        %v5852 = vadd.f32 %v5691, %v5851
        %v5853 = vpop.f32.mrb[0].mxu0
        %5854 = vmatprep.mubr.bf16.mxu0 0
        %5855 = vmatmul.mubr.bf16.gmra.mrb[0].mxu0 %v5400
        %v5856 = vpop.f32.mrb[0].mxu0
        %v5857 = vadd.f32 %v5696, %v5856
        %v5858 = vpop.f32.mrb[0].mxu0
        %v5859 = vpop.f32.mrb[0].mxu0
        %v5860 = vadd.f32 %v5699, %v5859
        %v5861 = vpop.f32.mrb[0].mxu0
        %5862 = vmatprep.mubr.bf16.mxu0 0
        %5863 = vmatmul.mubr.bf16.gmra.mrb[0].mxu0 %v5401
        %v5864 = vpop.f32.mrb[0].mxu0
        %v5865 = vadd.f32 %v5704, %v5864
        %v5866 = vpop.f32.mrb[0].mxu0
        %v5867 = vpop.f32.mrb[0].mxu0
        %v5868 = vadd.f32 %v5707, %v5867
        %v5869 = vpop.f32.mrb[0].mxu0
        %5870 = vmatprep.mubr.bf16.mxu0 0
        %5871 = vmatmul.mubr.bf16.gmra.mrb[0].mxu0 %v5402
        %v5872 = vpop.f32.mrb[0].mxu0
        %v5873 = vadd.f32 %v5712, %v5872
        %v5874 = vpop.f32.mrb[0].mxu0
        %v5875 = vpop.f32.mrb[0].mxu0
        %v5876 = vadd.f32 %v5715, %v5875
        %v5877 = vpop.f32.mrb[0].mxu0
        %5878 = vmatprep.mubr.bf16.mxu0 0
        %5879 = vmatmul.mubr.bf16.gmra.mrb[0].mxu0 %v5403
        %v5880 = vpop.f32.mrb[0].mxu0
        %v5881 = vadd.f32 %v5720, %v5880
        %v5882 = vpop.f32.mrb[0].mxu0
        %v5883 = vpop.f32.mrb[0].mxu0
        %v5884 = vadd.f32 %v5723, %v5883
        %v5885 = vpop.f32.mrb[0].mxu0
        %5886 = vmatprep.mubr.bf16.mxu0 0
        %5887 = vmatmul.mubr.bf16.gmra.mrb[0].mxu0 %v5404
        %v5888 = vpop.f32.mrb[0].mxu0
        %v5889 = vadd.f32 %v5728, %v5888
        %v5890 = vpop.f32.mrb[0].mxu0
        %v5891 = vpop.f32.mrb[0].mxu0
        %v5892 = vadd.f32 %v5731, %v5891
        %v5893 = vpop.f32.mrb[0].mxu0
        %5894 = vmatprep.mubr.bf16.mxu0 0
        %5895 = vmatmul.mubr.bf16.gmra.mrb[0].mxu0 %v5405
        %v5896 = vpop.f32.mrb[0].mxu0
        %v5897 = vadd.f32 %v5736, %v5896
        %v5898 = vpop.f32.mrb[0].mxu0
        %v5899 = vpop.f32.mrb[0].mxu0
        %v5900 = vadd.f32 %v5739, %v5899
        %v5901 = vpop.f32.mrb[0].mxu0
        %5902 = vmatprep.mubr.bf16.mxu0 0
        %5903 = vmatmul.mubr.bf16.gmra.mrb[0].mxu0 %v5406
        %v5904 = vpop.f32.mrb[0].mxu0
        %v5905 = vadd.f32 %v5744, %v5904
        %v5906 = vpop.f32.mrb[0].mxu0
        %v5907 = vpop.f32.mrb[0].mxu0
        %v5908 = vadd.f32 %v5747, %v5907
        %v5909 = vpop.f32.mrb[0].mxu0
        %5910 = vmatprep.mubr.bf16.mxu0 0
        %5911 = vmatmul.mubr.bf16.gmra.mrb[0].mxu0 %v5407
        %v5912 = vpop.f32.mrb[0].mxu0
        %v5913 = vadd.f32 %v5752, %v5912
        %v5914 = vpop.f32.mrb[0].mxu0
        %v5915 = vpop.f32.mrb[0].mxu0
        %v5916 = vadd.f32 %v5755, %v5915
        %v5917 = vpop.f32.mrb[0].mxu0
        %5918 = vmatprep.mubr.bf16.mxu0 0
        %5919 = vmatmul.mubr.bf16.gmra.mrb[0].mxu0 %v5408
        %v5920 = vpop.f32.mrb[0].mxu0
        %v5921 = vadd.f32 %v5760, %v5920
        %v5922 = vpop.f32.mrb[0].mxu0
        %v5923 = vpop.f32.mrb[0].mxu0
        %v5924 = vadd.f32 %v5763, %v5923
        %v5925 = vpop.f32.mrb[0].mxu0
        %5926 = vmatprep.mubr.bf16.mxu0 0
        %5927 = vmatmul.mubr.bf16.gmra.mrb[0].mxu0 %v5409
        %v5928 = vpop.f32.mrb[0].mxu0
        %v5929 = vadd.f32 %v5768, %v5928
        %v5930 = vpop.f32.mrb[0].mxu0
        %v5931 = vpop.f32.mrb[0].mxu0
        %v5932 = vadd.f32 %v5771, %v5931
        %v5933 = vpop.f32.mrb[0].mxu0
        %5934 = vmatprep.mubr.bf16.mxu0 0
        %5935 = vmatmul.mubr.bf16.gmra.mrb[0].mxu0 %v5410
        %v5936 = vpop.f32.mrb[0].mxu0
        %v5937 = vadd.f32 %v5776, %v5936
        %v5938 = vpop.f32.mrb[0].mxu0
        %v5939 = vpop.f32.mrb[0].mxu0
        %v5940 = vadd.f32 %v5779, %v5939
        %v5941 = vpop.f32.mrb[0].mxu0
        %5942 = vmatprep.mubr.bf16.mxu0 0
        %5943 = vmatmul.mubr.bf16.gmra.mrb[0].mxu0 %v5411
        %v5944 = vpop.f32.mrb[0].mxu0
        %v5945 = vadd.f32 %v5784, %v5944
        %v5946 = vpop.f32.mrb[0].mxu0
        %v5947 = vpop.f32.mrb[0].mxu0
        %v5948 = vadd.f32 %v5787, %v5947
        %v5949 = vpop.f32.mrb[0].mxu0
        %5950 = vmatprep.mubr.bf16.mxu0 0
        %5951 = vmatmul.mubr.bf16.gmra.mrb[0].mxu0 %v5412
        %v5952 = vpop.f32.mrb[0].mxu0
        %v5953 = vadd.f32 %v5792, %v5952
        %v5954 = vpop.f32.mrb[0].mxu0
        %v5955 = vpop.f32.mrb[0].mxu0
        %v5956 = vadd.f32 %v5795, %v5955
        %v5957 = vpop.f32.mrb[0].mxu0
        %5958 = vdwg.mxu0
        %v5959 = vadd.f32 %v5413, %v5833
        %v5960 = vadd.f32 %v5414, %v5836
        %v5961 = vadd.f32 %v5415, %v5841
        %v5962 = vadd.f32 %v5416, %v5844
        %v5963 = vadd.f32 %v5417, %v5849
        %v5964 = vadd.f32 %v5418, %v5852
        %v5965 = vadd.f32 %v5419, %v5857
        %v5966 = vadd.f32 %v5420, %v5860
        %v5967 = vadd.f32 %v5421, %v5865
        %v5968 = vadd.f32 %v5422, %v5868
        %v5969 = vadd.f32 %v5423, %v5873
        %v5970 = vadd.f32 %v5424, %v5876
        %v5971 = vadd.f32 %v5425, %v5881
        %v5972 = vadd.f32 %v5426, %v5884
        %v5973 = vadd.f32 %v5427, %v5889
        %v5974 = vadd.f32 %v5428, %v5892
        %v5975 = vadd.f32 %v5429, %v5897
        %v5976 = vadd.f32 %v5430, %v5900
        %v5977 = vadd.f32 %v5431, %v5905
        %v5978 = vadd.f32 %v5432, %v5908
        %v5979 = vadd.f32 %v5433, %v5913
        %v5980 = vadd.f32 %v5434, %v5916
        %v5981 = vadd.f32 %v5435, %v5921
        %v5982 = vadd.f32 %v5436, %v5924
        %v5983 = vadd.f32 %v5437, %v5929
        %v5984 = vadd.f32 %v5438, %v5932
        %v5985 = vadd.f32 %v5439, %v5937
        %v5986 = vadd.f32 %v5440, %v5940
        %v5987 = vadd.f32 %v5441, %v5945
        %v5988 = vadd.f32 %v5442, %v5948
        %v5989 = vadd.f32 %v5443, %v5953
        %v5990 = vadd.f32 %v5444, %v5956
        %v5991 = vtanh.pop %v5959
        %v5992 = vtanh.pop %v5960
        %v5993 = vtanh.pop %v5961
        %v5994 = vtanh.pop %v5962
        %v5995 = vtanh.pop %v5963
        %v5996 = vtanh.pop %v5964
        %v5997 = vtanh.pop %v5965
        %v5998 = vtanh.pop %v5966
        %v5999 = vtanh.pop %v5967
        %v6000 = vtanh.pop %v5968
        %v6001 = vtanh.pop %v5969
        %v6002 = vtanh.pop %v5970
        %v6003 = vtanh.pop %v5971
        %v6004 = vtanh.pop %v5972
        %v6005 = vtanh.pop %v5973
        %v6006 = vtanh.pop %v5974
        %v6007 = vtanh.pop %v5975
        %v6008 = vtanh.pop %v5976
        %v6009 = vtanh.pop %v5977
        %v6010 = vtanh.pop %v5978
        %v6011 = vtanh.pop %v5979
        %v6012 = vtanh.pop %v5980
        %v6013 = vtanh.pop %v5981
        %v6014 = vtanh.pop %v5982
        %v6015 = vtanh.pop %v5983
        %v6016 = vtanh.pop %v5984
        %v6017 = vtanh.pop %v5985
        %v6018 = vtanh.pop %v5986
        %v6019 = vtanh.pop %v5987
        %v6020 = vtanh.pop %v5988
        %v6021 = vtanh.pop %v5989
        %v6022 = vtanh.pop %v5990
        %6023 = vst [vmem:[%s818] sm:$0xff] %v5991
        %6024 = vst [vmem:[%s818 + $0x8] sm:$0xff] %v5992
        %6025 = vst [vmem:[%s818 + $0x10] sm:$0xff] %v5993
        %6026 = vst [vmem:[%s818 + $0x18] sm:$0xff] %v5994
        %6027 = vst [vmem:[%s818 + $0x20] sm:$0xff] %v5995
        %6028 = vst [vmem:[%s818 + $0x28] sm:$0xff] %v5996
        %6029 = vst [vmem:[%s818 + $0x30] sm:$0xff] %v5997
        %6030 = vst [vmem:[%s818 + $0x38] sm:$0xff] %v5998
        %6031 = vst [vmem:[%s818 + $0x40] sm:$0xff] %v5999
        %6032 = vst [vmem:[%s818 + $0x48] sm:$0xff] %v6000
        %6033 = vst [vmem:[%s818 + $0x50] sm:$0xff] %v6001
        %6034 = vst [vmem:[%s818 + $0x58] sm:$0xff] %v6002
        %6035 = vst [vmem:[%s818 + $0x60] sm:$0xff] %v6003
        %6036 = vst [vmem:[%s818 + $0x68] sm:$0xff] %v6004
        %6037 = vst [vmem:[%s818 + $0x70] sm:$0xff] %v6005
        %6038 = vst [vmem:[%s818 + $0x78] sm:$0xff] %v6006
        %6039 = vst [vmem:[%s818 + $0x80] sm:$0xff] %v6007
        %6040 = vst [vmem:[%s818 + $0x88] sm:$0xff] %v6008
        %6041 = vst [vmem:[%s818 + $0x90] sm:$0xff] %v6009
        %6042 = vst [vmem:[%s818 + $0x98] sm:$0xff] %v6010
        %6043 = vst [vmem:[%s818 + $0xa0] sm:$0xff] %v6011
        %6044 = vst [vmem:[%s818 + $0xa8] sm:$0xff] %v6012
        %6045 = vst [vmem:[%s818 + $0xb0] sm:$0xff] %v6013
        %6046 = vst [vmem:[%s818 + $0xb8] sm:$0xff] %v6014
        %6047 = vst [vmem:[%s818 + $0xc0] sm:$0xff] %v6015
        %6048 = vst [vmem:[%s818 + $0xc8] sm:$0xff] %v6016
        %6049 = vst [vmem:[%s818 + $0xd0] sm:$0xff] %v6017
        %6050 = vst [vmem:[%s818 + $0xd8] sm:$0xff] %v6018
        %6051 = vst [vmem:[%s818 + $0xe0] sm:$0xff] %v6019
        %6052 = vst [vmem:[%s818 + $0xe8] sm:$0xff] %v6020
        %6053 = vst [vmem:[%s818 + $0xf0] sm:$0xff] %v6021
        %6054 = vst [vmem:[%s818 + $0xf8] sm:$0xff] %v6022
        %s6055 = smul.u32 32, %s40
        %p6056 = scmp.lt.s32.totalorder %s6055, 63
        %s6057 = scalar_select %p6056, %s6055, 63
        %s6058 = smul.addr %s6057, 8
        %s6059 = scalar_lea.vmem %s20, %s6058
        // Predicated region
        $region153: #{_lambda_.1} parent=99 // pred_check
          %p6060 = pneg %p483
        $region154: #{_lambda_.1} parent=99 // pred_check_branch
          %6062 = sbr.rel (%p6060) target = $region156
        $region155: #{_lambda_.1} parent=99 // pred_region
          %s6063 = smul.u32 32, %s40
        $region156: #{_lambda_.1} parent=99 // pred_fallthru
          _
      $region100: #{_lambda_.1} parent=5 // pred_fallthru
        _
      %p6064 = scmp.le.s32.totalorder 2, %s35
      // Predicated region
      $region157: #{_lambda_.1} parent=5 // pred_check
        %p6065 = pneg %p6064
      $region158: #{_lambda_.1} parent=5 // pred_check_branch
        %6067 = sbr.rel (%p6065) target = $region160
      $region159: #{_lambda_.1} parent=5 // pred_region
        %s6068 = ssub.s32 %s35, 2
        // Predicated region
        $region161: #{_lambda_.1} parent=159 // pred_check
          %p6069 = pneg %p489
        $region162: #{_lambda_.1} parent=159 // pred_check_branch
          %6071 = sbr.rel (%p6069) target = $region164
        $region163: #{_lambda_.1} parent=159 // pred_region
          %s6072 = smul.u32 32, %s41
          %p6073 = scmp.lt.s32.totalorder %s6072, 63
          %s6074 = scalar_select %p6073, %s6072, 63
          %s6075 = smul.addr %s6074, 8
          %s6076 = scalar_lea.vmem %s20, %s6075
        $region164: #{_lambda_.1} parent=159 // pred_fallthru
          _
      $region160: #{_lambda_.1} parent=5 // pred_fallthru
        _
    $region6: #{_lambda_.1} parent=1 // loop_footer
      %s39 = sadd.s32 1, %s35
    $region7: #{_lambda_.1} parent=1 // loop_footer_branch
      %34 = sbr.rel target = $region3
    $region8: #{_lambda_.1} parent=1 // loop_exit
      _
    %6077 = vsyncpa [#allocation3], 1
    %s6078 = scalar_lea.sflag [#allocation3], 1
    %6079 = vsyncpa %s6078, 1
    %6080 = vsyncpa [#allocation5], 1
    %6081 = vsyncpa [#allocation8], 1
    %6082 = vsyncpa [#allocation11], 1
    %6083 = vsyncpa [#allocation14], 1
    %6084 = vsyncpa [#allocation17], 1
    %6085 = vsyncpa [#allocation20], 1

</llo_original>
